<compile_context>
chip_gen: v5e
topology: v5e:2x2
jax: 0.10.0
libtpu: 0.0.40
codegen_flags: <defaults>
</compile_context>

<pallas_src>
import functools

import jax
import jax.numpy as jnp
from jax import lax
from jax.experimental import pallas as pl
from jax.experimental.pallas import tpu as pltpu


# ---------------------------------------------------------------------------
# Fused BasicBlock kernel (one grid step = one image)
# ---------------------------------------------------------------------------
def _store_padded(pref, a):
    """Store `a` (H, W, C) into VMEM scratch `pref` ((H+2, W+2, C)) with a
    1-pixel zero border.  VMEM-only traffic; the HBM output of the kernel is a
    single full-block store."""
    h, w, _ = a.shape
    pref[...] = jnp.zeros(pref.shape, pref.dtype)
    pref[1:1 + h, 1:1 + w, :] = a.astype(pref.dtype)


def _basic_block_kernel(*refs, stride, Ho, Wo, project):
    if project:
        x_ref, w1_ref, sh1_ref, w2_ref, sh2_ref, xs_ref, o_ref, *scratch = refs
    else:
        x_ref, w1_ref, sh1_ref, w2_ref, sh2_ref, o_ref, *scratch = refs
    if stride == 1:
        pad1_ref, pad2_ref = scratch
    else:
        (pad2_ref,) = scratch

    cin = x_ref.shape[-1]
    cmid = w1_ref.shape[-1]
    cout = o_ref.shape[-1]
    npix = Ho * Wo

    # ---- conv1 (3x3, stride s) as ONE matmul over a K = 9*Cin im2col slab --
    cols = []
    if stride == 1:
        # zero-pad the unpadded input into VMEM scratch, then slice windows
        _store_padded(pad1_ref, x_ref[0])
        for i in range(3):
            for j in range(3):
                cols.append(pad1_ref[i:i + Ho, j:j + Wo, :].reshape(npix, cin))
    else:
        # host-side phase split makes every strided tap a static window
        for i in range(3):
            for j in range(3):
                p = (i % stride) * stride + (j % stride)
                hi, wj = i // stride, j // stride
                cols.append(x_ref[p, hi:hi + Ho, wj:wj + Wo, :].reshape(npix, cin))
    slab1 = jnp.concatenate(cols, axis=-1)                       # (npix, 9*Cin) bf16
    h1 = jnp.dot(slab1, w1_ref[...], preferred_element_type=jnp.float32)
    h1 = jnp.maximum(h1 + sh1_ref[...], 0.0)                     # BN shift + ReLU (f32)

    # conv1 output stays on-chip: pad it into VMEM scratch for conv2's windows
    _store_padded(pad2_ref, h1.astype(jnp.bfloat16).reshape(Ho, Wo, cmid))

    # ---- conv2 (3x3, stride 1) + fused 1x1 projection, ONE matmul ----------
    cols2 = [pad2_ref[i:i + Ho, j:j + Wo, :].reshape(npix, cmid)
             for i in range(3) for j in range(3)]
    if project:
        cols2.append(xs_ref[0])                                  # (npix, Cin) bf16
    slab2 = jnp.concatenate(cols2, axis=-1)                      # (npix, 9*Cmid[+Cin])
    acc = jnp.dot(slab2, w2_ref[...], preferred_element_type=jnp.float32)
    acc = acc + sh2_ref[...]                                     # bn2 (+ shortcut bn) shift
    if not project:
        acc = acc + x_ref[0].reshape(npix, cin).astype(jnp.float32)  # identity residual
    acc = jnp.maximum(acc, 0.0)

    # single full-block HBM store
    o_ref[0] = acc.reshape(Ho, Wo, cout).astype(o_ref.dtype)


def _nbytes(shape, dtype):
    n = 1
    for d in shape:
        n *= int(d)
    return n * jnp.dtype(dtype).itemsize


def basic_block_pallas(x_in, w1, shift1, w2, shift2, xs, *, stride, Ho, Wo,
                       cin, cmid, cout, project):
    """x_in: stride==1 -> (N, H, W, Cin) bf16 unpadded;
             stride>1  -> (N*stride^2, PH, PW, Cin) bf16 phase-split padded."""
    p2 = stride * stride
    if stride == 1:
        n, H, W, _ = x_in.shape
        x_blk = (1, H, W, cin)
        scratch = [pltpu.VMEM((H + 2, W + 2, cin), jnp.bfloat16),
                   pltpu.VMEM((Ho + 2, Wo + 2, cmid), jnp.bfloat16)]
    else:
        n_tot, PH, PW, _ = x_in.shape
        n = n_tot // p2
        x_blk = (p2, PH, PW, cin)
        scratch = [pltpu.VMEM((Ho + 2, Wo + 2, cmid), jnp.bfloat16)]

    in_specs = [pl.BlockSpec(x_blk, lambda i: (i, 0, 0, 0)),
                pl.BlockSpec(w1.shape, lambda i: (0, 0)),
                pl.BlockSpec(shift1.shape, lambda i: (0, 0)),
                pl.BlockSpec(w2.shape, lambda i: (0, 0)),
                pl.BlockSpec(shift2.shape, lambda i: (0, 0))]
    args = [x_in, w1, shift1, w2, shift2]
    if project:
        in_specs.append(pl.BlockSpec((1, Ho * Wo, cin), lambda i: (i, 0, 0)))
        args.append(xs)

    out_shape = jax.ShapeDtypeStruct((n, Ho, Wo, cout), jnp.float32)
    out_spec = pl.BlockSpec((1, Ho, Wo, cout), lambda i: (i, 0, 0, 0))

    # right-sized VMEM limit: double-buffered blocks + scratch + headroom,
    # capped at 48 MiB so v7x (64 MiB/TC) keeps pipeline headroom.
    in_blk_bytes = (_nbytes(x_blk, jnp.bfloat16) + _nbytes(w1.shape, jnp.bfloat16)
                    + _nbytes(shift1.shape, jnp.float32)
                    + _nbytes(w2.shape, jnp.bfloat16)
                    + _nbytes(shift2.shape, jnp.float32))
    if project:
        in_blk_bytes += _nbytes((1, Ho * Wo, cin), jnp.bfloat16)
    out_blk_bytes = _nbytes((1, Ho, Wo, cout), jnp.float32)
    scratch_bytes = (_nbytes((Ho + 2, Wo + 2, cmid), jnp.bfloat16)
                     + (_nbytes((x_blk[1] + 2, x_blk[2] + 2, cin), jnp.bfloat16)
                        if stride == 1 else 0))
    vmem_limit = min(2 * (in_blk_bytes + out_blk_bytes) + scratch_bytes + (16 << 20),
                     48 << 20)

    kernel = functools.partial(_basic_block_kernel, stride=stride, Ho=Ho, Wo=Wo,
                               project=project)
    return pl.pallas_call(
        kernel,
        out_shape=out_shape,
        grid=(n,),
        in_specs=in_specs,
        out_specs=out_spec,
        scratch_shapes=scratch,
        compiler_params=pltpu.CompilerParams(
            dimension_semantics=("parallel",),
            vmem_limit_bytes=vmem_limit),
    )(*args)


# ---------------------------------------------------------------------------
# Wrapper glue: phase split (stride>1 only), BN folding, params, forward
# ---------------------------------------------------------------------------
def make_phases(x_nhwc, k, s, pad):
    """Zero-pad and split into s*s spatial phases so every strided conv tap is
    a static contiguous window in-kernel. Returns ((N*s*s, PH, PW, C), ho, wo)."""
    n, h, w, c = x_nhwc.shape
    ho = (h + 2 * pad - k) // s + 1
    wo = (w + 2 * pad - k) // s + 1
    ph = ho + (k - 1) // s
    pw = wo + (k - 1) // s
    xp = jnp.pad(x_nhwc, ((0, 0),
                          (pad, s * ph - h - pad),
                          (pad, s * pw - w - pad),
                          (0, 0)))
    phases = [xp[:, pp::s, qq::s, :] for pp in range(s) for qq in range(s)]
    xph = jnp.stack(phases, axis=1).reshape(n * s * s, ph, pw, c)
    return xph, ho, wo


def fold_bn(gamma, beta, running_mean, running_var, eps=1e-5):
    scale = gamma / jnp.sqrt(running_var + eps)
    shift = beta - running_mean * scale
    return scale, shift


def conv_weight_2d(w_oihw, scale):
    """(Cout,Cin,KH,KW) -> (KH*KW*Cin, Cout) bf16 with BN scale folded in.
    Row order matches the kernel's im2col column order (tap-major, ch-minor)."""
    cout, cin, kh, kw = w_oihw.shape
    w = jnp.transpose(w_oihw, (2, 3, 1, 0)).reshape(kh * kw * cin, cout)
    return (w * scale[None, :]).astype(jnp.bfloat16)


def init_basic_block_params(key, in_channels, out_channels, stride):
    expansion = 1
    co = out_channels * expansion
    ks = jax.random.split(key, 8)
    p = {
        "w1": 0.1 * jax.random.normal(ks[0], (out_channels, in_channels, 3, 3), jnp.float32),
        "bn1_g": 1.0 + 0.1 * jax.random.normal(ks[1], (out_channels,), jnp.float32),
        "bn1_b": 0.1 * jax.random.normal(ks[2], (out_channels,), jnp.float32),
        "bn1_m": jnp.zeros((out_channels,), jnp.float32),
        "bn1_v": jnp.ones((out_channels,), jnp.float32),
        "w2": 0.1 * jax.random.normal(ks[3], (co, out_channels, 3, 3), jnp.float32),
        "bn2_g": 1.0 + 0.1 * jax.random.normal(ks[4], (co,), jnp.float32),
        "bn2_b": 0.1 * jax.random.normal(ks[5], (co,), jnp.float32),
        "bn2_m": jnp.zeros((co,), jnp.float32),
        "bn2_v": jnp.ones((co,), jnp.float32),
    }
    if stride != 1 or in_channels != co:
        p["ws"] = 0.1 * jax.random.normal(ks[6], (co, in_channels, 1, 1), jnp.float32)
        p["bns_g"] = 1.0 + 0.1 * jax.random.normal(ks[7], (co,), jnp.float32)
        p["bns_b"] = jnp.zeros((co,), jnp.float32)
        p["bns_m"] = jnp.zeros((co,), jnp.float32)
        p["bns_v"] = jnp.ones((co,), jnp.float32)
    return p


def basic_block_forward(x_nchw, params, stride):
    """Pallas implementation of BasicBlock.forward. Input/output are NCHW."""
    x = jnp.transpose(x_nchw, (0, 2, 3, 1)).astype(jnp.float32)   # NHWC
    n, h, w, cin = x.shape
    cmid = params["w1"].shape[0]
    cout = params["w2"].shape[0]
    project = "ws" in params

    s1, b1 = fold_bn(params["bn1_g"], params["bn1_b"], params["bn1_m"], params["bn1_v"])
    s2, b2 = fold_bn(params["bn2_g"], params["bn2_b"], params["bn2_m"], params["bn2_v"])
    w1_2d = conv_weight_2d(params["w1"], s1)                      # (9*Cin, Cmid) bf16
    w2_2d = conv_weight_2d(params["w2"], s2)                      # (9*Cmid, Cout) bf16
    shift1 = b1.reshape(1, cmid).astype(jnp.float32)
    shift2 = b2.reshape(1, cout).astype(jnp.float32)

    x_bf = x.astype(jnp.bfloat16)
    ho = (h + 2 - 3) // stride + 1
    wo = (w + 2 - 3) // stride + 1

    xs = None
    if project:
        # Fold the 1x1-conv+BN shortcut into conv2's matmul: append its weight
        # rows under w2 and merge its BN shift into shift2.
        ss, bs = fold_bn(params["bns_g"], params["bns_b"], params["bns_m"], params["bns_v"])
        ws_2d = (jnp.transpose(params["ws"][:, :, 0, 0]) * ss[None, :]).astype(jnp.bfloat16)
        w2_2d = jnp.concatenate([w2_2d, ws_2d], axis=0)           # (9*Cmid+Cin, Cout)
        shift2 = shift2 + bs.reshape(1, cout).astype(jnp.float32)
        xs = x_bf[:, ::stride, ::stride, :][:, :ho, :wo, :].reshape(n, ho * wo, cin)

    if stride == 1:
        x_in = x_bf                                               # pad done in-kernel
    else:
        x_in, ho2, wo2 = make_phases(x_bf, 3, stride, 1)
        assert (ho2, wo2) == (ho, wo)

    out = basic_block_pallas(x_in, w1_2d, shift1, w2_2d, shift2, xs,
                             stride=stride, Ho=ho, Wo=wo,
                             cin=cin, cmid=cmid, cout=cout, project=project)
    return jnp.transpose(out, (0, 3, 1, 2))                       # back to NCHW


# ---------------------------------------------------------------------------
# Pure-JAX reference (lax.conv) for correctness checking
# ---------------------------------------------------------------------------
def _ref_conv(x_nchw, w_oihw, stride, padding):
    return lax.conv_general_dilated(
        x_nchw, w_oihw, window_strides=(stride, stride),
        padding=((padding, padding), (padding, padding)),
        dimension_numbers=("NCHW", "OIHW", "NCHW"))


def basic_block_reference(x_nchw, params, stride):
    def bn(x, g, b, m, v, eps=1e-5):
        s = g / jnp.sqrt(v + eps)
        return x * s[None, :, None, None] + (b - m * s)[None, :, None, None]

    if "ws" in params:
        res = bn(_ref_conv(x_nchw, params["ws"], stride, 0),
                 params["bns_g"], params["bns_b"], params["bns_m"], params["bns_v"])
    else:
        res = x_nchw
    out = jnp.maximum(bn(_ref_conv(x_nchw, params["w1"], stride, 1),
                         params["bn1_g"], params["bn1_b"], params["bn1_m"], params["bn1_v"]), 0.0)
    out = bn(_ref_conv(out, params["w2"], 1, 1),
             params["bn2_g"], params["bn2_b"], params["bn2_m"], params["bn2_v"])
    return jnp.maximum(out + res, 0.0)


# ---------------------------------------------------------------------------
if __name__ == "__main__":
    key = jax.random.PRNGKey(0)
    kx, kp1, kp2 = jax.random.split(key, 3)

    fwd = jax.jit(basic_block_forward, static_argnames=("stride",))

    # Case 1: identity shortcut (stride=1, in == out channels)
    x1 = jax.random.normal(kx, (2, 4, 16, 16), jnp.float32)
    p1 = init_basic_block_params(kp1, in_channels=4, out_channels=4, stride=1)
    y1 = jax.block_until_ready(fwd(x1, p1, stride=1))
    r1 = basic_block_reference(x1, p1, stride=1)
    assert y1.shape == (2, 4, 16, 16)
    assert jnp.allclose(y1, r1, rtol=5e-2, atol=5e-2)

    # Case 2: projection shortcut (stride=2, channel expansion 4 -> 8)
    p2 = init_basic_block_params(kp2, in_channels=4, out_channels=8, stride=2)
    y2 = jax.block_until_ready(fwd(x1, p2, stride=2))
    r2 = basic_block_reference(x1, p2, stride=2)
    assert y2.shape == (2, 8, 8, 8)
    assert jnp.allclose(y2, r2, rtol=5e-2, atol=5e-2)

    print("KERNEL_OK")
</pallas_src>

<mosaic_0001>
module attributes {stable_mosaic.version = 11 : i64} {
  func.func @_basic_block_kernel(%arg0: i32, %arg1: memref<1x16x16x4xbf16, #tpu.memory_space<vmem>>, %arg2: memref<36x4xbf16, #tpu.memory_space<vmem>>, %arg3: memref<1x4xf32, #tpu.memory_space<vmem>>, %arg4: memref<36x4xbf16, #tpu.memory_space<vmem>>, %arg5: memref<1x4xf32, #tpu.memory_space<vmem>>, %arg6: memref<1x16x16x4xf32, #tpu.memory_space<vmem>>, %arg7: memref<18x18x4xbf16, #tpu.memory_space<vmem>>, %arg8: memref<18x18x4xbf16, #tpu.memory_space<vmem>>) attributes {dimension_semantics = [#tpu.dimension_semantics<parallel>], iteration_bounds = array<i64: 2>, scalar_prefetch = 0 : i64, scratch_operands = 2 : i64, tpu.core_type = #tpu.core_type<tc>, window_params = [{transform_indices = @transform_0, window_bounds = array<i64: 1, 16, 16, 4>}, {pipeline_mode = #tpu.pipeline_mode<synchronous>, transform_indices = @transform_1, window_bounds = array<i64: 36, 4>}, {pipeline_mode = #tpu.pipeline_mode<synchronous>, transform_indices = @transform_2, window_bounds = array<i64: 1, 4>}, {pipeline_mode = #tpu.pipeline_mode<synchronous>, transform_indices = @transform_3, window_bounds = array<i64: 36, 4>}, {pipeline_mode = #tpu.pipeline_mode<synchronous>, transform_indices = @transform_4, window_bounds = array<i64: 1, 4>}, {transform_indices = @transform_5, window_bounds = array<i64: 1, 16, 16, 4>}]} {
    %c0 = arith.constant 0 : index
    %c0_0 = arith.constant 0 : index
    %c0_1 = arith.constant 0 : index
    %c0_2 = arith.constant 0 : index
    %0 = vector.load %arg1[%c0, %c0_0, %c0_1, %c0_2] : memref<1x16x16x4xbf16, #tpu.memory_space<vmem>>, vector<1x16x16x4xbf16>
    %1 = vector.shape_cast %0 : vector<1x16x16x4xbf16> to vector<16x16x4xbf16>
    %cst = arith.constant 0.000000e+00 : bf16
    %2 = vector.broadcast %cst : bf16 to vector<18x18x4xbf16>
    %c0_3 = arith.constant 0 : index
    %c0_4 = arith.constant 0 : index
    %c0_5 = arith.constant 0 : index
    %3 = vector.load %arg7[%c0_3, %c0_4, %c0_5] : memref<18x18x4xbf16, #tpu.memory_space<vmem>>, vector<18x18x4xbf16>
    tpu.vector_store %arg7[%c0_3, %c0_4, %c0_5], %2 {strides = array<i32>} : memref<18x18x4xbf16, #tpu.memory_space<vmem>>, vector<18x18x4xbf16>,
    %c1 = arith.constant 1 : index
    %c1_6 = arith.constant 1 : index
    %c0_7 = arith.constant 0 : index
    %4 = vector.load %arg7[%c1, %c1_6, %c0_7] : memref<18x18x4xbf16, #tpu.memory_space<vmem>>, vector<16x16x4xbf16>
    tpu.vector_store %arg7[%c1, %c1_6, %c0_7], %1 {strides = array<i32>} : memref<18x18x4xbf16, #tpu.memory_space<vmem>>, vector<16x16x4xbf16>,
    %c0_8 = arith.constant 0 : index
    %c0_9 = arith.constant 0 : index
    %c0_10 = arith.constant 0 : index
    %5 = vector.load %arg7[%c0_8, %c0_9, %c0_10] : memref<18x18x4xbf16, #tpu.memory_space<vmem>>, vector<16x16x4xbf16>
    %6 = vector.shape_cast %5 : vector<16x16x4xbf16> to vector<256x4xbf16>
    %c0_11 = arith.constant 0 : index
    %c1_12 = arith.constant 1 : index
    %c0_13 = arith.constant 0 : index
    %7 = vector.load %arg7[%c0_11, %c1_12, %c0_13] : memref<18x18x4xbf16, #tpu.memory_space<vmem>>, vector<16x16x4xbf16>
    %8 = vector.shape_cast %7 : vector<16x16x4xbf16> to vector<256x4xbf16>
    %c0_14 = arith.constant 0 : index
    %c2 = arith.constant 2 : index
    %c0_15 = arith.constant 0 : index
    %9 = vector.load %arg7[%c0_14, %c2, %c0_15] : memref<18x18x4xbf16, #tpu.memory_space<vmem>>, vector<16x16x4xbf16>
    %10 = vector.shape_cast %9 : vector<16x16x4xbf16> to vector<256x4xbf16>
    %c1_16 = arith.constant 1 : index
    %c0_17 = arith.constant 0 : index
    %c0_18 = arith.constant 0 : index
    %11 = vector.load %arg7[%c1_16, %c0_17, %c0_18] : memref<18x18x4xbf16, #tpu.memory_space<vmem>>, vector<16x16x4xbf16>
    %12 = vector.shape_cast %11 : vector<16x16x4xbf16> to vector<256x4xbf16>
    %c1_19 = arith.constant 1 : index
    %c1_20 = arith.constant 1 : index
    %c0_21 = arith.constant 0 : index
    %13 = vector.load %arg7[%c1_19, %c1_20, %c0_21] : memref<18x18x4xbf16, #tpu.memory_space<vmem>>, vector<16x16x4xbf16>
    %14 = vector.shape_cast %13 : vector<16x16x4xbf16> to vector<256x4xbf16>
    %c1_22 = arith.constant 1 : index
    %c2_23 = arith.constant 2 : index
    %c0_24 = arith.constant 0 : index
    %15 = vector.load %arg7[%c1_22, %c2_23, %c0_24] : memref<18x18x4xbf16, #tpu.memory_space<vmem>>, vector<16x16x4xbf16>
    %16 = vector.shape_cast %15 : vector<16x16x4xbf16> to vector<256x4xbf16>
    %c2_25 = arith.constant 2 : index
    %c0_26 = arith.constant 0 : index
    %c0_27 = arith.constant 0 : index
    %17 = vector.load %arg7[%c2_25, %c0_26, %c0_27] : memref<18x18x4xbf16, #tpu.memory_space<vmem>>, vector<16x16x4xbf16>
    %18 = vector.shape_cast %17 : vector<16x16x4xbf16> to vector<256x4xbf16>
    %c2_28 = arith.constant 2 : index
    %c1_29 = arith.constant 1 : index
    %c0_30 = arith.constant 0 : index
    %19 = vector.load %arg7[%c2_28, %c1_29, %c0_30] : memref<18x18x4xbf16, #tpu.memory_space<vmem>>, vector<16x16x4xbf16>
    %20 = vector.shape_cast %19 : vector<16x16x4xbf16> to vector<256x4xbf16>
    %c2_31 = arith.constant 2 : index
    %c2_32 = arith.constant 2 : index
    %c0_33 = arith.constant 0 : index
    %21 = vector.load %arg7[%c2_31, %c2_32, %c0_33] : memref<18x18x4xbf16, #tpu.memory_space<vmem>>, vector<16x16x4xbf16>
    %22 = vector.shape_cast %21 : vector<16x16x4xbf16> to vector<256x4xbf16>
    %23 = tpu.concatenate %6, %8, %10, %12, %14, %16, %18, %20, %22 in 1 : vector<256x4xbf16>, vector<256x4xbf16>, vector<256x4xbf16>, vector<256x4xbf16>, vector<256x4xbf16>, vector<256x4xbf16>, vector<256x4xbf16>, vector<256x4xbf16>, vector<256x4xbf16> -> vector<256x36xbf16>
    %c0_34 = arith.constant 0 : index
    %c0_35 = arith.constant 0 : index
    %24 = vector.load %arg2[%c0_34, %c0_35] : memref<36x4xbf16, #tpu.memory_space<vmem>>, vector<36x4xbf16>
    %cst_36 = arith.constant dense<0.000000e+00> : vector<256x4xf32>
    %25 = tpu.matmul %23, %24, %cst_36 {dimension_numbers = #tpu.dot_dimension_numbers<[1], [0], [0], [1], [0, 0, 1, 1], [], []>} : vector<256x36xbf16>, vector<36x4xbf16>, vector<256x4xf32> -> vector<256x4xf32>
    %c0_37 = arith.constant 0 : index
    %c0_38 = arith.constant 0 : index
    %26 = vector.load %arg3[%c0_37, %c0_38] : memref<1x4xf32, #tpu.memory_space<vmem>>, vector<1x4xf32>
    %27 = vector.broadcast %26 : vector<1x4xf32> to vector<256x4xf32>
    %28 = arith.addf %25, %27 : vector<256x4xf32>
    %cst_39 = arith.constant 0.000000e+00 : f32
    %29 = vector.broadcast %cst_39 : f32 to vector<256x4xf32>
    %30 = arith.maximumf %28, %29 : vector<256x4xf32>
    %31 = arith.truncf %30 : vector<256x4xf32> to vector<256x4xbf16>
    %32 = vector.shape_cast %31 : vector<256x4xbf16> to vector<16x16x4xbf16>
    %cst_40 = arith.constant 0.000000e+00 : bf16
    %33 = vector.broadcast %cst_40 : bf16 to vector<18x18x4xbf16>
    %c0_41 = arith.constant 0 : index
    %c0_42 = arith.constant 0 : index
    %c0_43 = arith.constant 0 : index
    %34 = vector.load %arg8[%c0_41, %c0_42, %c0_43] : memref<18x18x4xbf16, #tpu.memory_space<vmem>>, vector<18x18x4xbf16>
    tpu.vector_store %arg8[%c0_41, %c0_42, %c0_43], %33 {strides = array<i32>} : memref<18x18x4xbf16, #tpu.memory_space<vmem>>, vector<18x18x4xbf16>,
    %c1_44 = arith.constant 1 : index
    %c1_45 = arith.constant 1 : index
    %c0_46 = arith.constant 0 : index
    %35 = vector.load %arg8[%c1_44, %c1_45, %c0_46] : memref<18x18x4xbf16, #tpu.memory_space<vmem>>, vector<16x16x4xbf16>
    tpu.vector_store %arg8[%c1_44, %c1_45, %c0_46], %32 {strides = array<i32>} : memref<18x18x4xbf16, #tpu.memory_space<vmem>>, vector<16x16x4xbf16>,
    %c0_47 = arith.constant 0 : index
    %c0_48 = arith.constant 0 : index
    %c0_49 = arith.constant 0 : index
    %36 = vector.load %arg8[%c0_47, %c0_48, %c0_49] : memref<18x18x4xbf16, #tpu.memory_space<vmem>>, vector<16x16x4xbf16>
    %37 = vector.shape_cast %36 : vector<16x16x4xbf16> to vector<256x4xbf16>
    %c0_50 = arith.constant 0 : index
    %c1_51 = arith.constant 1 : index
    %c0_52 = arith.constant 0 : index
    %38 = vector.load %arg8[%c0_50, %c1_51, %c0_52] : memref<18x18x4xbf16, #tpu.memory_space<vmem>>, vector<16x16x4xbf16>
    %39 = vector.shape_cast %38 : vector<16x16x4xbf16> to vector<256x4xbf16>
    %c0_53 = arith.constant 0 : index
    %c2_54 = arith.constant 2 : index
    %c0_55 = arith.constant 0 : index
    %40 = vector.load %arg8[%c0_53, %c2_54, %c0_55] : memref<18x18x4xbf16, #tpu.memory_space<vmem>>, vector<16x16x4xbf16>
    %41 = vector.shape_cast %40 : vector<16x16x4xbf16> to vector<256x4xbf16>
    %c1_56 = arith.constant 1 : index
    %c0_57 = arith.constant 0 : index
    %c0_58 = arith.constant 0 : index
    %42 = vector.load %arg8[%c1_56, %c0_57, %c0_58] : memref<18x18x4xbf16, #tpu.memory_space<vmem>>, vector<16x16x4xbf16>
    %43 = vector.shape_cast %42 : vector<16x16x4xbf16> to vector<256x4xbf16>
    %c1_59 = arith.constant 1 : index
    %c1_60 = arith.constant 1 : index
    %c0_61 = arith.constant 0 : index
    %44 = vector.load %arg8[%c1_59, %c1_60, %c0_61] : memref<18x18x4xbf16, #tpu.memory_space<vmem>>, vector<16x16x4xbf16>
    %45 = vector.shape_cast %44 : vector<16x16x4xbf16> to vector<256x4xbf16>
    %c1_62 = arith.constant 1 : index
    %c2_63 = arith.constant 2 : index
    %c0_64 = arith.constant 0 : index
    %46 = vector.load %arg8[%c1_62, %c2_63, %c0_64] : memref<18x18x4xbf16, #tpu.memory_space<vmem>>, vector<16x16x4xbf16>
    %47 = vector.shape_cast %46 : vector<16x16x4xbf16> to vector<256x4xbf16>
    %c2_65 = arith.constant 2 : index
    %c0_66 = arith.constant 0 : index
    %c0_67 = arith.constant 0 : index
    %48 = vector.load %arg8[%c2_65, %c0_66, %c0_67] : memref<18x18x4xbf16, #tpu.memory_space<vmem>>, vector<16x16x4xbf16>
    %49 = vector.shape_cast %48 : vector<16x16x4xbf16> to vector<256x4xbf16>
    %c2_68 = arith.constant 2 : index
    %c1_69 = arith.constant 1 : index
    %c0_70 = arith.constant 0 : index
    %50 = vector.load %arg8[%c2_68, %c1_69, %c0_70] : memref<18x18x4xbf16, #tpu.memory_space<vmem>>, vector<16x16x4xbf16>
    %51 = vector.shape_cast %50 : vector<16x16x4xbf16> to vector<256x4xbf16>
    %c2_71 = arith.constant 2 : index
    %c2_72 = arith.constant 2 : index
    %c0_73 = arith.constant 0 : index
    %52 = vector.load %arg8[%c2_71, %c2_72, %c0_73] : memref<18x18x4xbf16, #tpu.memory_space<vmem>>, vector<16x16x4xbf16>
    %53 = vector.shape_cast %52 : vector<16x16x4xbf16> to vector<256x4xbf16>
    %54 = tpu.concatenate %37, %39, %41, %43, %45, %47, %49, %51, %53 in 1 : vector<256x4xbf16>, vector<256x4xbf16>, vector<256x4xbf16>, vector<256x4xbf16>, vector<256x4xbf16>, vector<256x4xbf16>, vector<256x4xbf16>, vector<256x4xbf16>, vector<256x4xbf16> -> vector<256x36xbf16>
    %c0_74 = arith.constant 0 : index
    %c0_75 = arith.constant 0 : index
    %55 = vector.load %arg4[%c0_74, %c0_75] : memref<36x4xbf16, #tpu.memory_space<vmem>>, vector<36x4xbf16>
    %cst_76 = arith.constant dense<0.000000e+00> : vector<256x4xf32>
    %56 = tpu.matmul %54, %55, %cst_76 {dimension_numbers = #tpu.dot_dimension_numbers<[1], [0], [0], [1], [0, 0, 1, 1], [], []>} : vector<256x36xbf16>, vector<36x4xbf16>, vector<256x4xf32> -> vector<256x4xf32>
    %c0_77 = arith.constant 0 : index
    %c0_78 = arith.constant 0 : index
    %57 = vector.load %arg5[%c0_77, %c0_78] : memref<1x4xf32, #tpu.memory_space<vmem>>, vector<1x4xf32>
    %58 = vector.broadcast %57 : vector<1x4xf32> to vector<256x4xf32>
    %59 = arith.addf %56, %58 : vector<256x4xf32>
    %c0_79 = arith.constant 0 : index
    %c0_80 = arith.constant 0 : index
    %c0_81 = arith.constant 0 : index
    %c0_82 = arith.constant 0 : index
    %60 = vector.load %arg1[%c0_79, %c0_80, %c0_81, %c0_82] : memref<1x16x16x4xbf16, #tpu.memory_space<vmem>>, vector<1x16x16x4xbf16>
    %61 = vector.shape_cast %60 : vector<1x16x16x4xbf16> to vector<16x16x4xbf16>
    %62 = vector.shape_cast %61 : vector<16x16x4xbf16> to vector<256x4xbf16>
    %63 = arith.extf %62 : vector<256x4xbf16> to vector<256x4xf32>
    %64 = arith.addf %59, %63 : vector<256x4xf32>
    %cst_83 = arith.constant 0.000000e+00 : f32
    %65 = vector.broadcast %cst_83 : f32 to vector<256x4xf32>
    %66 = arith.maximumf %64, %65 : vector<256x4xf32>
    %67 = vector.shape_cast %66 : vector<256x4xf32> to vector<16x16x4xf32>
    %c0_84 = arith.constant 0 : index
    %c0_85 = arith.constant 0 : index
    %c0_86 = arith.constant 0 : index
    %c0_87 = arith.constant 0 : index
    %68 = vector.load %arg6[%c0_84, %c0_85, %c0_86, %c0_87] : memref<1x16x16x4xf32, #tpu.memory_space<vmem>>, vector<1x16x16x4xf32>
    %69 = vector.shape_cast %68 : vector<1x16x16x4xf32> to vector<16x16x4xf32>
    %70 = vector.shape_cast %67 : vector<16x16x4xf32> to vector<1x16x16x4xf32>
    tpu.vector_store %arg6[%c0_84, %c0_85, %c0_86, %c0_87], %70 {strides = array<i32>} : memref<1x16x16x4xf32, #tpu.memory_space<vmem>>, vector<1x16x16x4xf32>,
    return
  }
  func.func @transform_0(%arg0: i32) -> (i32, i32, i32, i32) {
    %c0_i32 = arith.constant 0 : i32
    %c0_i32_0 = arith.constant 0 : i32
    %c0_i32_1 = arith.constant 0 : i32
    %c0_i32_2 = arith.constant 0 : i32
    return %arg0, %c0_i32, %c0_i32_0, %c0_i32_1 : i32, i32, i32, i32
  }
  func.func @transform_1(%arg0: i32) -> (i32, i32) {
    %c0_i32 = arith.constant 0 : i32
    %c0_i32_0 = arith.constant 0 : i32
    %c0_i32_1 = arith.constant 0 : i32
    return %c0_i32, %c0_i32_0 : i32, i32
  }
  func.func @transform_2(%arg0: i32) -> (i32, i32) {
    %c0_i32 = arith.constant 0 : i32
    %c0_i32_0 = arith.constant 0 : i32
    %c0_i32_1 = arith.constant 0 : i32
    return %c0_i32, %c0_i32_0 : i32, i32
  }
  func.func @transform_3(%arg0: i32) -> (i32, i32) {
    %c0_i32 = arith.constant 0 : i32
    %c0_i32_0 = arith.constant 0 : i32
    %c0_i32_1 = arith.constant 0 : i32
    return %c0_i32, %c0_i32_0 : i32, i32
  }
  func.func @transform_4(%arg0: i32) -> (i32, i32) {
    %c0_i32 = arith.constant 0 : i32
    %c0_i32_0 = arith.constant 0 : i32
    %c0_i32_1 = arith.constant 0 : i32
    return %c0_i32, %c0_i32_0 : i32, i32
  }
  func.func @transform_5(%arg0: i32) -> (i32, i32, i32, i32) {
    %c0_i32 = arith.constant 0 : i32
    %c0_i32_0 = arith.constant 0 : i32
    %c0_i32_1 = arith.constant 0 : i32
    %c0_i32_2 = arith.constant 0 : i32
    return %arg0, %c0_i32, %c0_i32_0, %c0_i32_1 : i32, i32, i32, i32
  }
}

</mosaic_0001>

<llo_original>
// kernel: basic_block_forward.1
$region0: #{basic_block_forward.1}
  #allocation0 [shape = 'u32[]', space=smem, size = 0x4, offset = 0x4, fixed_abs, tag = 'smem constant byte address 0x4 - core index']
  #allocation1 [shape = 'u32[72,128]{1,0:T(1,128)}', space=vmem, size = 0x9000, scoped, tag = 'internal scratch']
  #allocation2 [shape = 'bf16[18,18,4]{2,1,0:T(8,128)(2,1)}', space=vmem, size = 0x1b000, scoped, tag = 'scratch operand']
  #allocation3 [shape = 'bf16[18,18,4]{2,1,0:T(8,128)(2,1)}', space=vmem, size = 0x1b000, scoped, tag = 'scratch operand']
  %s0 = inlined_call_operand.vmem [shape: bf16[2,16,16,4], index: 0, kind: input, shape index: {}]
  %s1 = inlined_call_operand.vmem [shape: bf16[36,4], index: 1, kind: input, shape index: {}]
  %s2 = inlined_call_operand.vmem [shape: f32[1,4], index: 2, kind: input, shape index: {}]
  %s3 = inlined_call_operand.vmem [shape: bf16[36,4], index: 3, kind: input, shape index: {}]
  %s4 = inlined_call_operand.vmem [shape: f32[1,4], index: 4, kind: input, shape index: {}]
  %s5 = inlined_call_operand.vmem [shape: f32[2,16,16,4], index: 5, kind: output, shape index: {}]
  %s6 = sld [smem:[#allocation0]]
  $region53: #{basic_block_forward.1} parent=0
    _
  %s8 = ssub.s32 1, %s6
  %s9 = scalar_select 0, %s8, %s6
  loop: start=0, step=1, limit=4
  $region2: #{basic_block_forward.1} parent=0 // loop_pre_header
    _
  $region3: #{basic_block_forward.1} parent=0 // loop_header
    %s11 = sphi 0, %s15
    %p12 = scmp.ge.s32.totalorder %s11, 4
    %s21 = sphi 0, %s23
    %s24 = sphi 0, %s21
    %s25 = sphi 0, %s24
    %s41 = sphi 0, %s25
    %s45 = sphi 0, %s45
    %s47 = sphi 0, %s45
    %s48 = sphi 0, %s47
    %s62 = sphi 0, %s48
    %s66 = sphi 0, %s66
    %s68 = sphi 0, %s66
    %s69 = sphi 0, %s68
    %s83 = sphi 0, %s69
    %s87 = sphi 0, %s87
    %s89 = sphi 0, %s87
    %s90 = sphi 0, %s89
    %s104 = sphi 0, %s90
    %s108 = sphi 0, %s108
    %s110 = sphi 0, %s108
    %s111 = sphi 0, %s110
    %s125 = sphi 0, %s111
    %s131 = sphi 0, %s133
    %s134 = sphi 0, %s131
    %s135 = sphi 0, %s134
    %s151 = sphi 0, %s135
  $region4: #{basic_block_forward.1} parent=0 // loop_header_branch
    %14 = sbr.rel (%p12) target = $region8
  $region5: #{basic_block_forward.1} parent=0 // loop_body
    %s16 = ssub.s32 %s11, 1
    %s17 = ssub.s32 %s11, 2
    %s18 = sadd.s32 %s11, 1
    %s19 = ssub.s32 %s11, %s18
    %p20 = scmp.eq.s32.totalorder %s19, 0
    %s22 = sadd.s32 %s21, 1
    %s23 = scalar_select %p20, %s21, %s22
    %p26 = pneg %p20
    %p27 = scmp.eq.s32.totalorder %s11, 1
    %p28 = por %p26, %p27
    %p29 = scmp.ne.s32.totalorder %s21, %s24
    %p30 = scmp.eq.s32.totalorder %s11, 0
    %p31 = por %p29, %p30
    %p32 = scmp.ne.s32.totalorder %s21, %s24
    %p33 = scmp.eq.s32.totalorder %s16, 1
    %p34 = por %p32, %p33
    %p35 = scmp.ne.s32.totalorder %s24, %s25
    %p36 = scmp.eq.s32.totalorder %s16, 0
    %p37 = por %p35, %p36
    %p38 = scmp.ne.s32.totalorder %s24, %s25
    %p39 = scmp.eq.s32.totalorder %s17, 1
    %p40 = por %p38, %p39
    %p42 = scmp.ne.s32.totalorder %s25, %s41
    %p43 = scmp.eq.s32.totalorder %s17, 0
    %p44 = por %p42, %p43
    %s46 = sadd.s32 %s45, 1
    %p49 = scmp.eq.s32.totalorder %s11, 1
    %p50 = scmp.ne.s32.totalorder %s45, %s47
    %p51 = scmp.eq.s32.totalorder %s11, 0
    %p52 = por %p50, %p51
    %p53 = scmp.ne.s32.totalorder %s45, %s47
    %p54 = scmp.eq.s32.totalorder %s16, 1
    %p55 = por %p53, %p54
    %p56 = scmp.ne.s32.totalorder %s47, %s48
    %p57 = scmp.eq.s32.totalorder %s16, 0
    %p58 = por %p56, %p57
    %p59 = scmp.ne.s32.totalorder %s47, %s48
    %p60 = scmp.eq.s32.totalorder %s17, 1
    %p61 = por %p59, %p60
    %p63 = scmp.ne.s32.totalorder %s48, %s62
    %p64 = scmp.eq.s32.totalorder %s17, 0
    %p65 = por %p63, %p64
    %s67 = sadd.s32 %s66, 1
    %p70 = scmp.eq.s32.totalorder %s11, 1
    %p71 = scmp.ne.s32.totalorder %s66, %s68
    %p72 = scmp.eq.s32.totalorder %s11, 0
    %p73 = por %p71, %p72
    %p74 = scmp.ne.s32.totalorder %s66, %s68
    %p75 = scmp.eq.s32.totalorder %s16, 1
    %p76 = por %p74, %p75
    %p77 = scmp.ne.s32.totalorder %s68, %s69
    %p78 = scmp.eq.s32.totalorder %s16, 0
    %p79 = por %p77, %p78
    %p80 = scmp.ne.s32.totalorder %s68, %s69
    %p81 = scmp.eq.s32.totalorder %s17, 1
    %p82 = por %p80, %p81
    %p84 = scmp.ne.s32.totalorder %s69, %s83
    %p85 = scmp.eq.s32.totalorder %s17, 0
    %p86 = por %p84, %p85
    %s88 = sadd.s32 %s87, 1
    %p91 = scmp.eq.s32.totalorder %s11, 1
    %p92 = scmp.ne.s32.totalorder %s87, %s89
    %p93 = scmp.eq.s32.totalorder %s11, 0
    %p94 = por %p92, %p93
    %p95 = scmp.ne.s32.totalorder %s87, %s89
    %p96 = scmp.eq.s32.totalorder %s16, 1
    %p97 = por %p95, %p96
    %p98 = scmp.ne.s32.totalorder %s89, %s90
    %p99 = scmp.eq.s32.totalorder %s16, 0
    %p100 = por %p98, %p99
    %p101 = scmp.ne.s32.totalorder %s89, %s90
    %p102 = scmp.eq.s32.totalorder %s17, 1
    %p103 = por %p101, %p102
    %p105 = scmp.ne.s32.totalorder %s90, %s104
    %p106 = scmp.eq.s32.totalorder %s17, 0
    %p107 = por %p105, %p106
    %s109 = sadd.s32 %s108, 1
    %p112 = scmp.eq.s32.totalorder %s11, 1
    %p113 = scmp.ne.s32.totalorder %s108, %s110
    %p114 = scmp.eq.s32.totalorder %s11, 0
    %p115 = por %p113, %p114
    %p116 = scmp.ne.s32.totalorder %s108, %s110
    %p117 = scmp.eq.s32.totalorder %s16, 1
    %p118 = por %p116, %p117
    %p119 = scmp.ne.s32.totalorder %s110, %s111
    %p120 = scmp.eq.s32.totalorder %s16, 0
    %p121 = por %p119, %p120
    %p122 = scmp.ne.s32.totalorder %s110, %s111
    %p123 = scmp.eq.s32.totalorder %s17, 1
    %p124 = por %p122, %p123
    %p126 = scmp.ne.s32.totalorder %s111, %s125
    %p127 = scmp.eq.s32.totalorder %s17, 0
    %p128 = por %p126, %p127
    %s129 = ssub.s32 %s11, %s18
    %p130 = scmp.eq.s32.totalorder %s129, 0
    %s132 = sadd.s32 %s131, 1
    %s133 = scalar_select %p130, %s131, %s132
    %p136 = pneg %p130
    %p137 = scmp.eq.s32.totalorder %s11, 1
    %p138 = por %p136, %p137
    %p139 = scmp.ne.s32.totalorder %s131, %s134
    %p140 = scmp.eq.s32.totalorder %s11, 0
    %p141 = por %p139, %p140
    %p142 = scmp.ne.s32.totalorder %s131, %s134
    %p143 = scmp.eq.s32.totalorder %s16, 1
    %p144 = por %p142, %p143
    %p145 = scmp.ne.s32.totalorder %s134, %s135
    %p146 = scmp.eq.s32.totalorder %s16, 0
    %p147 = por %p145, %p146
    %p148 = scmp.ne.s32.totalorder %s134, %s135
    %p149 = scmp.eq.s32.totalorder %s17, 1
    %p150 = por %p148, %p149
    %p152 = scmp.ne.s32.totalorder %s135, %s151
    %p153 = scmp.eq.s32.totalorder %s17, 0
    %p154 = por %p152, %p153
    %p155 = scmp.le.s32.totalorder 1, %s11
    %p156 = scmp.lt.s32.totalorder %s11, 3
    %p157 = pnand %p155, %p156
    %p158 = pneg %p157
    // Predicated region
    $region9: #{basic_block_forward.1} parent=5 // pred_check
      _
    $region10: #{basic_block_forward.1} parent=5 // pred_check_branch
      %160 = sbr.rel (%p157) target = $region12
    $region11: #{basic_block_forward.1} parent=5 // pred_region
      %s161 = ssub.s32 %s11, 1
      // Predicated region
      $region13: #{basic_block_forward.1} parent=11 // pred_check
        %p162 = pneg %p58
      $region14: #{basic_block_forward.1} parent=11 // pred_check_branch
        %164 = sbr.rel (%p162) target = $region16
      $region15: #{basic_block_forward.1} parent=11 // pred_region
        _
      $region16: #{basic_block_forward.1} parent=11 // pred_fallthru
        _
      // Predicated region
      $region17: #{basic_block_forward.1} parent=11 // pred_check
        %p165 = pneg %p79
      $region18: #{basic_block_forward.1} parent=11 // pred_check_branch
        %167 = sbr.rel (%p165) target = $region20
      $region19: #{basic_block_forward.1} parent=11 // pred_region
        _
      $region20: #{basic_block_forward.1} parent=11 // pred_fallthru
        _
      // Predicated region
      $region21: #{basic_block_forward.1} parent=11 // pred_check
        %p168 = pneg %p100
      $region22: #{basic_block_forward.1} parent=11 // pred_check_branch
        %170 = sbr.rel (%p168) target = $region24
      $region23: #{basic_block_forward.1} parent=11 // pred_region
        _
      $region24: #{basic_block_forward.1} parent=11 // pred_fallthru
        _
      // Predicated region
      $region25: #{basic_block_forward.1} parent=11 // pred_check
        %p171 = pneg %p121
      $region26: #{basic_block_forward.1} parent=11 // pred_check_branch
        %173 = sbr.rel (%p171) target = $region28
      $region27: #{basic_block_forward.1} parent=11 // pred_region
        _
      $region28: #{basic_block_forward.1} parent=11 // pred_fallthru
        _
    $region12: #{basic_block_forward.1} parent=5 // pred_fallthru
      _
    %p174 = scmp.lt.s32.totalorder %s11, 2
    // Predicated region
    $region29: #{basic_block_forward.1} parent=5 // pred_check
      %p175 = pneg %p174
    $region30: #{basic_block_forward.1} parent=5 // pred_check_branch
      %177 = sbr.rel (%p175) target = $region32
    $region31: #{basic_block_forward.1} parent=5 // pred_region
      // Predicated region
      $region33: #{basic_block_forward.1} parent=31 // pred_check
        %p178 = pneg %p31
      $region34: #{basic_block_forward.1} parent=31 // pred_check_branch
        %180 = sbr.rel (%p178) target = $region36
      $region35: #{basic_block_forward.1} parent=31 // pred_region
        %p181 = scmp.lt.s32.totalorder %s11, 1
        %s182 = scalar_select %p181, %s11, 1
        %s183 = smul.addr %s182, 32
        %s184 = smul.addr %s183, 4
        %s185 = scalar_lea.vmem %s0, %s184
      $region36: #{basic_block_forward.1} parent=31 // pred_fallthru
        _
    $region32: #{basic_block_forward.1} parent=5 // pred_fallthru
      _
    %p186 = scmp.le.s32.totalorder 1, %s11
    %p187 = scmp.lt.s32.totalorder %s11, 3
    %p188 = pnand %p186, %p187
    %p189 = pneg %p188
    // Predicated region
    $region37: #{basic_block_forward.1} parent=5 // pred_check
      _
    $region38: #{basic_block_forward.1} parent=5 // pred_check_branch
      %191 = sbr.rel (%p188) target = $region40
    $region39: #{basic_block_forward.1} parent=5 // pred_region
      %s192 = ssub.s32 %s11, 1
      %p193 = scmp.lt.s32.totalorder %s16, 1
      %s194 = scalar_select %p193, %s16, 1
      %s195 = smul.addr %s194, 32
      %s196 = smul.addr %s195, 4
      %s197 = scalar_lea.vmem %s0, %s196
      %p198 = pneg %p37
      %p199 = pneg %p34
      %p200 = pneg %p58
      %p201 = pneg %p55
      %p202 = pneg %p79
      %p203 = pneg %p76
      %p204 = pneg %p100
      %p205 = pneg %p97
      %p206 = pneg %p121
      %p207 = pneg %p118
      %p208 = pneg %p147
      %p209 = pneg %p144
      %p210 = scmp.lt.s32.totalorder %s16, 1
      %s211 = scalar_select %p210, %s16, 1
      %s212 = smul.addr %s211, 32
      %s213 = smul.addr %s212, 8
      %s214 = scalar_lea.vmem %s5, %s213
      %p215 = scmp.lt.s32.totalorder %s16, 1
      %s216 = scalar_select %p215, %s16, 1
      %s217 = smul.addr %s216, 32
      %s218 = smul.addr %s217, 4
      %s219 = scalar_lea.vmem %s0, %s218
      %p220 = scmp.lt.s32.totalorder %s16, 1
      %s221 = scalar_select %p220, %s16, 1
      %s222 = smul.addr %s221, 32
      %s223 = smul.addr %s222, 8
      %s224 = scalar_lea.vmem %s5, %s223
      %v226 = vld [vmem:[%s219] sm:$0xf]
      %v227 = vld [vmem:[%s219 + $0x4] sm:$0xf]
      %v228 = vld [vmem:[%s219 + $0x8] sm:$0xf]
      %v229 = vld [vmem:[%s219 + $0xc] sm:$0xf]
      %v230 = vld [vmem:[%s219 + $0x10] sm:$0xf]
      %v231 = vld [vmem:[%s219 + $0x14] sm:$0xf]
      %v232 = vld [vmem:[%s219 + $0x18] sm:$0xf]
      %v233 = vld [vmem:[%s219 + $0x1c] sm:$0xf]
      %v234 = vld [vmem:[%s219 + $0x20] sm:$0xf]
      %v235 = vld [vmem:[%s219 + $0x24] sm:$0xf]
      %v236 = vld [vmem:[%s219 + $0x28] sm:$0xf]
      %v237 = vld [vmem:[%s219 + $0x2c] sm:$0xf]
      %v238 = vld [vmem:[%s219 + $0x30] sm:$0xf]
      %v239 = vld [vmem:[%s219 + $0x34] sm:$0xf]
      %v240 = vld [vmem:[%s219 + $0x38] sm:$0xf]
      %v241 = vld [vmem:[%s219 + $0x3c] sm:$0xf]
      %v242 = vld [vmem:[%s219 + $0x40] sm:$0xf]
      %v243 = vld [vmem:[%s219 + $0x44] sm:$0xf]
      %v244 = vld [vmem:[%s219 + $0x48] sm:$0xf]
      %v245 = vld [vmem:[%s219 + $0x4c] sm:$0xf]
      %v246 = vld [vmem:[%s219 + $0x50] sm:$0xf]
      %v247 = vld [vmem:[%s219 + $0x54] sm:$0xf]
      %v248 = vld [vmem:[%s219 + $0x58] sm:$0xf]
      %v249 = vld [vmem:[%s219 + $0x5c] sm:$0xf]
      %v250 = vld [vmem:[%s219 + $0x60] sm:$0xf]
      %v251 = vld [vmem:[%s219 + $0x64] sm:$0xf]
      %v252 = vld [vmem:[%s219 + $0x68] sm:$0xf]
      %v253 = vld [vmem:[%s219 + $0x6c] sm:$0xf]
      %v254 = vld [vmem:[%s219 + $0x70] sm:$0xf]
      %v255 = vld [vmem:[%s219 + $0x74] sm:$0xf]
      %v256 = vld [vmem:[%s219 + $0x78] sm:$0xf]
      %v257 = vld [vmem:[%s219 + $0x7c] sm:$0xf]
      %vm258 = vcmask 27648
      %259 = vst.msk [vmem:[#allocation2] sm:$0xf] %vm258, 0
      %260 = vst.msk [vmem:[#allocation2 + $0x4] sm:$0xf] %vm258, 0
      %vm261 = vcmask 24576
      %262 = vst.msk [vmem:[#allocation2 + $0x8] sm:$0x1] %vm261, 0
      %263 = vst.msk [vmem:[#allocation2 + $0xc] sm:$0xf] %vm258, 0
      %264 = vst.msk [vmem:[#allocation2 + $0x10] sm:$0xf] %vm258, 0
      %265 = vst.msk [vmem:[#allocation2 + $0x14] sm:$0x1] %vm261, 0
      %266 = vst.msk [vmem:[#allocation2 + $0x18] sm:$0xf] %vm258, 0
      %267 = vst.msk [vmem:[#allocation2 + $0x1c] sm:$0xf] %vm258, 0
      %268 = vst.msk [vmem:[#allocation2 + $0x20] sm:$0x1] %vm261, 0
      %269 = vst.msk [vmem:[#allocation2 + $0x24] sm:$0xf] %vm258, 0
      %270 = vst.msk [vmem:[#allocation2 + $0x28] sm:$0xf] %vm258, 0
      %271 = vst.msk [vmem:[#allocation2 + $0x2c] sm:$0x1] %vm261, 0
      %272 = vst.msk [vmem:[#allocation2 + $0x30] sm:$0xf] %vm258, 0
      %273 = vst.msk [vmem:[#allocation2 + $0x34] sm:$0xf] %vm258, 0
      %274 = vst.msk [vmem:[#allocation2 + $0x38] sm:$0x1] %vm261, 0
      %275 = vst.msk [vmem:[#allocation2 + $0x3c] sm:$0xf] %vm258, 0
      %276 = vst.msk [vmem:[#allocation2 + $0x40] sm:$0xf] %vm258, 0
      %277 = vst.msk [vmem:[#allocation2 + $0x44] sm:$0x1] %vm261, 0
      %278 = vst.msk [vmem:[#allocation2 + $0x48] sm:$0xf] %vm258, 0
      %279 = vst.msk [vmem:[#allocation2 + $0x4c] sm:$0xf] %vm258, 0
      %280 = vst.msk [vmem:[#allocation2 + $0x50] sm:$0x1] %vm261, 0
      %281 = vst.msk [vmem:[#allocation2 + $0x54] sm:$0xf] %vm258, 0
      %282 = vst.msk [vmem:[#allocation2 + $0x58] sm:$0xf] %vm258, 0
      %283 = vst.msk [vmem:[#allocation2 + $0x5c] sm:$0x1] %vm261, 0
      %284 = vst.msk [vmem:[#allocation2 + $0x60] sm:$0xf] %vm258, 0
      %285 = vst.msk [vmem:[#allocation2 + $0x64] sm:$0xf] %vm258, 0
      %286 = vst.msk [vmem:[#allocation2 + $0x68] sm:$0x1] %vm261, 0
      %287 = vst.msk [vmem:[#allocation2 + $0x6c] sm:$0xf] %vm258, 0
      %288 = vst.msk [vmem:[#allocation2 + $0x70] sm:$0xf] %vm258, 0
      %289 = vst.msk [vmem:[#allocation2 + $0x74] sm:$0x1] %vm261, 0
      %290 = vst.msk [vmem:[#allocation2 + $0x78] sm:$0xf] %vm258, 0
      %291 = vst.msk [vmem:[#allocation2 + $0x7c] sm:$0xf] %vm258, 0
      %292 = vst.msk [vmem:[#allocation2 + $0x80] sm:$0x1] %vm261, 0
      %293 = vst.msk [vmem:[#allocation2 + $0x84] sm:$0xf] %vm258, 0
      %294 = vst.msk [vmem:[#allocation2 + $0x88] sm:$0xf] %vm258, 0
      %295 = vst.msk [vmem:[#allocation2 + $0x8c] sm:$0x1] %vm261, 0
      %296 = vst.msk [vmem:[#allocation2 + $0x90] sm:$0xf] %vm258, 0
      %297 = vst.msk [vmem:[#allocation2 + $0x94] sm:$0xf] %vm258, 0
      %298 = vst.msk [vmem:[#allocation2 + $0x98] sm:$0x1] %vm261, 0
      %299 = vst.msk [vmem:[#allocation2 + $0x9c] sm:$0xf] %vm258, 0
      %300 = vst.msk [vmem:[#allocation2 + $0xa0] sm:$0xf] %vm258, 0
      %301 = vst.msk [vmem:[#allocation2 + $0xa4] sm:$0x1] %vm261, 0
      %302 = vst.msk [vmem:[#allocation2 + $0xa8] sm:$0xf] %vm258, 0
      %303 = vst.msk [vmem:[#allocation2 + $0xac] sm:$0xf] %vm258, 0
      %304 = vst.msk [vmem:[#allocation2 + $0xb0] sm:$0x1] %vm261, 0
      %305 = vst.msk [vmem:[#allocation2 + $0xb4] sm:$0xf] %vm258, 0
      %306 = vst.msk [vmem:[#allocation2 + $0xb8] sm:$0xf] %vm258, 0
      %307 = vst.msk [vmem:[#allocation2 + $0xbc] sm:$0x1] %vm261, 0
      %308 = vst.msk [vmem:[#allocation2 + $0xc0] sm:$0xf] %vm258, 0
      %309 = vst.msk [vmem:[#allocation2 + $0xc4] sm:$0xf] %vm258, 0
      %310 = vst.msk [vmem:[#allocation2 + $0xc8] sm:$0x1] %vm261, 0
      %311 = vst.msk [vmem:[#allocation2 + $0xcc] sm:$0xf] %vm258, 0
      %312 = vst.msk [vmem:[#allocation2 + $0xd0] sm:$0xf] %vm258, 0
      %313 = vst.msk [vmem:[#allocation2 + $0xd4] sm:$0x1] %vm261, 0
      %vm314 = vsmask.f32 256
      %vm315 = vsmask.f32 4368
      %vm316 = vmor %vm314, %vm315
      %v318 = vshrl.u32 %v226, 16
      %v320 = vrot.slane %v318, 7
      %v321 = vshll.u32 %v226, 16
      %v323 = vor.u32 %v320, %v321
      %v324 = vrot.slane %v320, 4
      %v326 = vshrl.u32 %v227, 16
      %v328 = vrot.slane %v326, 7
      %v329 = vshll.u32 %v227, 16
      %v331 = vor.u32 %v328, %v329
      %v332 = vsel %vm316, %v324, %v331
      %v333 = vrot.slane %v328, 4
      %v335 = vshrl.u32 %v228, 16
      %v337 = vrot.slane %v335, 7
      %v338 = vshll.u32 %v228, 16
      %v340 = vor.u32 %v337, %v338
      %v341 = vrot.slane %v337, 4
      %v343 = vshrl.u32 %v229, 16
      %v345 = vrot.slane %v343, 7
      %v346 = vshll.u32 %v229, 16
      %v348 = vor.u32 %v345, %v346
      %v349 = vsel %vm316, %v341, %v348
      %v350 = vrot.slane %v345, 4
      %v352 = vshrl.u32 %v230, 16
      %v354 = vrot.slane %v352, 7
      %v355 = vshll.u32 %v230, 16
      %v357 = vor.u32 %v354, %v355
      %v358 = vrot.slane %v354, 4
      %v360 = vshrl.u32 %v231, 16
      %v362 = vrot.slane %v360, 7
      %v363 = vshll.u32 %v231, 16
      %v365 = vor.u32 %v362, %v363
      %v366 = vsel %vm316, %v358, %v365
      %v367 = vrot.slane %v362, 4
      %v369 = vshrl.u32 %v232, 16
      %v371 = vrot.slane %v369, 7
      %v372 = vshll.u32 %v232, 16
      %v374 = vor.u32 %v371, %v372
      %v375 = vrot.slane %v371, 4
      %v377 = vshrl.u32 %v233, 16
      %v379 = vrot.slane %v377, 7
      %v380 = vshll.u32 %v233, 16
      %v382 = vor.u32 %v379, %v380
      %v383 = vsel %vm316, %v375, %v382
      %v384 = vrot.slane %v379, 4
      %v386 = vshrl.u32 %v234, 16
      %v388 = vrot.slane %v386, 7
      %v389 = vshll.u32 %v234, 16
      %v391 = vor.u32 %v388, %v389
      %v392 = vrot.slane %v388, 4
      %v394 = vshrl.u32 %v235, 16
      %v396 = vrot.slane %v394, 7
      %v397 = vshll.u32 %v235, 16
      %v399 = vor.u32 %v396, %v397
      %v400 = vsel %vm316, %v392, %v399
      %v401 = vrot.slane %v396, 4
      %v403 = vshrl.u32 %v236, 16
      %v405 = vrot.slane %v403, 7
      %v406 = vshll.u32 %v236, 16
      %v408 = vor.u32 %v405, %v406
      %v409 = vrot.slane %v405, 4
      %v411 = vshrl.u32 %v237, 16
      %v413 = vrot.slane %v411, 7
      %v414 = vshll.u32 %v237, 16
      %v416 = vor.u32 %v413, %v414
      %v417 = vsel %vm316, %v409, %v416
      %v418 = vrot.slane %v413, 4
      %v420 = vshrl.u32 %v238, 16
      %v422 = vrot.slane %v420, 7
      %v423 = vshll.u32 %v238, 16
      %v425 = vor.u32 %v422, %v423
      %v426 = vrot.slane %v422, 4
      %v428 = vshrl.u32 %v239, 16
      %v430 = vrot.slane %v428, 7
      %v431 = vshll.u32 %v239, 16
      %v433 = vor.u32 %v430, %v431
      %v434 = vsel %vm316, %v426, %v433
      %v435 = vrot.slane %v430, 4
      %v437 = vshrl.u32 %v240, 16
      %v439 = vrot.slane %v437, 7
      %v440 = vshll.u32 %v240, 16
      %v442 = vor.u32 %v439, %v440
      %v443 = vrot.slane %v439, 4
      %v445 = vshrl.u32 %v241, 16
      %v447 = vrot.slane %v445, 7
      %v448 = vshll.u32 %v241, 16
      %v450 = vor.u32 %v447, %v448
      %v451 = vsel %vm316, %v443, %v450
      %v452 = vrot.slane %v447, 4
      %v454 = vshrl.u32 %v242, 16
      %v456 = vrot.slane %v454, 7
      %v457 = vshll.u32 %v242, 16
      %v459 = vor.u32 %v456, %v457
      %v460 = vrot.slane %v456, 4
      %v462 = vshrl.u32 %v243, 16
      %v464 = vrot.slane %v462, 7
      %v465 = vshll.u32 %v243, 16
      %v467 = vor.u32 %v464, %v465
      %v468 = vsel %vm316, %v460, %v467
      %v469 = vrot.slane %v464, 4
      %v471 = vshrl.u32 %v244, 16
      %v473 = vrot.slane %v471, 7
      %v474 = vshll.u32 %v244, 16
      %v476 = vor.u32 %v473, %v474
      %v477 = vrot.slane %v473, 4
      %v479 = vshrl.u32 %v245, 16
      %v481 = vrot.slane %v479, 7
      %v482 = vshll.u32 %v245, 16
      %v484 = vor.u32 %v481, %v482
      %v485 = vsel %vm316, %v477, %v484
      %v486 = vrot.slane %v481, 4
      %v488 = vshrl.u32 %v246, 16
      %v490 = vrot.slane %v488, 7
      %v491 = vshll.u32 %v246, 16
      %v493 = vor.u32 %v490, %v491
      %v494 = vrot.slane %v490, 4
      %v496 = vshrl.u32 %v247, 16
      %v498 = vrot.slane %v496, 7
      %v499 = vshll.u32 %v247, 16
      %v501 = vor.u32 %v498, %v499
      %v502 = vsel %vm316, %v494, %v501
      %v503 = vrot.slane %v498, 4
      %v505 = vshrl.u32 %v248, 16
      %v507 = vrot.slane %v505, 7
      %v508 = vshll.u32 %v248, 16
      %v510 = vor.u32 %v507, %v508
      %v511 = vrot.slane %v507, 4
      %v513 = vshrl.u32 %v249, 16
      %v515 = vrot.slane %v513, 7
      %v516 = vshll.u32 %v249, 16
      %v518 = vor.u32 %v515, %v516
      %v519 = vsel %vm316, %v511, %v518
      %v520 = vrot.slane %v515, 4
      %v522 = vshrl.u32 %v250, 16
      %v524 = vrot.slane %v522, 7
      %v525 = vshll.u32 %v250, 16
      %v527 = vor.u32 %v524, %v525
      %v528 = vrot.slane %v524, 4
      %v530 = vshrl.u32 %v251, 16
      %v532 = vrot.slane %v530, 7
      %v533 = vshll.u32 %v251, 16
      %v535 = vor.u32 %v532, %v533
      %v536 = vsel %vm316, %v528, %v535
      %v537 = vrot.slane %v532, 4
      %v539 = vshrl.u32 %v252, 16
      %v541 = vrot.slane %v539, 7
      %v542 = vshll.u32 %v252, 16
      %v544 = vor.u32 %v541, %v542
      %v545 = vrot.slane %v541, 4
      %v547 = vshrl.u32 %v253, 16
      %v549 = vrot.slane %v547, 7
      %v550 = vshll.u32 %v253, 16
      %v552 = vor.u32 %v549, %v550
      %v553 = vsel %vm316, %v545, %v552
      %v554 = vrot.slane %v549, 4
      %v556 = vshrl.u32 %v254, 16
      %v558 = vrot.slane %v556, 7
      %v559 = vshll.u32 %v254, 16
      %v561 = vor.u32 %v558, %v559
      %v562 = vrot.slane %v558, 4
      %v564 = vshrl.u32 %v255, 16
      %v566 = vrot.slane %v564, 7
      %v567 = vshll.u32 %v255, 16
      %v569 = vor.u32 %v566, %v567
      %v570 = vsel %vm316, %v562, %v569
      %v571 = vrot.slane %v566, 4
      %v573 = vshrl.u32 %v256, 16
      %v575 = vrot.slane %v573, 7
      %v576 = vshll.u32 %v256, 16
      %v578 = vor.u32 %v575, %v576
      %v579 = vrot.slane %v575, 4
      %v581 = vshrl.u32 %v257, 16
      %v583 = vrot.slane %v581, 7
      %v584 = vshll.u32 %v257, 16
      %v586 = vor.u32 %v583, %v584
      %v587 = vsel %vm316, %v579, %v586
      %v588 = vrot.slane %v583, 4
      %s637 = scalar_lea.vmem [#allocation2], 12
      %vm638 = vcmask 27648
      %vm639 = vsmask.f32 7938
      %vm640 = vmand %vm638, %vm639
      %v641 = vld [vmem:[%s637] sm:$0xf]
      %v642 = vsel %vm640, %v323, %v641
      %643 = vst [vmem:[%s637] sm:$0xf] %v642
      %644 = vst.msk [vmem:[%s637 + $0x4] sm:$0xf] %vm258, %v332
      %vm645 = vcmask 24576
      %vm646 = vmand %vm645, %vm314
      %v647 = vld [vmem:[%s637 + $0x8] sm:$0x1]
      %v648 = vsel %vm646, %v333, %v647
      %649 = vst [vmem:[%s637 + $0x8] sm:$0x1] %v648
      %v650 = vld [vmem:[%s637 + $0xc] sm:$0xf]
      %v651 = vsel %vm640, %v340, %v650
      %652 = vst [vmem:[%s637 + $0xc] sm:$0xf] %v651
      %653 = vst.msk [vmem:[%s637 + $0x10] sm:$0xf] %vm258, %v349
      %v654 = vld [vmem:[%s637 + $0x14] sm:$0x1]
      %v655 = vsel %vm646, %v350, %v654
      %656 = vst [vmem:[%s637 + $0x14] sm:$0x1] %v655
      %v657 = vld [vmem:[%s637 + $0x18] sm:$0xf]
      %v658 = vsel %vm640, %v357, %v657
      %659 = vst [vmem:[%s637 + $0x18] sm:$0xf] %v658
      %660 = vst.msk [vmem:[%s637 + $0x1c] sm:$0xf] %vm258, %v366
      %v661 = vld [vmem:[%s637 + $0x20] sm:$0x1]
      %v662 = vsel %vm646, %v367, %v661
      %663 = vst [vmem:[%s637 + $0x20] sm:$0x1] %v662
      %v664 = vld [vmem:[%s637 + $0x24] sm:$0xf]
      %v665 = vsel %vm640, %v374, %v664
      %666 = vst [vmem:[%s637 + $0x24] sm:$0xf] %v665
      %667 = vst.msk [vmem:[%s637 + $0x28] sm:$0xf] %vm258, %v383
      %v668 = vld [vmem:[%s637 + $0x2c] sm:$0x1]
      %v669 = vsel %vm646, %v384, %v668
      %670 = vst [vmem:[%s637 + $0x2c] sm:$0x1] %v669
      %v671 = vld [vmem:[%s637 + $0x30] sm:$0xf]
      %v672 = vsel %vm640, %v391, %v671
      %673 = vst [vmem:[%s637 + $0x30] sm:$0xf] %v672
      %674 = vst.msk [vmem:[%s637 + $0x34] sm:$0xf] %vm258, %v400
      %v675 = vld [vmem:[%s637 + $0x38] sm:$0x1]
      %v676 = vsel %vm646, %v401, %v675
      %677 = vst [vmem:[%s637 + $0x38] sm:$0x1] %v676
      %v678 = vld [vmem:[%s637 + $0x3c] sm:$0xf]
      %v679 = vsel %vm640, %v408, %v678
      %680 = vst [vmem:[%s637 + $0x3c] sm:$0xf] %v679
      %681 = vst.msk [vmem:[%s637 + $0x40] sm:$0xf] %vm258, %v417
      %v682 = vld [vmem:[%s637 + $0x44] sm:$0x1]
      %v683 = vsel %vm646, %v418, %v682
      %684 = vst [vmem:[%s637 + $0x44] sm:$0x1] %v683
      %v685 = vld [vmem:[%s637 + $0x48] sm:$0xf]
      %v686 = vsel %vm640, %v425, %v685
      %687 = vst [vmem:[%s637 + $0x48] sm:$0xf] %v686
      %688 = vst.msk [vmem:[%s637 + $0x4c] sm:$0xf] %vm258, %v434
      %v689 = vld [vmem:[%s637 + $0x50] sm:$0x1]
      %v690 = vsel %vm646, %v435, %v689
      %691 = vst [vmem:[%s637 + $0x50] sm:$0x1] %v690
      %v692 = vld [vmem:[%s637 + $0x54] sm:$0xf]
      %v693 = vsel %vm640, %v442, %v692
      %694 = vst [vmem:[%s637 + $0x54] sm:$0xf] %v693
      %695 = vst.msk [vmem:[%s637 + $0x58] sm:$0xf] %vm258, %v451
      %v696 = vld [vmem:[%s637 + $0x5c] sm:$0x1]
      %v697 = vsel %vm646, %v452, %v696
      %698 = vst [vmem:[%s637 + $0x5c] sm:$0x1] %v697
      %v699 = vld [vmem:[%s637 + $0x60] sm:$0xf]
      %v700 = vsel %vm640, %v459, %v699
      %701 = vst [vmem:[%s637 + $0x60] sm:$0xf] %v700
      %702 = vst.msk [vmem:[%s637 + $0x64] sm:$0xf] %vm258, %v468
      %v703 = vld [vmem:[%s637 + $0x68] sm:$0x1]
      %v704 = vsel %vm646, %v469, %v703
      %705 = vst [vmem:[%s637 + $0x68] sm:$0x1] %v704
      %v706 = vld [vmem:[%s637 + $0x6c] sm:$0xf]
      %v707 = vsel %vm640, %v476, %v706
      %708 = vst [vmem:[%s637 + $0x6c] sm:$0xf] %v707
      %709 = vst.msk [vmem:[%s637 + $0x70] sm:$0xf] %vm258, %v485
      %v710 = vld [vmem:[%s637 + $0x74] sm:$0x1]
      %v711 = vsel %vm646, %v486, %v710
      %712 = vst [vmem:[%s637 + $0x74] sm:$0x1] %v711
      %v713 = vld [vmem:[%s637 + $0x78] sm:$0xf]
      %v714 = vsel %vm640, %v493, %v713
      %715 = vst [vmem:[%s637 + $0x78] sm:$0xf] %v714
      %716 = vst.msk [vmem:[%s637 + $0x7c] sm:$0xf] %vm258, %v502
      %v717 = vld [vmem:[%s637 + $0x80] sm:$0x1]
      %v718 = vsel %vm646, %v503, %v717
      %719 = vst [vmem:[%s637 + $0x80] sm:$0x1] %v718
      %v720 = vld [vmem:[%s637 + $0x84] sm:$0xf]
      %v721 = vsel %vm640, %v510, %v720
      %722 = vst [vmem:[%s637 + $0x84] sm:$0xf] %v721
      %723 = vst.msk [vmem:[%s637 + $0x88] sm:$0xf] %vm258, %v519
      %v724 = vld [vmem:[%s637 + $0x8c] sm:$0x1]
      %v725 = vsel %vm646, %v520, %v724
      %726 = vst [vmem:[%s637 + $0x8c] sm:$0x1] %v725
      %v727 = vld [vmem:[%s637 + $0x90] sm:$0xf]
      %v728 = vsel %vm640, %v527, %v727
      %729 = vst [vmem:[%s637 + $0x90] sm:$0xf] %v728
      %730 = vst.msk [vmem:[%s637 + $0x94] sm:$0xf] %vm258, %v536
      %v731 = vld [vmem:[%s637 + $0x98] sm:$0x1]
      %v732 = vsel %vm646, %v537, %v731
      %733 = vst [vmem:[%s637 + $0x98] sm:$0x1] %v732
      %v734 = vld [vmem:[%s637 + $0x9c] sm:$0xf]
      %v735 = vsel %vm640, %v544, %v734
      %736 = vst [vmem:[%s637 + $0x9c] sm:$0xf] %v735
      %737 = vst.msk [vmem:[%s637 + $0xa0] sm:$0xf] %vm258, %v553
      %v738 = vld [vmem:[%s637 + $0xa4] sm:$0x1]
      %v739 = vsel %vm646, %v554, %v738
      %740 = vst [vmem:[%s637 + $0xa4] sm:$0x1] %v739
      %v741 = vld [vmem:[%s637 + $0xa8] sm:$0xf]
      %v742 = vsel %vm640, %v561, %v741
      %743 = vst [vmem:[%s637 + $0xa8] sm:$0xf] %v742
      %744 = vst.msk [vmem:[%s637 + $0xac] sm:$0xf] %vm258, %v570
      %v745 = vld [vmem:[%s637 + $0xb0] sm:$0x1]
      %v746 = vsel %vm646, %v571, %v745
      %747 = vst [vmem:[%s637 + $0xb0] sm:$0x1] %v746
      %v748 = vld [vmem:[%s637 + $0xb4] sm:$0xf]
      %v749 = vsel %vm640, %v578, %v748
      %750 = vst [vmem:[%s637 + $0xb4] sm:$0xf] %v749
      %751 = vst.msk [vmem:[%s637 + $0xb8] sm:$0xf] %vm258, %v587
      %v752 = vld [vmem:[%s637 + $0xbc] sm:$0x1]
      %v753 = vsel %vm646, %v588, %v752
      %754 = vst [vmem:[%s637 + $0xbc] sm:$0x1] %v753
      %v755 = vld [vmem:[#allocation2] sm:$0xf]
      %v756 = vld [vmem:[#allocation2 + $0x4] sm:$0xf]
      %v757 = vld [vmem:[#allocation2 + $0xc] sm:$0xf]
      %v758 = vld [vmem:[#allocation2 + $0x10] sm:$0xf]
      %v759 = vld [vmem:[#allocation2 + $0x18] sm:$0xf]
      %v760 = vld [vmem:[#allocation2 + $0x1c] sm:$0xf]
      %v761 = vld [vmem:[#allocation2 + $0x24] sm:$0xf]
      %v762 = vld [vmem:[#allocation2 + $0x28] sm:$0xf]
      %v763 = vld [vmem:[#allocation2 + $0x30] sm:$0xf]
      %v764 = vld [vmem:[#allocation2 + $0x34] sm:$0xf]
      %v765 = vld [vmem:[#allocation2 + $0x3c] sm:$0xf]
      %v766 = vld [vmem:[#allocation2 + $0x40] sm:$0xf]
      %v767 = vld [vmem:[#allocation2 + $0x48] sm:$0xf]
      %v768 = vld [vmem:[#allocation2 + $0x4c] sm:$0xf]
      %v769 = vld [vmem:[#allocation2 + $0x54] sm:$0xf]
      %v770 = vld [vmem:[#allocation2 + $0x58] sm:$0xf]
      %v771 = vld [vmem:[#allocation2 + $0x60] sm:$0xf]
      %v772 = vld [vmem:[#allocation2 + $0x64] sm:$0xf]
      %v773 = vld [vmem:[#allocation2 + $0x6c] sm:$0xf]
      %v774 = vld [vmem:[#allocation2 + $0x70] sm:$0xf]
      %v775 = vld [vmem:[#allocation2 + $0x78] sm:$0xf]
      %v776 = vld [vmem:[#allocation2 + $0x7c] sm:$0xf]
      %v777 = vld [vmem:[#allocation2 + $0x84] sm:$0xf]
      %v778 = vld [vmem:[#allocation2 + $0x88] sm:$0xf]
      %v779 = vld [vmem:[#allocation2 + $0x90] sm:$0xf]
      %v780 = vld [vmem:[#allocation2 + $0x94] sm:$0xf]
      %v781 = vld [vmem:[#allocation2 + $0x9c] sm:$0xf]
      %v782 = vld [vmem:[#allocation2 + $0xa0] sm:$0xf]
      %v783 = vld [vmem:[#allocation2 + $0xa8] sm:$0xf]
      %v784 = vld [vmem:[#allocation2 + $0xac] sm:$0xf]
      %v785 = vld [vmem:[#allocation2 + $0xb4] sm:$0xf]
      %v786 = vld [vmem:[#allocation2 + $0xb8] sm:$0xf]
      %v787 = vld [vmem:[#allocation2 + $0x8] sm:$0x1]
      %v788 = vld [vmem:[#allocation2 + $0x14] sm:$0x1]
      %v789 = vld [vmem:[#allocation2 + $0x20] sm:$0x1]
      %v790 = vld [vmem:[#allocation2 + $0x2c] sm:$0x1]
      %v791 = vld [vmem:[#allocation2 + $0x38] sm:$0x1]
      %v792 = vld [vmem:[#allocation2 + $0x44] sm:$0x1]
      %v793 = vld [vmem:[#allocation2 + $0x50] sm:$0x1]
      %v794 = vld [vmem:[#allocation2 + $0x5c] sm:$0x1]
      %v795 = vld [vmem:[#allocation2 + $0x68] sm:$0x1]
      %v796 = vld [vmem:[#allocation2 + $0x74] sm:$0x1]
      %v797 = vld [vmem:[#allocation2 + $0x80] sm:$0x1]
      %v798 = vld [vmem:[#allocation2 + $0x8c] sm:$0x1]
      %v799 = vld [vmem:[#allocation2 + $0x98] sm:$0x1]
      %v800 = vld [vmem:[#allocation2 + $0xa4] sm:$0x1]
      %v801 = vld [vmem:[#allocation2 + $0xb0] sm:$0x1]
      %v802 = vld [vmem:[#allocation2 + $0xbc] sm:$0x1]
      %vm803 = vsmask.f32 3328
      %vm804 = vsmask.f32 7440
      %vm805 = vmor %vm803, %vm804
      %v807 = vshrl.u32 %v755, 16
      %v809 = vrot.slane %v807, 4
      %v810 = vshll.u32 %v755, 16
      %v812 = vrot.slane %v810, 5
      %v813 = vor.u32 %v809, %v812
      %v814 = vrot.slane %v813, 4
      %v816 = vshll.u32 %v756, 16
      %v818 = vrot.slane %v816, 5
      %v819 = vsel %vm805, %v814, %v818
      %v820 = vshrl.u32 %v756, 16
      %v822 = vrot.slane %v820, 4
      %v823 = vor.u32 %v822, %v818
      %v824 = vrot.slane %v823, 4
      %v826 = vshll.u32 %v787, 16
      %v828 = vrot.slane %v826, 5
      %v829 = vsel %vm805, %v824, %v828
      %v831 = vshrl.u32 %v757, 16
      %v833 = vrot.slane %v831, 4
      %v834 = vshll.u32 %v757, 16
      %v836 = vrot.slane %v834, 5
      %v837 = vor.u32 %v833, %v836
      %v838 = vrot.slane %v837, 4
      %v840 = vshll.u32 %v758, 16
      %v842 = vrot.slane %v840, 5
      %v843 = vsel %vm805, %v838, %v842
      %v844 = vshrl.u32 %v758, 16
      %v846 = vrot.slane %v844, 4
      %v847 = vor.u32 %v846, %v842
      %v848 = vrot.slane %v847, 4
      %v850 = vshll.u32 %v788, 16
      %v852 = vrot.slane %v850, 5
      %v853 = vsel %vm805, %v848, %v852
      %v855 = vshrl.u32 %v759, 16
      %v857 = vrot.slane %v855, 4
      %v858 = vshll.u32 %v759, 16
      %v860 = vrot.slane %v858, 5
      %v861 = vor.u32 %v857, %v860
      %v862 = vrot.slane %v861, 4
      %v864 = vshll.u32 %v760, 16
      %v866 = vrot.slane %v864, 5
      %v867 = vsel %vm805, %v862, %v866
      %v868 = vshrl.u32 %v760, 16
      %v870 = vrot.slane %v868, 4
      %v871 = vor.u32 %v870, %v866
      %v872 = vrot.slane %v871, 4
      %v874 = vshll.u32 %v789, 16
      %v876 = vrot.slane %v874, 5
      %v877 = vsel %vm805, %v872, %v876
      %v879 = vshrl.u32 %v761, 16
      %v881 = vrot.slane %v879, 4
      %v882 = vshll.u32 %v761, 16
      %v884 = vrot.slane %v882, 5
      %v885 = vor.u32 %v881, %v884
      %v886 = vrot.slane %v885, 4
      %v888 = vshll.u32 %v762, 16
      %v890 = vrot.slane %v888, 5
      %v891 = vsel %vm805, %v886, %v890
      %v892 = vshrl.u32 %v762, 16
      %v894 = vrot.slane %v892, 4
      %v895 = vor.u32 %v894, %v890
      %v896 = vrot.slane %v895, 4
      %v898 = vshll.u32 %v790, 16
      %v900 = vrot.slane %v898, 5
      %v901 = vsel %vm805, %v896, %v900
      %v903 = vshrl.u32 %v763, 16
      %v905 = vrot.slane %v903, 4
      %v906 = vshll.u32 %v763, 16
      %v908 = vrot.slane %v906, 5
      %v909 = vor.u32 %v905, %v908
      %v910 = vrot.slane %v909, 4
      %v912 = vshll.u32 %v764, 16
      %v914 = vrot.slane %v912, 5
      %v915 = vsel %vm805, %v910, %v914
      %v916 = vshrl.u32 %v764, 16
      %v918 = vrot.slane %v916, 4
      %v919 = vor.u32 %v918, %v914
      %v920 = vrot.slane %v919, 4
      %v922 = vshll.u32 %v791, 16
      %v924 = vrot.slane %v922, 5
      %v925 = vsel %vm805, %v920, %v924
      %v927 = vshrl.u32 %v765, 16
      %v929 = vrot.slane %v927, 4
      %v930 = vshll.u32 %v765, 16
      %v932 = vrot.slane %v930, 5
      %v933 = vor.u32 %v929, %v932
      %v934 = vrot.slane %v933, 4
      %v936 = vshll.u32 %v766, 16
      %v938 = vrot.slane %v936, 5
      %v939 = vsel %vm805, %v934, %v938
      %v940 = vshrl.u32 %v766, 16
      %v942 = vrot.slane %v940, 4
      %v943 = vor.u32 %v942, %v938
      %v944 = vrot.slane %v943, 4
      %v946 = vshll.u32 %v792, 16
      %v948 = vrot.slane %v946, 5
      %v949 = vsel %vm805, %v944, %v948
      %v951 = vshrl.u32 %v767, 16
      %v953 = vrot.slane %v951, 4
      %v954 = vshll.u32 %v767, 16
      %v956 = vrot.slane %v954, 5
      %v957 = vor.u32 %v953, %v956
      %v958 = vrot.slane %v957, 4
      %v960 = vshll.u32 %v768, 16
      %v962 = vrot.slane %v960, 5
      %v963 = vsel %vm805, %v958, %v962
      %v964 = vshrl.u32 %v768, 16
      %v966 = vrot.slane %v964, 4
      %v967 = vor.u32 %v966, %v962
      %v968 = vrot.slane %v967, 4
      %v970 = vshll.u32 %v793, 16
      %v972 = vrot.slane %v970, 5
      %v973 = vsel %vm805, %v968, %v972
      %v975 = vshrl.u32 %v769, 16
      %v977 = vrot.slane %v975, 4
      %v978 = vshll.u32 %v769, 16
      %v980 = vrot.slane %v978, 5
      %v981 = vor.u32 %v977, %v980
      %v982 = vrot.slane %v981, 4
      %v984 = vshll.u32 %v770, 16
      %v986 = vrot.slane %v984, 5
      %v987 = vsel %vm805, %v982, %v986
      %v988 = vshrl.u32 %v770, 16
      %v990 = vrot.slane %v988, 4
      %v991 = vor.u32 %v990, %v986
      %v992 = vrot.slane %v991, 4
      %v994 = vshll.u32 %v794, 16
      %v996 = vrot.slane %v994, 5
      %v997 = vsel %vm805, %v992, %v996
      %v999 = vshrl.u32 %v771, 16
      %v1001 = vrot.slane %v999, 4
      %v1002 = vshll.u32 %v771, 16
      %v1004 = vrot.slane %v1002, 5
      %v1005 = vor.u32 %v1001, %v1004
      %v1006 = vrot.slane %v1005, 4
      %v1008 = vshll.u32 %v772, 16
      %v1010 = vrot.slane %v1008, 5
      %v1011 = vsel %vm805, %v1006, %v1010
      %v1012 = vshrl.u32 %v772, 16
      %v1014 = vrot.slane %v1012, 4
      %v1015 = vor.u32 %v1014, %v1010
      %v1016 = vrot.slane %v1015, 4
      %v1018 = vshll.u32 %v795, 16
      %v1020 = vrot.slane %v1018, 5
      %v1021 = vsel %vm805, %v1016, %v1020
      %v1023 = vshrl.u32 %v773, 16
      %v1025 = vrot.slane %v1023, 4
      %v1026 = vshll.u32 %v773, 16
      %v1028 = vrot.slane %v1026, 5
      %v1029 = vor.u32 %v1025, %v1028
      %v1030 = vrot.slane %v1029, 4
      %v1032 = vshll.u32 %v774, 16
      %v1034 = vrot.slane %v1032, 5
      %v1035 = vsel %vm805, %v1030, %v1034
      %v1036 = vshrl.u32 %v774, 16
      %v1038 = vrot.slane %v1036, 4
      %v1039 = vor.u32 %v1038, %v1034
      %v1040 = vrot.slane %v1039, 4
      %v1042 = vshll.u32 %v796, 16
      %v1044 = vrot.slane %v1042, 5
      %v1045 = vsel %vm805, %v1040, %v1044
      %v1047 = vshrl.u32 %v775, 16
      %v1049 = vrot.slane %v1047, 4
      %v1050 = vshll.u32 %v775, 16
      %v1052 = vrot.slane %v1050, 5
      %v1053 = vor.u32 %v1049, %v1052
      %v1054 = vrot.slane %v1053, 4
      %v1056 = vshll.u32 %v776, 16
      %v1058 = vrot.slane %v1056, 5
      %v1059 = vsel %vm805, %v1054, %v1058
      %v1060 = vshrl.u32 %v776, 16
      %v1062 = vrot.slane %v1060, 4
      %v1063 = vor.u32 %v1062, %v1058
      %v1064 = vrot.slane %v1063, 4
      %v1066 = vshll.u32 %v797, 16
      %v1068 = vrot.slane %v1066, 5
      %v1069 = vsel %vm805, %v1064, %v1068
      %v1071 = vshrl.u32 %v777, 16
      %v1073 = vrot.slane %v1071, 4
      %v1074 = vshll.u32 %v777, 16
      %v1076 = vrot.slane %v1074, 5
      %v1077 = vor.u32 %v1073, %v1076
      %v1078 = vrot.slane %v1077, 4
      %v1080 = vshll.u32 %v778, 16
      %v1082 = vrot.slane %v1080, 5
      %v1083 = vsel %vm805, %v1078, %v1082
      %v1084 = vshrl.u32 %v778, 16
      %v1086 = vrot.slane %v1084, 4
      %v1087 = vor.u32 %v1086, %v1082
      %v1088 = vrot.slane %v1087, 4
      %v1090 = vshll.u32 %v798, 16
      %v1092 = vrot.slane %v1090, 5
      %v1093 = vsel %vm805, %v1088, %v1092
      %v1095 = vshrl.u32 %v779, 16
      %v1097 = vrot.slane %v1095, 4
      %v1098 = vshll.u32 %v779, 16
      %v1100 = vrot.slane %v1098, 5
      %v1101 = vor.u32 %v1097, %v1100
      %v1102 = vrot.slane %v1101, 4
      %v1104 = vshll.u32 %v780, 16
      %v1106 = vrot.slane %v1104, 5
      %v1107 = vsel %vm805, %v1102, %v1106
      %v1108 = vshrl.u32 %v780, 16
      %v1110 = vrot.slane %v1108, 4
      %v1111 = vor.u32 %v1110, %v1106
      %v1112 = vrot.slane %v1111, 4
      %v1114 = vshll.u32 %v799, 16
      %v1116 = vrot.slane %v1114, 5
      %v1117 = vsel %vm805, %v1112, %v1116
      %v1119 = vshrl.u32 %v781, 16
      %v1121 = vrot.slane %v1119, 4
      %v1122 = vshll.u32 %v781, 16
      %v1124 = vrot.slane %v1122, 5
      %v1125 = vor.u32 %v1121, %v1124
      %v1126 = vrot.slane %v1125, 4
      %v1128 = vshll.u32 %v782, 16
      %v1130 = vrot.slane %v1128, 5
      %v1131 = vsel %vm805, %v1126, %v1130
      %v1132 = vshrl.u32 %v782, 16
      %v1134 = vrot.slane %v1132, 4
      %v1135 = vor.u32 %v1134, %v1130
      %v1136 = vrot.slane %v1135, 4
      %v1138 = vshll.u32 %v800, 16
      %v1140 = vrot.slane %v1138, 5
      %v1141 = vsel %vm805, %v1136, %v1140
      %v1143 = vshrl.u32 %v783, 16
      %v1145 = vrot.slane %v1143, 4
      %v1146 = vshll.u32 %v783, 16
      %v1148 = vrot.slane %v1146, 5
      %v1149 = vor.u32 %v1145, %v1148
      %v1150 = vrot.slane %v1149, 4
      %v1152 = vshll.u32 %v784, 16
      %v1154 = vrot.slane %v1152, 5
      %v1155 = vsel %vm805, %v1150, %v1154
      %v1156 = vshrl.u32 %v784, 16
      %v1158 = vrot.slane %v1156, 4
      %v1159 = vor.u32 %v1158, %v1154
      %v1160 = vrot.slane %v1159, 4
      %v1162 = vshll.u32 %v801, 16
      %v1164 = vrot.slane %v1162, 5
      %v1165 = vsel %vm805, %v1160, %v1164
      %v1167 = vshrl.u32 %v785, 16
      %v1169 = vrot.slane %v1167, 4
      %v1170 = vshll.u32 %v785, 16
      %v1172 = vrot.slane %v1170, 5
      %v1173 = vor.u32 %v1169, %v1172
      %v1174 = vrot.slane %v1173, 4
      %v1176 = vshll.u32 %v786, 16
      %v1178 = vrot.slane %v1176, 5
      %v1179 = vsel %vm805, %v1174, %v1178
      %v1180 = vshrl.u32 %v786, 16
      %v1182 = vrot.slane %v1180, 4
      %v1183 = vor.u32 %v1182, %v1178
      %v1184 = vrot.slane %v1183, 4
      %v1186 = vshll.u32 %v802, 16
      %v1188 = vrot.slane %v1186, 5
      %v1189 = vsel %vm805, %v1184, %v1188
      %v1190 = vld [vmem:[#allocation2] sm:$0xe]
      %v1191 = vld [vmem:[#allocation2 + $0xc] sm:$0xe]
      %v1192 = vld [vmem:[#allocation2 + $0x18] sm:$0xe]
      %v1193 = vld [vmem:[#allocation2 + $0x24] sm:$0xe]
      %v1194 = vld [vmem:[#allocation2 + $0x30] sm:$0xe]
      %v1195 = vld [vmem:[#allocation2 + $0x3c] sm:$0xe]
      %v1196 = vld [vmem:[#allocation2 + $0x48] sm:$0xe]
      %v1197 = vld [vmem:[#allocation2 + $0x54] sm:$0xe]
      %v1198 = vld [vmem:[#allocation2 + $0x60] sm:$0xe]
      %v1199 = vld [vmem:[#allocation2 + $0x6c] sm:$0xe]
      %v1200 = vld [vmem:[#allocation2 + $0x78] sm:$0xe]
      %v1201 = vld [vmem:[#allocation2 + $0x84] sm:$0xe]
      %v1202 = vld [vmem:[#allocation2 + $0x90] sm:$0xe]
      %v1203 = vld [vmem:[#allocation2 + $0x9c] sm:$0xe]
      %v1204 = vld [vmem:[#allocation2 + $0xa8] sm:$0xe]
      %v1205 = vld [vmem:[#allocation2 + $0xb4] sm:$0xe]
      %vm1254 = vcmask 1042432
      %vm1255 = vcmask 1046532
      %vm1256 = vmor %vm1254, %vm1255
      %v1257 = vrot.slane %v1190, 5
      %v1258 = vrot.slane %v1257, 4
      %v1259 = vrot.slane %v756, 5
      %v1260 = vsel %vm1256, %v1258, %v1259
      %v1261 = vrot.slane %v1259, 4
      %v1262 = vrot.slane %v787, 5
      %v1263 = vsel %vm1256, %v1261, %v1262
      %v1264 = vrot.slane %v1191, 5
      %v1265 = vrot.slane %v1264, 4
      %v1266 = vrot.slane %v758, 5
      %v1267 = vsel %vm1256, %v1265, %v1266
      %v1268 = vrot.slane %v1266, 4
      %v1269 = vrot.slane %v788, 5
      %v1270 = vsel %vm1256, %v1268, %v1269
      %v1271 = vrot.slane %v1192, 5
      %v1272 = vrot.slane %v1271, 4
      %v1273 = vrot.slane %v760, 5
      %v1274 = vsel %vm1256, %v1272, %v1273
      %v1275 = vrot.slane %v1273, 4
      %v1276 = vrot.slane %v789, 5
      %v1277 = vsel %vm1256, %v1275, %v1276
      %v1278 = vrot.slane %v1193, 5
      %v1279 = vrot.slane %v1278, 4
      %v1280 = vrot.slane %v762, 5
      %v1281 = vsel %vm1256, %v1279, %v1280
      %v1282 = vrot.slane %v1280, 4
      %v1283 = vrot.slane %v790, 5
      %v1284 = vsel %vm1256, %v1282, %v1283
      %v1285 = vrot.slane %v1194, 5
      %v1286 = vrot.slane %v1285, 4
      %v1287 = vrot.slane %v764, 5
      %v1288 = vsel %vm1256, %v1286, %v1287
      %v1289 = vrot.slane %v1287, 4
      %v1290 = vrot.slane %v791, 5
      %v1291 = vsel %vm1256, %v1289, %v1290
      %v1292 = vrot.slane %v1195, 5
      %v1293 = vrot.slane %v1292, 4
      %v1294 = vrot.slane %v766, 5
      %v1295 = vsel %vm1256, %v1293, %v1294
      %v1296 = vrot.slane %v1294, 4
      %v1297 = vrot.slane %v792, 5
      %v1298 = vsel %vm1256, %v1296, %v1297
      %v1299 = vrot.slane %v1196, 5
      %v1300 = vrot.slane %v1299, 4
      %v1301 = vrot.slane %v768, 5
      %v1302 = vsel %vm1256, %v1300, %v1301
      %v1303 = vrot.slane %v1301, 4
      %v1304 = vrot.slane %v793, 5
      %v1305 = vsel %vm1256, %v1303, %v1304
      %v1306 = vrot.slane %v1197, 5
      %v1307 = vrot.slane %v1306, 4
      %v1308 = vrot.slane %v770, 5
      %v1309 = vsel %vm1256, %v1307, %v1308
      %v1310 = vrot.slane %v1308, 4
      %v1311 = vrot.slane %v794, 5
      %v1312 = vsel %vm1256, %v1310, %v1311
      %v1313 = vrot.slane %v1198, 5
      %v1314 = vrot.slane %v1313, 4
      %v1315 = vrot.slane %v772, 5
      %v1316 = vsel %vm1256, %v1314, %v1315
      %v1317 = vrot.slane %v1315, 4
      %v1318 = vrot.slane %v795, 5
      %v1319 = vsel %vm1256, %v1317, %v1318
      %v1320 = vrot.slane %v1199, 5
      %v1321 = vrot.slane %v1320, 4
      %v1322 = vrot.slane %v774, 5
      %v1323 = vsel %vm1256, %v1321, %v1322
      %v1324 = vrot.slane %v1322, 4
      %v1325 = vrot.slane %v796, 5
      %v1326 = vsel %vm1256, %v1324, %v1325
      %v1327 = vrot.slane %v1200, 5
      %v1328 = vrot.slane %v1327, 4
      %v1329 = vrot.slane %v776, 5
      %v1330 = vsel %vm1256, %v1328, %v1329
      %v1331 = vrot.slane %v1329, 4
      %v1332 = vrot.slane %v797, 5
      %v1333 = vsel %vm1256, %v1331, %v1332
      %v1334 = vrot.slane %v1201, 5
      %v1335 = vrot.slane %v1334, 4
      %v1336 = vrot.slane %v778, 5
      %v1337 = vsel %vm1256, %v1335, %v1336
      %v1338 = vrot.slane %v1336, 4
      %v1339 = vrot.slane %v798, 5
      %v1340 = vsel %vm1256, %v1338, %v1339
      %v1341 = vrot.slane %v1202, 5
      %v1342 = vrot.slane %v1341, 4
      %v1343 = vrot.slane %v780, 5
      %v1344 = vsel %vm1256, %v1342, %v1343
      %v1345 = vrot.slane %v1343, 4
      %v1346 = vrot.slane %v799, 5
      %v1347 = vsel %vm1256, %v1345, %v1346
      %v1348 = vrot.slane %v1203, 5
      %v1349 = vrot.slane %v1348, 4
      %v1350 = vrot.slane %v782, 5
      %v1351 = vsel %vm1256, %v1349, %v1350
      %v1352 = vrot.slane %v1350, 4
      %v1353 = vrot.slane %v800, 5
      %v1354 = vsel %vm1256, %v1352, %v1353
      %v1355 = vrot.slane %v1204, 5
      %v1356 = vrot.slane %v1355, 4
      %v1357 = vrot.slane %v784, 5
      %v1358 = vsel %vm1256, %v1356, %v1357
      %v1359 = vrot.slane %v1357, 4
      %v1360 = vrot.slane %v801, 5
      %v1361 = vsel %vm1256, %v1359, %v1360
      %v1362 = vrot.slane %v1205, 5
      %v1363 = vrot.slane %v1362, 4
      %v1364 = vrot.slane %v786, 5
      %v1365 = vsel %vm1256, %v1363, %v1364
      %v1366 = vrot.slane %v1364, 4
      %v1367 = vrot.slane %v802, 5
      %v1368 = vsel %vm1256, %v1366, %v1367
      %v1369 = vld [vmem:[%s637] sm:$0xf]
      %v1370 = vld [vmem:[%s637 + $0x4] sm:$0xf]
      %v1371 = vld [vmem:[%s637 + $0xc] sm:$0xf]
      %v1372 = vld [vmem:[%s637 + $0x10] sm:$0xf]
      %v1373 = vld [vmem:[%s637 + $0x18] sm:$0xf]
      %v1374 = vld [vmem:[%s637 + $0x1c] sm:$0xf]
      %v1375 = vld [vmem:[%s637 + $0x24] sm:$0xf]
      %v1376 = vld [vmem:[%s637 + $0x28] sm:$0xf]
      %v1377 = vld [vmem:[%s637 + $0x30] sm:$0xf]
      %v1378 = vld [vmem:[%s637 + $0x34] sm:$0xf]
      %v1379 = vld [vmem:[%s637 + $0x3c] sm:$0xf]
      %v1380 = vld [vmem:[%s637 + $0x40] sm:$0xf]
      %v1381 = vld [vmem:[%s637 + $0x48] sm:$0xf]
      %v1382 = vld [vmem:[%s637 + $0x4c] sm:$0xf]
      %v1383 = vld [vmem:[%s637 + $0x54] sm:$0xf]
      %v1384 = vld [vmem:[%s637 + $0x58] sm:$0xf]
      %v1385 = vld [vmem:[%s637 + $0x60] sm:$0xf]
      %v1386 = vld [vmem:[%s637 + $0x64] sm:$0xf]
      %v1387 = vld [vmem:[%s637 + $0x6c] sm:$0xf]
      %v1388 = vld [vmem:[%s637 + $0x70] sm:$0xf]
      %v1389 = vld [vmem:[%s637 + $0x78] sm:$0xf]
      %v1390 = vld [vmem:[%s637 + $0x7c] sm:$0xf]
      %v1391 = vld [vmem:[%s637 + $0x84] sm:$0xf]
      %v1392 = vld [vmem:[%s637 + $0x88] sm:$0xf]
      %v1393 = vld [vmem:[%s637 + $0x90] sm:$0xf]
      %v1394 = vld [vmem:[%s637 + $0x94] sm:$0xf]
      %v1395 = vld [vmem:[%s637 + $0x9c] sm:$0xf]
      %v1396 = vld [vmem:[%s637 + $0xa0] sm:$0xf]
      %v1397 = vld [vmem:[%s637 + $0xa8] sm:$0xf]
      %v1398 = vld [vmem:[%s637 + $0xac] sm:$0xf]
      %v1399 = vld [vmem:[%s637 + $0xb4] sm:$0xf]
      %v1400 = vld [vmem:[%s637 + $0xb8] sm:$0xf]
      %v1401 = vld [vmem:[%s637 + $0x8] sm:$0x1]
      %v1402 = vld [vmem:[%s637 + $0x14] sm:$0x1]
      %v1403 = vld [vmem:[%s637 + $0x20] sm:$0x1]
      %v1404 = vld [vmem:[%s637 + $0x2c] sm:$0x1]
      %v1405 = vld [vmem:[%s637 + $0x38] sm:$0x1]
      %v1406 = vld [vmem:[%s637 + $0x44] sm:$0x1]
      %v1407 = vld [vmem:[%s637 + $0x50] sm:$0x1]
      %v1408 = vld [vmem:[%s637 + $0x5c] sm:$0x1]
      %v1409 = vld [vmem:[%s637 + $0x68] sm:$0x1]
      %v1410 = vld [vmem:[%s637 + $0x74] sm:$0x1]
      %v1411 = vld [vmem:[%s637 + $0x80] sm:$0x1]
      %v1412 = vld [vmem:[%s637 + $0x8c] sm:$0x1]
      %v1413 = vld [vmem:[%s637 + $0x98] sm:$0x1]
      %v1414 = vld [vmem:[%s637 + $0xa4] sm:$0x1]
      %v1415 = vld [vmem:[%s637 + $0xb0] sm:$0x1]
      %v1416 = vld [vmem:[%s637 + $0xbc] sm:$0x1]
      %v1418 = vshrl.u32 %v1369, 16
      %v1420 = vrot.slane %v1418, 4
      %v1421 = vshll.u32 %v1369, 16
      %v1423 = vrot.slane %v1421, 5
      %v1424 = vor.u32 %v1420, %v1423
      %v1425 = vrot.slane %v1424, 4
      %v1427 = vshll.u32 %v1370, 16
      %v1429 = vrot.slane %v1427, 5
      %v1430 = vsel %vm805, %v1425, %v1429
      %v1431 = vshrl.u32 %v1370, 16
      %v1433 = vrot.slane %v1431, 4
      %v1434 = vor.u32 %v1433, %v1429
      %v1435 = vrot.slane %v1434, 4
      %v1437 = vshll.u32 %v1401, 16
      %v1439 = vrot.slane %v1437, 5
      %v1440 = vsel %vm805, %v1435, %v1439
      %v1442 = vshrl.u32 %v1371, 16
      %v1444 = vrot.slane %v1442, 4
      %v1445 = vshll.u32 %v1371, 16
      %v1447 = vrot.slane %v1445, 5
      %v1448 = vor.u32 %v1444, %v1447
      %v1449 = vrot.slane %v1448, 4
      %v1451 = vshll.u32 %v1372, 16
      %v1453 = vrot.slane %v1451, 5
      %v1454 = vsel %vm805, %v1449, %v1453
      %v1455 = vshrl.u32 %v1372, 16
      %v1457 = vrot.slane %v1455, 4
      %v1458 = vor.u32 %v1457, %v1453
      %v1459 = vrot.slane %v1458, 4
      %v1461 = vshll.u32 %v1402, 16
      %v1463 = vrot.slane %v1461, 5
      %v1464 = vsel %vm805, %v1459, %v1463
      %v1466 = vshrl.u32 %v1373, 16
      %v1468 = vrot.slane %v1466, 4
      %v1469 = vshll.u32 %v1373, 16
      %v1471 = vrot.slane %v1469, 5
      %v1472 = vor.u32 %v1468, %v1471
      %v1473 = vrot.slane %v1472, 4
      %v1475 = vshll.u32 %v1374, 16
      %v1477 = vrot.slane %v1475, 5
      %v1478 = vsel %vm805, %v1473, %v1477
      %v1479 = vshrl.u32 %v1374, 16
      %v1481 = vrot.slane %v1479, 4
      %v1482 = vor.u32 %v1481, %v1477
      %v1483 = vrot.slane %v1482, 4
      %v1485 = vshll.u32 %v1403, 16
      %v1487 = vrot.slane %v1485, 5
      %v1488 = vsel %vm805, %v1483, %v1487
      %v1490 = vshrl.u32 %v1375, 16
      %v1492 = vrot.slane %v1490, 4
      %v1493 = vshll.u32 %v1375, 16
      %v1495 = vrot.slane %v1493, 5
      %v1496 = vor.u32 %v1492, %v1495
      %v1497 = vrot.slane %v1496, 4
      %v1499 = vshll.u32 %v1376, 16
      %v1501 = vrot.slane %v1499, 5
      %v1502 = vsel %vm805, %v1497, %v1501
      %v1503 = vshrl.u32 %v1376, 16
      %v1505 = vrot.slane %v1503, 4
      %v1506 = vor.u32 %v1505, %v1501
      %v1507 = vrot.slane %v1506, 4
      %v1509 = vshll.u32 %v1404, 16
      %v1511 = vrot.slane %v1509, 5
      %v1512 = vsel %vm805, %v1507, %v1511
      %v1514 = vshrl.u32 %v1377, 16
      %v1516 = vrot.slane %v1514, 4
      %v1517 = vshll.u32 %v1377, 16
      %v1519 = vrot.slane %v1517, 5
      %v1520 = vor.u32 %v1516, %v1519
      %v1521 = vrot.slane %v1520, 4
      %v1523 = vshll.u32 %v1378, 16
      %v1525 = vrot.slane %v1523, 5
      %v1526 = vsel %vm805, %v1521, %v1525
      %v1527 = vshrl.u32 %v1378, 16
      %v1529 = vrot.slane %v1527, 4
      %v1530 = vor.u32 %v1529, %v1525
      %v1531 = vrot.slane %v1530, 4
      %v1533 = vshll.u32 %v1405, 16
      %v1535 = vrot.slane %v1533, 5
      %v1536 = vsel %vm805, %v1531, %v1535
      %v1538 = vshrl.u32 %v1379, 16
      %v1540 = vrot.slane %v1538, 4
      %v1541 = vshll.u32 %v1379, 16
      %v1543 = vrot.slane %v1541, 5
      %v1544 = vor.u32 %v1540, %v1543
      %v1545 = vrot.slane %v1544, 4
      %v1547 = vshll.u32 %v1380, 16
      %v1549 = vrot.slane %v1547, 5
      %v1550 = vsel %vm805, %v1545, %v1549
      %v1551 = vshrl.u32 %v1380, 16
      %v1553 = vrot.slane %v1551, 4
      %v1554 = vor.u32 %v1553, %v1549
      %v1555 = vrot.slane %v1554, 4
      %v1557 = vshll.u32 %v1406, 16
      %v1559 = vrot.slane %v1557, 5
      %v1560 = vsel %vm805, %v1555, %v1559
      %v1562 = vshrl.u32 %v1381, 16
      %v1564 = vrot.slane %v1562, 4
      %v1565 = vshll.u32 %v1381, 16
      %v1567 = vrot.slane %v1565, 5
      %v1568 = vor.u32 %v1564, %v1567
      %v1569 = vrot.slane %v1568, 4
      %v1571 = vshll.u32 %v1382, 16
      %v1573 = vrot.slane %v1571, 5
      %v1574 = vsel %vm805, %v1569, %v1573
      %v1575 = vshrl.u32 %v1382, 16
      %v1577 = vrot.slane %v1575, 4
      %v1578 = vor.u32 %v1577, %v1573
      %v1579 = vrot.slane %v1578, 4
      %v1581 = vshll.u32 %v1407, 16
      %v1583 = vrot.slane %v1581, 5
      %v1584 = vsel %vm805, %v1579, %v1583
      %v1586 = vshrl.u32 %v1383, 16
      %v1588 = vrot.slane %v1586, 4
      %v1589 = vshll.u32 %v1383, 16
      %v1591 = vrot.slane %v1589, 5
      %v1592 = vor.u32 %v1588, %v1591
      %v1593 = vrot.slane %v1592, 4
      %v1595 = vshll.u32 %v1384, 16
      %v1597 = vrot.slane %v1595, 5
      %v1598 = vsel %vm805, %v1593, %v1597
      %v1599 = vshrl.u32 %v1384, 16
      %v1601 = vrot.slane %v1599, 4
      %v1602 = vor.u32 %v1601, %v1597
      %v1603 = vrot.slane %v1602, 4
      %v1605 = vshll.u32 %v1408, 16
      %v1607 = vrot.slane %v1605, 5
      %v1608 = vsel %vm805, %v1603, %v1607
      %v1610 = vshrl.u32 %v1385, 16
      %v1612 = vrot.slane %v1610, 4
      %v1613 = vshll.u32 %v1385, 16
      %v1615 = vrot.slane %v1613, 5
      %v1616 = vor.u32 %v1612, %v1615
      %v1617 = vrot.slane %v1616, 4
      %v1619 = vshll.u32 %v1386, 16
      %v1621 = vrot.slane %v1619, 5
      %v1622 = vsel %vm805, %v1617, %v1621
      %v1623 = vshrl.u32 %v1386, 16
      %v1625 = vrot.slane %v1623, 4
      %v1626 = vor.u32 %v1625, %v1621
      %v1627 = vrot.slane %v1626, 4
      %v1629 = vshll.u32 %v1409, 16
      %v1631 = vrot.slane %v1629, 5
      %v1632 = vsel %vm805, %v1627, %v1631
      %v1634 = vshrl.u32 %v1387, 16
      %v1636 = vrot.slane %v1634, 4
      %v1637 = vshll.u32 %v1387, 16
      %v1639 = vrot.slane %v1637, 5
      %v1640 = vor.u32 %v1636, %v1639
      %v1641 = vrot.slane %v1640, 4
      %v1643 = vshll.u32 %v1388, 16
      %v1645 = vrot.slane %v1643, 5
      %v1646 = vsel %vm805, %v1641, %v1645
      %v1647 = vshrl.u32 %v1388, 16
      %v1649 = vrot.slane %v1647, 4
      %v1650 = vor.u32 %v1649, %v1645
      %v1651 = vrot.slane %v1650, 4
      %v1653 = vshll.u32 %v1410, 16
      %v1655 = vrot.slane %v1653, 5
      %v1656 = vsel %vm805, %v1651, %v1655
      %v1658 = vshrl.u32 %v1389, 16
      %v1660 = vrot.slane %v1658, 4
      %v1661 = vshll.u32 %v1389, 16
      %v1663 = vrot.slane %v1661, 5
      %v1664 = vor.u32 %v1660, %v1663
      %v1665 = vrot.slane %v1664, 4
      %v1667 = vshll.u32 %v1390, 16
      %v1669 = vrot.slane %v1667, 5
      %v1670 = vsel %vm805, %v1665, %v1669
      %v1671 = vshrl.u32 %v1390, 16
      %v1673 = vrot.slane %v1671, 4
      %v1674 = vor.u32 %v1673, %v1669
      %v1675 = vrot.slane %v1674, 4
      %v1677 = vshll.u32 %v1411, 16
      %v1679 = vrot.slane %v1677, 5
      %v1680 = vsel %vm805, %v1675, %v1679
      %v1682 = vshrl.u32 %v1391, 16
      %v1684 = vrot.slane %v1682, 4
      %v1685 = vshll.u32 %v1391, 16
      %v1687 = vrot.slane %v1685, 5
      %v1688 = vor.u32 %v1684, %v1687
      %v1689 = vrot.slane %v1688, 4
      %v1691 = vshll.u32 %v1392, 16
      %v1693 = vrot.slane %v1691, 5
      %v1694 = vsel %vm805, %v1689, %v1693
      %v1695 = vshrl.u32 %v1392, 16
      %v1697 = vrot.slane %v1695, 4
      %v1698 = vor.u32 %v1697, %v1693
      %v1699 = vrot.slane %v1698, 4
      %v1701 = vshll.u32 %v1412, 16
      %v1703 = vrot.slane %v1701, 5
      %v1704 = vsel %vm805, %v1699, %v1703
      %v1706 = vshrl.u32 %v1393, 16
      %v1708 = vrot.slane %v1706, 4
      %v1709 = vshll.u32 %v1393, 16
      %v1711 = vrot.slane %v1709, 5
      %v1712 = vor.u32 %v1708, %v1711
      %v1713 = vrot.slane %v1712, 4
      %v1715 = vshll.u32 %v1394, 16
      %v1717 = vrot.slane %v1715, 5
      %v1718 = vsel %vm805, %v1713, %v1717
      %v1719 = vshrl.u32 %v1394, 16
      %v1721 = vrot.slane %v1719, 4
      %v1722 = vor.u32 %v1721, %v1717
      %v1723 = vrot.slane %v1722, 4
      %v1725 = vshll.u32 %v1413, 16
      %v1727 = vrot.slane %v1725, 5
      %v1728 = vsel %vm805, %v1723, %v1727
      %v1730 = vshrl.u32 %v1395, 16
      %v1732 = vrot.slane %v1730, 4
      %v1733 = vshll.u32 %v1395, 16
      %v1735 = vrot.slane %v1733, 5
      %v1736 = vor.u32 %v1732, %v1735
      %v1737 = vrot.slane %v1736, 4
      %v1739 = vshll.u32 %v1396, 16
      %v1741 = vrot.slane %v1739, 5
      %v1742 = vsel %vm805, %v1737, %v1741
      %v1743 = vshrl.u32 %v1396, 16
      %v1745 = vrot.slane %v1743, 4
      %v1746 = vor.u32 %v1745, %v1741
      %v1747 = vrot.slane %v1746, 4
      %v1749 = vshll.u32 %v1414, 16
      %v1751 = vrot.slane %v1749, 5
      %v1752 = vsel %vm805, %v1747, %v1751
      %v1754 = vshrl.u32 %v1397, 16
      %v1756 = vrot.slane %v1754, 4
      %v1757 = vshll.u32 %v1397, 16
      %v1759 = vrot.slane %v1757, 5
      %v1760 = vor.u32 %v1756, %v1759
      %v1761 = vrot.slane %v1760, 4
      %v1763 = vshll.u32 %v1398, 16
      %v1765 = vrot.slane %v1763, 5
      %v1766 = vsel %vm805, %v1761, %v1765
      %v1767 = vshrl.u32 %v1398, 16
      %v1769 = vrot.slane %v1767, 4
      %v1770 = vor.u32 %v1769, %v1765
      %v1771 = vrot.slane %v1770, 4
      %v1773 = vshll.u32 %v1415, 16
      %v1775 = vrot.slane %v1773, 5
      %v1776 = vsel %vm805, %v1771, %v1775
      %v1778 = vshrl.u32 %v1399, 16
      %v1780 = vrot.slane %v1778, 4
      %v1781 = vshll.u32 %v1399, 16
      %v1783 = vrot.slane %v1781, 5
      %v1784 = vor.u32 %v1780, %v1783
      %v1785 = vrot.slane %v1784, 4
      %v1787 = vshll.u32 %v1400, 16
      %v1789 = vrot.slane %v1787, 5
      %v1790 = vsel %vm805, %v1785, %v1789
      %v1791 = vshrl.u32 %v1400, 16
      %v1793 = vrot.slane %v1791, 4
      %v1794 = vor.u32 %v1793, %v1789
      %v1795 = vrot.slane %v1794, 4
      %v1797 = vshll.u32 %v1416, 16
      %v1799 = vrot.slane %v1797, 5
      %v1800 = vsel %vm805, %v1795, %v1799
      %v1801 = vld [vmem:[%s637] sm:$0xe]
      %v1802 = vld [vmem:[%s637 + $0xc] sm:$0xe]
      %v1803 = vld [vmem:[%s637 + $0x18] sm:$0xe]
      %v1804 = vld [vmem:[%s637 + $0x24] sm:$0xe]
      %v1805 = vld [vmem:[%s637 + $0x30] sm:$0xe]
      %v1806 = vld [vmem:[%s637 + $0x3c] sm:$0xe]
      %v1807 = vld [vmem:[%s637 + $0x48] sm:$0xe]
      %v1808 = vld [vmem:[%s637 + $0x54] sm:$0xe]
      %v1809 = vld [vmem:[%s637 + $0x60] sm:$0xe]
      %v1810 = vld [vmem:[%s637 + $0x6c] sm:$0xe]
      %v1811 = vld [vmem:[%s637 + $0x78] sm:$0xe]
      %v1812 = vld [vmem:[%s637 + $0x84] sm:$0xe]
      %v1813 = vld [vmem:[%s637 + $0x90] sm:$0xe]
      %v1814 = vld [vmem:[%s637 + $0x9c] sm:$0xe]
      %v1815 = vld [vmem:[%s637 + $0xa8] sm:$0xe]
      %v1816 = vld [vmem:[%s637 + $0xb4] sm:$0xe]
      %v1865 = vrot.slane %v1801, 5
      %v1866 = vrot.slane %v1865, 4
      %v1867 = vrot.slane %v1370, 5
      %v1868 = vsel %vm1256, %v1866, %v1867
      %v1869 = vrot.slane %v1867, 4
      %v1870 = vrot.slane %v1401, 5
      %v1871 = vsel %vm1256, %v1869, %v1870
      %v1872 = vrot.slane %v1802, 5
      %v1873 = vrot.slane %v1872, 4
      %v1874 = vrot.slane %v1372, 5
      %v1875 = vsel %vm1256, %v1873, %v1874
      %v1876 = vrot.slane %v1874, 4
      %v1877 = vrot.slane %v1402, 5
      %v1878 = vsel %vm1256, %v1876, %v1877
      %v1879 = vrot.slane %v1803, 5
      %v1880 = vrot.slane %v1879, 4
      %v1881 = vrot.slane %v1374, 5
      %v1882 = vsel %vm1256, %v1880, %v1881
      %v1883 = vrot.slane %v1881, 4
      %v1884 = vrot.slane %v1403, 5
      %v1885 = vsel %vm1256, %v1883, %v1884
      %v1886 = vrot.slane %v1804, 5
      %v1887 = vrot.slane %v1886, 4
      %v1888 = vrot.slane %v1376, 5
      %v1889 = vsel %vm1256, %v1887, %v1888
      %v1890 = vrot.slane %v1888, 4
      %v1891 = vrot.slane %v1404, 5
      %v1892 = vsel %vm1256, %v1890, %v1891
      %v1893 = vrot.slane %v1805, 5
      %v1894 = vrot.slane %v1893, 4
      %v1895 = vrot.slane %v1378, 5
      %v1896 = vsel %vm1256, %v1894, %v1895
      %v1897 = vrot.slane %v1895, 4
      %v1898 = vrot.slane %v1405, 5
      %v1899 = vsel %vm1256, %v1897, %v1898
      %v1900 = vrot.slane %v1806, 5
      %v1901 = vrot.slane %v1900, 4
      %v1902 = vrot.slane %v1380, 5
      %v1903 = vsel %vm1256, %v1901, %v1902
      %v1904 = vrot.slane %v1902, 4
      %v1905 = vrot.slane %v1406, 5
      %v1906 = vsel %vm1256, %v1904, %v1905
      %v1907 = vrot.slane %v1807, 5
      %v1908 = vrot.slane %v1907, 4
      %v1909 = vrot.slane %v1382, 5
      %v1910 = vsel %vm1256, %v1908, %v1909
      %v1911 = vrot.slane %v1909, 4
      %v1912 = vrot.slane %v1407, 5
      %v1913 = vsel %vm1256, %v1911, %v1912
      %v1914 = vrot.slane %v1808, 5
      %v1915 = vrot.slane %v1914, 4
      %v1916 = vrot.slane %v1384, 5
      %v1917 = vsel %vm1256, %v1915, %v1916
      %v1918 = vrot.slane %v1916, 4
      %v1919 = vrot.slane %v1408, 5
      %v1920 = vsel %vm1256, %v1918, %v1919
      %v1921 = vrot.slane %v1809, 5
      %v1922 = vrot.slane %v1921, 4
      %v1923 = vrot.slane %v1386, 5
      %v1924 = vsel %vm1256, %v1922, %v1923
      %v1925 = vrot.slane %v1923, 4
      %v1926 = vrot.slane %v1409, 5
      %v1927 = vsel %vm1256, %v1925, %v1926
      %v1928 = vrot.slane %v1810, 5
      %v1929 = vrot.slane %v1928, 4
      %v1930 = vrot.slane %v1388, 5
      %v1931 = vsel %vm1256, %v1929, %v1930
      %v1932 = vrot.slane %v1930, 4
      %v1933 = vrot.slane %v1410, 5
      %v1934 = vsel %vm1256, %v1932, %v1933
      %v1935 = vrot.slane %v1811, 5
      %v1936 = vrot.slane %v1935, 4
      %v1937 = vrot.slane %v1390, 5
      %v1938 = vsel %vm1256, %v1936, %v1937
      %v1939 = vrot.slane %v1937, 4
      %v1940 = vrot.slane %v1411, 5
      %v1941 = vsel %vm1256, %v1939, %v1940
      %v1942 = vrot.slane %v1812, 5
      %v1943 = vrot.slane %v1942, 4
      %v1944 = vrot.slane %v1392, 5
      %v1945 = vsel %vm1256, %v1943, %v1944
      %v1946 = vrot.slane %v1944, 4
      %v1947 = vrot.slane %v1412, 5
      %v1948 = vsel %vm1256, %v1946, %v1947
      %v1949 = vrot.slane %v1813, 5
      %v1950 = vrot.slane %v1949, 4
      %v1951 = vrot.slane %v1394, 5
      %v1952 = vsel %vm1256, %v1950, %v1951
      %v1953 = vrot.slane %v1951, 4
      %v1954 = vrot.slane %v1413, 5
      %v1955 = vsel %vm1256, %v1953, %v1954
      %v1956 = vrot.slane %v1814, 5
      %v1957 = vrot.slane %v1956, 4
      %v1958 = vrot.slane %v1396, 5
      %v1959 = vsel %vm1256, %v1957, %v1958
      %v1960 = vrot.slane %v1958, 4
      %v1961 = vrot.slane %v1414, 5
      %v1962 = vsel %vm1256, %v1960, %v1961
      %v1963 = vrot.slane %v1815, 5
      %v1964 = vrot.slane %v1963, 4
      %v1965 = vrot.slane %v1398, 5
      %v1966 = vsel %vm1256, %v1964, %v1965
      %v1967 = vrot.slane %v1965, 4
      %v1968 = vrot.slane %v1415, 5
      %v1969 = vsel %vm1256, %v1967, %v1968
      %v1970 = vrot.slane %v1816, 5
      %v1971 = vrot.slane %v1970, 4
      %v1972 = vrot.slane %v1400, 5
      %v1973 = vsel %vm1256, %v1971, %v1972
      %v1974 = vrot.slane %v1972, 4
      %v1975 = vrot.slane %v1416, 5
      %v1976 = vsel %vm1256, %v1974, %v1975
      %s1977 = scalar_lea.vmem [#allocation2], 24
      %v1978 = vld [vmem:[%s1977] sm:$0xf]
      %v1979 = vld [vmem:[%s1977 + $0x4] sm:$0xf]
      %v1980 = vld [vmem:[%s1977 + $0xc] sm:$0xf]
      %v1981 = vld [vmem:[%s1977 + $0x10] sm:$0xf]
      %v1982 = vld [vmem:[%s1977 + $0x18] sm:$0xf]
      %v1983 = vld [vmem:[%s1977 + $0x1c] sm:$0xf]
      %v1984 = vld [vmem:[%s1977 + $0x24] sm:$0xf]
      %v1985 = vld [vmem:[%s1977 + $0x28] sm:$0xf]
      %v1986 = vld [vmem:[%s1977 + $0x30] sm:$0xf]
      %v1987 = vld [vmem:[%s1977 + $0x34] sm:$0xf]
      %v1988 = vld [vmem:[%s1977 + $0x3c] sm:$0xf]
      %v1989 = vld [vmem:[%s1977 + $0x40] sm:$0xf]
      %v1990 = vld [vmem:[%s1977 + $0x48] sm:$0xf]
      %v1991 = vld [vmem:[%s1977 + $0x4c] sm:$0xf]
      %v1992 = vld [vmem:[%s1977 + $0x54] sm:$0xf]
      %v1993 = vld [vmem:[%s1977 + $0x58] sm:$0xf]
      %v1994 = vld [vmem:[%s1977 + $0x60] sm:$0xf]
      %v1995 = vld [vmem:[%s1977 + $0x64] sm:$0xf]
      %v1996 = vld [vmem:[%s1977 + $0x6c] sm:$0xf]
      %v1997 = vld [vmem:[%s1977 + $0x70] sm:$0xf]
      %v1998 = vld [vmem:[%s1977 + $0x78] sm:$0xf]
      %v1999 = vld [vmem:[%s1977 + $0x7c] sm:$0xf]
      %v2000 = vld [vmem:[%s1977 + $0x84] sm:$0xf]
      %v2001 = vld [vmem:[%s1977 + $0x88] sm:$0xf]
      %v2002 = vld [vmem:[%s1977 + $0x90] sm:$0xf]
      %v2003 = vld [vmem:[%s1977 + $0x94] sm:$0xf]
      %v2004 = vld [vmem:[%s1977 + $0x9c] sm:$0xf]
      %v2005 = vld [vmem:[%s1977 + $0xa0] sm:$0xf]
      %v2006 = vld [vmem:[%s1977 + $0xa8] sm:$0xf]
      %v2007 = vld [vmem:[%s1977 + $0xac] sm:$0xf]
      %v2008 = vld [vmem:[%s1977 + $0xb4] sm:$0xf]
      %v2009 = vld [vmem:[%s1977 + $0xb8] sm:$0xf]
      %v2010 = vld [vmem:[%s1977 + $0x8] sm:$0x1]
      %v2011 = vld [vmem:[%s1977 + $0x14] sm:$0x1]
      %v2012 = vld [vmem:[%s1977 + $0x20] sm:$0x1]
      %v2013 = vld [vmem:[%s1977 + $0x2c] sm:$0x1]
      %v2014 = vld [vmem:[%s1977 + $0x38] sm:$0x1]
      %v2015 = vld [vmem:[%s1977 + $0x44] sm:$0x1]
      %v2016 = vld [vmem:[%s1977 + $0x50] sm:$0x1]
      %v2017 = vld [vmem:[%s1977 + $0x5c] sm:$0x1]
      %v2018 = vld [vmem:[%s1977 + $0x68] sm:$0x1]
      %v2019 = vld [vmem:[%s1977 + $0x74] sm:$0x1]
      %v2020 = vld [vmem:[%s1977 + $0x80] sm:$0x1]
      %v2021 = vld [vmem:[%s1977 + $0x8c] sm:$0x1]
      %v2022 = vld [vmem:[%s1977 + $0x98] sm:$0x1]
      %v2023 = vld [vmem:[%s1977 + $0xa4] sm:$0x1]
      %v2024 = vld [vmem:[%s1977 + $0xb0] sm:$0x1]
      %v2025 = vld [vmem:[%s1977 + $0xbc] sm:$0x1]
      %v2027 = vshrl.u32 %v1978, 16
      %v2029 = vrot.slane %v2027, 4
      %v2030 = vshll.u32 %v1978, 16
      %v2032 = vrot.slane %v2030, 5
      %v2033 = vor.u32 %v2029, %v2032
      %v2034 = vrot.slane %v2033, 4
      %v2036 = vshll.u32 %v1979, 16
      %v2038 = vrot.slane %v2036, 5
      %v2039 = vsel %vm805, %v2034, %v2038
      %v2040 = vshrl.u32 %v1979, 16
      %v2042 = vrot.slane %v2040, 4
      %v2043 = vor.u32 %v2042, %v2038
      %v2044 = vrot.slane %v2043, 4
      %v2046 = vshll.u32 %v2010, 16
      %v2048 = vrot.slane %v2046, 5
      %v2049 = vsel %vm805, %v2044, %v2048
      %v2051 = vshrl.u32 %v1980, 16
      %v2053 = vrot.slane %v2051, 4
      %v2054 = vshll.u32 %v1980, 16
      %v2056 = vrot.slane %v2054, 5
      %v2057 = vor.u32 %v2053, %v2056
      %v2058 = vrot.slane %v2057, 4
      %v2060 = vshll.u32 %v1981, 16
      %v2062 = vrot.slane %v2060, 5
      %v2063 = vsel %vm805, %v2058, %v2062
      %v2064 = vshrl.u32 %v1981, 16
      %v2066 = vrot.slane %v2064, 4
      %v2067 = vor.u32 %v2066, %v2062
      %v2068 = vrot.slane %v2067, 4
      %v2070 = vshll.u32 %v2011, 16
      %v2072 = vrot.slane %v2070, 5
      %v2073 = vsel %vm805, %v2068, %v2072
      %v2075 = vshrl.u32 %v1982, 16
      %v2077 = vrot.slane %v2075, 4
      %v2078 = vshll.u32 %v1982, 16
      %v2080 = vrot.slane %v2078, 5
      %v2081 = vor.u32 %v2077, %v2080
      %v2082 = vrot.slane %v2081, 4
      %v2084 = vshll.u32 %v1983, 16
      %v2086 = vrot.slane %v2084, 5
      %v2087 = vsel %vm805, %v2082, %v2086
      %v2088 = vshrl.u32 %v1983, 16
      %v2090 = vrot.slane %v2088, 4
      %v2091 = vor.u32 %v2090, %v2086
      %v2092 = vrot.slane %v2091, 4
      %v2094 = vshll.u32 %v2012, 16
      %v2096 = vrot.slane %v2094, 5
      %v2097 = vsel %vm805, %v2092, %v2096
      %v2099 = vshrl.u32 %v1984, 16
      %v2101 = vrot.slane %v2099, 4
      %v2102 = vshll.u32 %v1984, 16
      %v2104 = vrot.slane %v2102, 5
      %v2105 = vor.u32 %v2101, %v2104
      %v2106 = vrot.slane %v2105, 4
      %v2108 = vshll.u32 %v1985, 16
      %v2110 = vrot.slane %v2108, 5
      %v2111 = vsel %vm805, %v2106, %v2110
      %v2112 = vshrl.u32 %v1985, 16
      %v2114 = vrot.slane %v2112, 4
      %v2115 = vor.u32 %v2114, %v2110
      %v2116 = vrot.slane %v2115, 4
      %v2118 = vshll.u32 %v2013, 16
      %v2120 = vrot.slane %v2118, 5
      %v2121 = vsel %vm805, %v2116, %v2120
      %v2123 = vshrl.u32 %v1986, 16
      %v2125 = vrot.slane %v2123, 4
      %v2126 = vshll.u32 %v1986, 16
      %v2128 = vrot.slane %v2126, 5
      %v2129 = vor.u32 %v2125, %v2128
      %v2130 = vrot.slane %v2129, 4
      %v2132 = vshll.u32 %v1987, 16
      %v2134 = vrot.slane %v2132, 5
      %v2135 = vsel %vm805, %v2130, %v2134
      %v2136 = vshrl.u32 %v1987, 16
      %v2138 = vrot.slane %v2136, 4
      %v2139 = vor.u32 %v2138, %v2134
      %v2140 = vrot.slane %v2139, 4
      %v2142 = vshll.u32 %v2014, 16
      %v2144 = vrot.slane %v2142, 5
      %v2145 = vsel %vm805, %v2140, %v2144
      %v2147 = vshrl.u32 %v1988, 16
      %v2149 = vrot.slane %v2147, 4
      %v2150 = vshll.u32 %v1988, 16
      %v2152 = vrot.slane %v2150, 5
      %v2153 = vor.u32 %v2149, %v2152
      %v2154 = vrot.slane %v2153, 4
      %v2156 = vshll.u32 %v1989, 16
      %v2158 = vrot.slane %v2156, 5
      %v2159 = vsel %vm805, %v2154, %v2158
      %v2160 = vshrl.u32 %v1989, 16
      %v2162 = vrot.slane %v2160, 4
      %v2163 = vor.u32 %v2162, %v2158
      %v2164 = vrot.slane %v2163, 4
      %v2166 = vshll.u32 %v2015, 16
      %v2168 = vrot.slane %v2166, 5
      %v2169 = vsel %vm805, %v2164, %v2168
      %v2171 = vshrl.u32 %v1990, 16
      %v2173 = vrot.slane %v2171, 4
      %v2174 = vshll.u32 %v1990, 16
      %v2176 = vrot.slane %v2174, 5
      %v2177 = vor.u32 %v2173, %v2176
      %v2178 = vrot.slane %v2177, 4
      %v2180 = vshll.u32 %v1991, 16
      %v2182 = vrot.slane %v2180, 5
      %v2183 = vsel %vm805, %v2178, %v2182
      %v2184 = vshrl.u32 %v1991, 16
      %v2186 = vrot.slane %v2184, 4
      %v2187 = vor.u32 %v2186, %v2182
      %v2188 = vrot.slane %v2187, 4
      %v2190 = vshll.u32 %v2016, 16
      %v2192 = vrot.slane %v2190, 5
      %v2193 = vsel %vm805, %v2188, %v2192
      %v2195 = vshrl.u32 %v1992, 16
      %v2197 = vrot.slane %v2195, 4
      %v2198 = vshll.u32 %v1992, 16
      %v2200 = vrot.slane %v2198, 5
      %v2201 = vor.u32 %v2197, %v2200
      %v2202 = vrot.slane %v2201, 4
      %v2204 = vshll.u32 %v1993, 16
      %v2206 = vrot.slane %v2204, 5
      %v2207 = vsel %vm805, %v2202, %v2206
      %v2208 = vshrl.u32 %v1993, 16
      %v2210 = vrot.slane %v2208, 4
      %v2211 = vor.u32 %v2210, %v2206
      %v2212 = vrot.slane %v2211, 4
      %v2214 = vshll.u32 %v2017, 16
      %v2216 = vrot.slane %v2214, 5
      %v2217 = vsel %vm805, %v2212, %v2216
      %v2219 = vshrl.u32 %v1994, 16
      %v2221 = vrot.slane %v2219, 4
      %v2222 = vshll.u32 %v1994, 16
      %v2224 = vrot.slane %v2222, 5
      %v2225 = vor.u32 %v2221, %v2224
      %v2226 = vrot.slane %v2225, 4
      %v2228 = vshll.u32 %v1995, 16
      %v2230 = vrot.slane %v2228, 5
      %v2231 = vsel %vm805, %v2226, %v2230
      %v2232 = vshrl.u32 %v1995, 16
      %v2234 = vrot.slane %v2232, 4
      %v2235 = vor.u32 %v2234, %v2230
      %v2236 = vrot.slane %v2235, 4
      %v2238 = vshll.u32 %v2018, 16
      %v2240 = vrot.slane %v2238, 5
      %v2241 = vsel %vm805, %v2236, %v2240
      %v2243 = vshrl.u32 %v1996, 16
      %v2245 = vrot.slane %v2243, 4
      %v2246 = vshll.u32 %v1996, 16
      %v2248 = vrot.slane %v2246, 5
      %v2249 = vor.u32 %v2245, %v2248
      %v2250 = vrot.slane %v2249, 4
      %v2252 = vshll.u32 %v1997, 16
      %v2254 = vrot.slane %v2252, 5
      %v2255 = vsel %vm805, %v2250, %v2254
      %v2256 = vshrl.u32 %v1997, 16
      %v2258 = vrot.slane %v2256, 4
      %v2259 = vor.u32 %v2258, %v2254
      %v2260 = vrot.slane %v2259, 4
      %v2262 = vshll.u32 %v2019, 16
      %v2264 = vrot.slane %v2262, 5
      %v2265 = vsel %vm805, %v2260, %v2264
      %v2267 = vshrl.u32 %v1998, 16
      %v2269 = vrot.slane %v2267, 4
      %v2270 = vshll.u32 %v1998, 16
      %v2272 = vrot.slane %v2270, 5
      %v2273 = vor.u32 %v2269, %v2272
      %v2274 = vrot.slane %v2273, 4
      %v2276 = vshll.u32 %v1999, 16
      %v2278 = vrot.slane %v2276, 5
      %v2279 = vsel %vm805, %v2274, %v2278
      %v2280 = vshrl.u32 %v1999, 16
      %v2282 = vrot.slane %v2280, 4
      %v2283 = vor.u32 %v2282, %v2278
      %v2284 = vrot.slane %v2283, 4
      %v2286 = vshll.u32 %v2020, 16
      %v2288 = vrot.slane %v2286, 5
      %v2289 = vsel %vm805, %v2284, %v2288
      %v2291 = vshrl.u32 %v2000, 16
      %v2293 = vrot.slane %v2291, 4
      %v2294 = vshll.u32 %v2000, 16
      %v2296 = vrot.slane %v2294, 5
      %v2297 = vor.u32 %v2293, %v2296
      %v2298 = vrot.slane %v2297, 4
      %v2300 = vshll.u32 %v2001, 16
      %v2302 = vrot.slane %v2300, 5
      %v2303 = vsel %vm805, %v2298, %v2302
      %v2304 = vshrl.u32 %v2001, 16
      %v2306 = vrot.slane %v2304, 4
      %v2307 = vor.u32 %v2306, %v2302
      %v2308 = vrot.slane %v2307, 4
      %v2310 = vshll.u32 %v2021, 16
      %v2312 = vrot.slane %v2310, 5
      %v2313 = vsel %vm805, %v2308, %v2312
      %v2315 = vshrl.u32 %v2002, 16
      %v2317 = vrot.slane %v2315, 4
      %v2318 = vshll.u32 %v2002, 16
      %v2320 = vrot.slane %v2318, 5
      %v2321 = vor.u32 %v2317, %v2320
      %v2322 = vrot.slane %v2321, 4
      %v2324 = vshll.u32 %v2003, 16
      %v2326 = vrot.slane %v2324, 5
      %v2327 = vsel %vm805, %v2322, %v2326
      %v2328 = vshrl.u32 %v2003, 16
      %v2330 = vrot.slane %v2328, 4
      %v2331 = vor.u32 %v2330, %v2326
      %v2332 = vrot.slane %v2331, 4
      %v2334 = vshll.u32 %v2022, 16
      %v2336 = vrot.slane %v2334, 5
      %v2337 = vsel %vm805, %v2332, %v2336
      %v2339 = vshrl.u32 %v2004, 16
      %v2341 = vrot.slane %v2339, 4
      %v2342 = vshll.u32 %v2004, 16
      %v2344 = vrot.slane %v2342, 5
      %v2345 = vor.u32 %v2341, %v2344
      %v2346 = vrot.slane %v2345, 4
      %v2348 = vshll.u32 %v2005, 16
      %v2350 = vrot.slane %v2348, 5
      %v2351 = vsel %vm805, %v2346, %v2350
      %v2352 = vshrl.u32 %v2005, 16
      %v2354 = vrot.slane %v2352, 4
      %v2355 = vor.u32 %v2354, %v2350
      %v2356 = vrot.slane %v2355, 4
      %v2358 = vshll.u32 %v2023, 16
      %v2360 = vrot.slane %v2358, 5
      %v2361 = vsel %vm805, %v2356, %v2360
      %v2363 = vshrl.u32 %v2006, 16
      %v2365 = vrot.slane %v2363, 4
      %v2366 = vshll.u32 %v2006, 16
      %v2368 = vrot.slane %v2366, 5
      %v2369 = vor.u32 %v2365, %v2368
      %v2370 = vrot.slane %v2369, 4
      %v2372 = vshll.u32 %v2007, 16
      %v2374 = vrot.slane %v2372, 5
      %v2375 = vsel %vm805, %v2370, %v2374
      %v2376 = vshrl.u32 %v2007, 16
      %v2378 = vrot.slane %v2376, 4
      %v2379 = vor.u32 %v2378, %v2374
      %v2380 = vrot.slane %v2379, 4
      %v2382 = vshll.u32 %v2024, 16
      %v2384 = vrot.slane %v2382, 5
      %v2385 = vsel %vm805, %v2380, %v2384
      %v2387 = vshrl.u32 %v2008, 16
      %v2389 = vrot.slane %v2387, 4
      %v2390 = vshll.u32 %v2008, 16
      %v2392 = vrot.slane %v2390, 5
      %v2393 = vor.u32 %v2389, %v2392
      %v2394 = vrot.slane %v2393, 4
      %v2396 = vshll.u32 %v2009, 16
      %v2398 = vrot.slane %v2396, 5
      %v2399 = vsel %vm805, %v2394, %v2398
      %v2400 = vshrl.u32 %v2009, 16
      %v2402 = vrot.slane %v2400, 4
      %v2403 = vor.u32 %v2402, %v2398
      %v2404 = vrot.slane %v2403, 4
      %v2406 = vshll.u32 %v2025, 16
      %v2408 = vrot.slane %v2406, 5
      %v2409 = vsel %vm805, %v2404, %v2408
      %v2410 = vld [vmem:[%s1977] sm:$0xe]
      %v2411 = vld [vmem:[%s1977 + $0xc] sm:$0xe]
      %v2412 = vld [vmem:[%s1977 + $0x18] sm:$0xe]
      %v2413 = vld [vmem:[%s1977 + $0x24] sm:$0xe]
      %v2414 = vld [vmem:[%s1977 + $0x30] sm:$0xe]
      %v2415 = vld [vmem:[%s1977 + $0x3c] sm:$0xe]
      %v2416 = vld [vmem:[%s1977 + $0x48] sm:$0xe]
      %v2417 = vld [vmem:[%s1977 + $0x54] sm:$0xe]
      %v2418 = vld [vmem:[%s1977 + $0x60] sm:$0xe]
      %v2419 = vld [vmem:[%s1977 + $0x6c] sm:$0xe]
      %v2420 = vld [vmem:[%s1977 + $0x78] sm:$0xe]
      %v2421 = vld [vmem:[%s1977 + $0x84] sm:$0xe]
      %v2422 = vld [vmem:[%s1977 + $0x90] sm:$0xe]
      %v2423 = vld [vmem:[%s1977 + $0x9c] sm:$0xe]
      %v2424 = vld [vmem:[%s1977 + $0xa8] sm:$0xe]
      %v2425 = vld [vmem:[%s1977 + $0xb4] sm:$0xe]
      %v2474 = vrot.slane %v2410, 5
      %v2475 = vrot.slane %v2474, 4
      %v2476 = vrot.slane %v1979, 5
      %v2477 = vsel %vm1256, %v2475, %v2476
      %v2478 = vrot.slane %v2476, 4
      %v2479 = vrot.slane %v2010, 5
      %v2480 = vsel %vm1256, %v2478, %v2479
      %v2481 = vrot.slane %v2411, 5
      %v2482 = vrot.slane %v2481, 4
      %v2483 = vrot.slane %v1981, 5
      %v2484 = vsel %vm1256, %v2482, %v2483
      %v2485 = vrot.slane %v2483, 4
      %v2486 = vrot.slane %v2011, 5
      %v2487 = vsel %vm1256, %v2485, %v2486
      %v2488 = vrot.slane %v2412, 5
      %v2489 = vrot.slane %v2488, 4
      %v2490 = vrot.slane %v1983, 5
      %v2491 = vsel %vm1256, %v2489, %v2490
      %v2492 = vrot.slane %v2490, 4
      %v2493 = vrot.slane %v2012, 5
      %v2494 = vsel %vm1256, %v2492, %v2493
      %v2495 = vrot.slane %v2413, 5
      %v2496 = vrot.slane %v2495, 4
      %v2497 = vrot.slane %v1985, 5
      %v2498 = vsel %vm1256, %v2496, %v2497
      %v2499 = vrot.slane %v2497, 4
      %v2500 = vrot.slane %v2013, 5
      %v2501 = vsel %vm1256, %v2499, %v2500
      %v2502 = vrot.slane %v2414, 5
      %v2503 = vrot.slane %v2502, 4
      %v2504 = vrot.slane %v1987, 5
      %v2505 = vsel %vm1256, %v2503, %v2504
      %v2506 = vrot.slane %v2504, 4
      %v2507 = vrot.slane %v2014, 5
      %v2508 = vsel %vm1256, %v2506, %v2507
      %v2509 = vrot.slane %v2415, 5
      %v2510 = vrot.slane %v2509, 4
      %v2511 = vrot.slane %v1989, 5
      %v2512 = vsel %vm1256, %v2510, %v2511
      %v2513 = vrot.slane %v2511, 4
      %v2514 = vrot.slane %v2015, 5
      %v2515 = vsel %vm1256, %v2513, %v2514
      %v2516 = vrot.slane %v2416, 5
      %v2517 = vrot.slane %v2516, 4
      %v2518 = vrot.slane %v1991, 5
      %v2519 = vsel %vm1256, %v2517, %v2518
      %v2520 = vrot.slane %v2518, 4
      %v2521 = vrot.slane %v2016, 5
      %v2522 = vsel %vm1256, %v2520, %v2521
      %v2523 = vrot.slane %v2417, 5
      %v2524 = vrot.slane %v2523, 4
      %v2525 = vrot.slane %v1993, 5
      %v2526 = vsel %vm1256, %v2524, %v2525
      %v2527 = vrot.slane %v2525, 4
      %v2528 = vrot.slane %v2017, 5
      %v2529 = vsel %vm1256, %v2527, %v2528
      %v2530 = vrot.slane %v2418, 5
      %v2531 = vrot.slane %v2530, 4
      %v2532 = vrot.slane %v1995, 5
      %v2533 = vsel %vm1256, %v2531, %v2532
      %v2534 = vrot.slane %v2532, 4
      %v2535 = vrot.slane %v2018, 5
      %v2536 = vsel %vm1256, %v2534, %v2535
      %v2537 = vrot.slane %v2419, 5
      %v2538 = vrot.slane %v2537, 4
      %v2539 = vrot.slane %v1997, 5
      %v2540 = vsel %vm1256, %v2538, %v2539
      %v2541 = vrot.slane %v2539, 4
      %v2542 = vrot.slane %v2019, 5
      %v2543 = vsel %vm1256, %v2541, %v2542
      %v2544 = vrot.slane %v2420, 5
      %v2545 = vrot.slane %v2544, 4
      %v2546 = vrot.slane %v1999, 5
      %v2547 = vsel %vm1256, %v2545, %v2546
      %v2548 = vrot.slane %v2546, 4
      %v2549 = vrot.slane %v2020, 5
      %v2550 = vsel %vm1256, %v2548, %v2549
      %v2551 = vrot.slane %v2421, 5
      %v2552 = vrot.slane %v2551, 4
      %v2553 = vrot.slane %v2001, 5
      %v2554 = vsel %vm1256, %v2552, %v2553
      %v2555 = vrot.slane %v2553, 4
      %v2556 = vrot.slane %v2021, 5
      %v2557 = vsel %vm1256, %v2555, %v2556
      %v2558 = vrot.slane %v2422, 5
      %v2559 = vrot.slane %v2558, 4
      %v2560 = vrot.slane %v2003, 5
      %v2561 = vsel %vm1256, %v2559, %v2560
      %v2562 = vrot.slane %v2560, 4
      %v2563 = vrot.slane %v2022, 5
      %v2564 = vsel %vm1256, %v2562, %v2563
      %v2565 = vrot.slane %v2423, 5
      %v2566 = vrot.slane %v2565, 4
      %v2567 = vrot.slane %v2005, 5
      %v2568 = vsel %vm1256, %v2566, %v2567
      %v2569 = vrot.slane %v2567, 4
      %v2570 = vrot.slane %v2023, 5
      %v2571 = vsel %vm1256, %v2569, %v2570
      %v2572 = vrot.slane %v2424, 5
      %v2573 = vrot.slane %v2572, 4
      %v2574 = vrot.slane %v2007, 5
      %v2575 = vsel %vm1256, %v2573, %v2574
      %v2576 = vrot.slane %v2574, 4
      %v2577 = vrot.slane %v2024, 5
      %v2578 = vsel %vm1256, %v2576, %v2577
      %v2579 = vrot.slane %v2425, 5
      %v2580 = vrot.slane %v2579, 4
      %v2581 = vrot.slane %v2009, 5
      %v2582 = vsel %vm1256, %v2580, %v2581
      %v2583 = vrot.slane %v2581, 4
      %v2584 = vrot.slane %v2025, 5
      %v2585 = vsel %vm1256, %v2583, %v2584
      %v2602 = vunpack.c.l.b16 %v755
      %v2603 = vunpack.c.l.b16 %v756
      %v2604 = vunpack.c.l.b16 %v757
      %v2605 = vunpack.c.l.b16 %v758
      %v2606 = vunpack.c.l.b16 %v759
      %v2607 = vunpack.c.l.b16 %v760
      %v2608 = vunpack.c.l.b16 %v761
      %v2609 = vunpack.c.l.b16 %v762
      %v2610 = vunpack.c.l.b16 %v763
      %v2611 = vunpack.c.l.b16 %v764
      %v2612 = vunpack.c.l.b16 %v765
      %v2613 = vunpack.c.l.b16 %v766
      %v2614 = vunpack.c.l.b16 %v767
      %v2615 = vunpack.c.l.b16 %v768
      %v2616 = vunpack.c.l.b16 %v769
      %v2617 = vunpack.c.l.b16 %v770
      %v2618 = vunpack.c.l.b16 %v771
      %v2619 = vunpack.c.l.b16 %v772
      %v2620 = vunpack.c.l.b16 %v773
      %v2621 = vunpack.c.l.b16 %v774
      %v2622 = vunpack.c.l.b16 %v775
      %v2623 = vunpack.c.l.b16 %v776
      %v2624 = vunpack.c.l.b16 %v777
      %v2625 = vunpack.c.l.b16 %v778
      %v2626 = vunpack.c.l.b16 %v779
      %v2627 = vunpack.c.l.b16 %v780
      %v2628 = vunpack.c.l.b16 %v781
      %v2629 = vunpack.c.l.b16 %v782
      %v2630 = vunpack.c.l.b16 %v783
      %v2631 = vunpack.c.l.b16 %v784
      %v2632 = vunpack.c.l.b16 %v785
      %v2633 = vunpack.c.l.b16 %v786
      %v2634 = vpack.c.b16 %v2603, %v2602
      %v2635 = vpack.c.b16 %v2605, %v2604
      %v2636 = vpack.c.b16 %v2607, %v2606
      %v2637 = vpack.c.b16 %v2609, %v2608
      %v2638 = vpack.c.b16 %v2611, %v2610
      %v2639 = vpack.c.b16 %v2613, %v2612
      %v2640 = vpack.c.b16 %v2615, %v2614
      %v2641 = vpack.c.b16 %v2617, %v2616
      %v2642 = vpack.c.b16 %v2619, %v2618
      %v2643 = vpack.c.b16 %v2621, %v2620
      %v2644 = vpack.c.b16 %v2623, %v2622
      %v2645 = vpack.c.b16 %v2625, %v2624
      %v2646 = vpack.c.b16 %v2627, %v2626
      %v2647 = vpack.c.b16 %v2629, %v2628
      %v2648 = vpack.c.b16 %v2631, %v2630
      %v2649 = vpack.c.b16 %v2633, %v2632
      %v2650 = vunpack.c.l.b16 %v819
      %v2651 = vunpack.c.l.b16 %v829
      %v2652 = vunpack.c.l.b16 %v843
      %v2653 = vunpack.c.l.b16 %v853
      %v2654 = vunpack.c.l.b16 %v867
      %v2655 = vunpack.c.l.b16 %v877
      %v2656 = vunpack.c.l.b16 %v891
      %v2657 = vunpack.c.l.b16 %v901
      %v2658 = vunpack.c.l.b16 %v915
      %v2659 = vunpack.c.l.b16 %v925
      %v2660 = vunpack.c.l.b16 %v939
      %v2661 = vunpack.c.l.b16 %v949
      %v2662 = vunpack.c.l.b16 %v963
      %v2663 = vunpack.c.l.b16 %v973
      %v2664 = vunpack.c.l.b16 %v987
      %v2665 = vunpack.c.l.b16 %v997
      %v2666 = vunpack.c.l.b16 %v1011
      %v2667 = vunpack.c.l.b16 %v1021
      %v2668 = vunpack.c.l.b16 %v1035
      %v2669 = vunpack.c.l.b16 %v1045
      %v2670 = vunpack.c.l.b16 %v1059
      %v2671 = vunpack.c.l.b16 %v1069
      %v2672 = vunpack.c.l.b16 %v1083
      %v2673 = vunpack.c.l.b16 %v1093
      %v2674 = vunpack.c.l.b16 %v1107
      %v2675 = vunpack.c.l.b16 %v1117
      %v2676 = vunpack.c.l.b16 %v1131
      %v2677 = vunpack.c.l.b16 %v1141
      %v2678 = vunpack.c.l.b16 %v1155
      %v2679 = vunpack.c.l.b16 %v1165
      %v2680 = vunpack.c.l.b16 %v1179
      %v2681 = vunpack.c.l.b16 %v1189
      %v2682 = vpack.c.b16 %v2651, %v2650
      %v2683 = vpack.c.b16 %v2653, %v2652
      %v2684 = vpack.c.b16 %v2655, %v2654
      %v2685 = vpack.c.b16 %v2657, %v2656
      %v2686 = vpack.c.b16 %v2659, %v2658
      %v2687 = vpack.c.b16 %v2661, %v2660
      %v2688 = vpack.c.b16 %v2663, %v2662
      %v2689 = vpack.c.b16 %v2665, %v2664
      %v2690 = vpack.c.b16 %v2667, %v2666
      %v2691 = vpack.c.b16 %v2669, %v2668
      %v2692 = vpack.c.b16 %v2671, %v2670
      %v2693 = vpack.c.b16 %v2673, %v2672
      %v2694 = vpack.c.b16 %v2675, %v2674
      %v2695 = vpack.c.b16 %v2677, %v2676
      %v2696 = vpack.c.b16 %v2679, %v2678
      %v2697 = vpack.c.b16 %v2681, %v2680
      %2698 = vrot.lane.b32.xlu0 %v2682, 4
      %v2699 = vpop.permute.xlu0 %2698
      %2700 = vrot.lane.b32.xlu0 %v2683, 4
      %v2701 = vpop.permute.xlu0 %2700
      %2702 = vrot.lane.b32.xlu0 %v2684, 4
      %v2703 = vpop.permute.xlu0 %2702
      %2704 = vrot.lane.b32.xlu0 %v2685, 4
      %v2705 = vpop.permute.xlu0 %2704
      %2706 = vrot.lane.b32.xlu0 %v2686, 4
      %v2707 = vpop.permute.xlu0 %2706
      %2708 = vrot.lane.b32.xlu0 %v2687, 4
      %v2709 = vpop.permute.xlu0 %2708
      %2710 = vrot.lane.b32.xlu0 %v2688, 4
      %v2711 = vpop.permute.xlu0 %2710
      %2712 = vrot.lane.b32.xlu0 %v2689, 4
      %v2713 = vpop.permute.xlu0 %2712
      %2714 = vrot.lane.b32.xlu0 %v2690, 4
      %v2715 = vpop.permute.xlu0 %2714
      %2716 = vrot.lane.b32.xlu0 %v2691, 4
      %v2717 = vpop.permute.xlu0 %2716
      %2718 = vrot.lane.b32.xlu0 %v2692, 4
      %v2719 = vpop.permute.xlu0 %2718
      %2720 = vrot.lane.b32.xlu0 %v2693, 4
      %v2721 = vpop.permute.xlu0 %2720
      %2722 = vrot.lane.b32.xlu0 %v2694, 4
      %v2723 = vpop.permute.xlu0 %2722
      %2724 = vrot.lane.b32.xlu0 %v2695, 4
      %v2725 = vpop.permute.xlu0 %2724
      %2726 = vrot.lane.b32.xlu0 %v2696, 4
      %v2727 = vpop.permute.xlu0 %2726
      %2728 = vrot.lane.b32.xlu0 %v2697, 4
      %v2729 = vpop.permute.xlu0 %2728
      %v2730 = vunpack.c.l.b16 %v1260
      %v2731 = vunpack.c.l.b16 %v1263
      %v2732 = vunpack.c.l.b16 %v1267
      %v2733 = vunpack.c.l.b16 %v1270
      %v2734 = vunpack.c.l.b16 %v1274
      %v2735 = vunpack.c.l.b16 %v1277
      %v2736 = vunpack.c.l.b16 %v1281
      %v2737 = vunpack.c.l.b16 %v1284
      %v2738 = vunpack.c.l.b16 %v1288
      %v2739 = vunpack.c.l.b16 %v1291
      %v2740 = vunpack.c.l.b16 %v1295
      %v2741 = vunpack.c.l.b16 %v1298
      %v2742 = vunpack.c.l.b16 %v1302
      %v2743 = vunpack.c.l.b16 %v1305
      %v2744 = vunpack.c.l.b16 %v1309
      %v2745 = vunpack.c.l.b16 %v1312
      %v2746 = vunpack.c.l.b16 %v1316
      %v2747 = vunpack.c.l.b16 %v1319
      %v2748 = vunpack.c.l.b16 %v1323
      %v2749 = vunpack.c.l.b16 %v1326
      %v2750 = vunpack.c.l.b16 %v1330
      %v2751 = vunpack.c.l.b16 %v1333
      %v2752 = vunpack.c.l.b16 %v1337
      %v2753 = vunpack.c.l.b16 %v1340
      %v2754 = vunpack.c.l.b16 %v1344
      %v2755 = vunpack.c.l.b16 %v1347
      %v2756 = vunpack.c.l.b16 %v1351
      %v2757 = vunpack.c.l.b16 %v1354
      %v2758 = vunpack.c.l.b16 %v1358
      %v2759 = vunpack.c.l.b16 %v1361
      %v2760 = vunpack.c.l.b16 %v1365
      %v2761 = vunpack.c.l.b16 %v1368
      %v2762 = vpack.c.b16 %v2731, %v2730
      %v2763 = vpack.c.b16 %v2733, %v2732
      %v2764 = vpack.c.b16 %v2735, %v2734
      %v2765 = vpack.c.b16 %v2737, %v2736
      %v2766 = vpack.c.b16 %v2739, %v2738
      %v2767 = vpack.c.b16 %v2741, %v2740
      %v2768 = vpack.c.b16 %v2743, %v2742
      %v2769 = vpack.c.b16 %v2745, %v2744
      %v2770 = vpack.c.b16 %v2747, %v2746
      %v2771 = vpack.c.b16 %v2749, %v2748
      %v2772 = vpack.c.b16 %v2751, %v2750
      %v2773 = vpack.c.b16 %v2753, %v2752
      %v2774 = vpack.c.b16 %v2755, %v2754
      %v2775 = vpack.c.b16 %v2757, %v2756
      %v2776 = vpack.c.b16 %v2759, %v2758
      %v2777 = vpack.c.b16 %v2761, %v2760
      %2778 = vrot.lane.b32.xlu0 %v2762, 8
      %v2779 = vpop.permute.xlu0 %2778
      %2780 = vrot.lane.b32.xlu0 %v2763, 8
      %v2781 = vpop.permute.xlu0 %2780
      %2782 = vrot.lane.b32.xlu0 %v2764, 8
      %v2783 = vpop.permute.xlu0 %2782
      %2784 = vrot.lane.b32.xlu0 %v2765, 8
      %v2785 = vpop.permute.xlu0 %2784
      %2786 = vrot.lane.b32.xlu0 %v2766, 8
      %v2787 = vpop.permute.xlu0 %2786
      %2788 = vrot.lane.b32.xlu0 %v2767, 8
      %v2789 = vpop.permute.xlu0 %2788
      %2790 = vrot.lane.b32.xlu0 %v2768, 8
      %v2791 = vpop.permute.xlu0 %2790
      %2792 = vrot.lane.b32.xlu0 %v2769, 8
      %v2793 = vpop.permute.xlu0 %2792
      %2794 = vrot.lane.b32.xlu0 %v2770, 8
      %v2795 = vpop.permute.xlu0 %2794
      %2796 = vrot.lane.b32.xlu0 %v2771, 8
      %v2797 = vpop.permute.xlu0 %2796
      %2798 = vrot.lane.b32.xlu0 %v2772, 8
      %v2799 = vpop.permute.xlu0 %2798
      %2800 = vrot.lane.b32.xlu0 %v2773, 8
      %v2801 = vpop.permute.xlu0 %2800
      %2802 = vrot.lane.b32.xlu0 %v2774, 8
      %v2803 = vpop.permute.xlu0 %2802
      %2804 = vrot.lane.b32.xlu0 %v2775, 8
      %v2805 = vpop.permute.xlu0 %2804
      %2806 = vrot.lane.b32.xlu0 %v2776, 8
      %v2807 = vpop.permute.xlu0 %2806
      %2808 = vrot.lane.b32.xlu0 %v2777, 8
      %v2809 = vpop.permute.xlu0 %2808
      %v2826 = vunpack.c.l.b16 %v1369
      %v2827 = vunpack.c.l.b16 %v1370
      %v2828 = vunpack.c.l.b16 %v1371
      %v2829 = vunpack.c.l.b16 %v1372
      %v2830 = vunpack.c.l.b16 %v1373
      %v2831 = vunpack.c.l.b16 %v1374
      %v2832 = vunpack.c.l.b16 %v1375
      %v2833 = vunpack.c.l.b16 %v1376
      %v2834 = vunpack.c.l.b16 %v1377
      %v2835 = vunpack.c.l.b16 %v1378
      %v2836 = vunpack.c.l.b16 %v1379
      %v2837 = vunpack.c.l.b16 %v1380
      %v2838 = vunpack.c.l.b16 %v1381
      %v2839 = vunpack.c.l.b16 %v1382
      %v2840 = vunpack.c.l.b16 %v1383
      %v2841 = vunpack.c.l.b16 %v1384
      %v2842 = vunpack.c.l.b16 %v1385
      %v2843 = vunpack.c.l.b16 %v1386
      %v2844 = vunpack.c.l.b16 %v1387
      %v2845 = vunpack.c.l.b16 %v1388
      %v2846 = vunpack.c.l.b16 %v1389
      %v2847 = vunpack.c.l.b16 %v1390
      %v2848 = vunpack.c.l.b16 %v1391
      %v2849 = vunpack.c.l.b16 %v1392
      %v2850 = vunpack.c.l.b16 %v1393
      %v2851 = vunpack.c.l.b16 %v1394
      %v2852 = vunpack.c.l.b16 %v1395
      %v2853 = vunpack.c.l.b16 %v1396
      %v2854 = vunpack.c.l.b16 %v1397
      %v2855 = vunpack.c.l.b16 %v1398
      %v2856 = vunpack.c.l.b16 %v1399
      %v2857 = vunpack.c.l.b16 %v1400
      %v2858 = vpack.c.b16 %v2827, %v2826
      %v2859 = vpack.c.b16 %v2829, %v2828
      %v2860 = vpack.c.b16 %v2831, %v2830
      %v2861 = vpack.c.b16 %v2833, %v2832
      %v2862 = vpack.c.b16 %v2835, %v2834
      %v2863 = vpack.c.b16 %v2837, %v2836
      %v2864 = vpack.c.b16 %v2839, %v2838
      %v2865 = vpack.c.b16 %v2841, %v2840
      %v2866 = vpack.c.b16 %v2843, %v2842
      %v2867 = vpack.c.b16 %v2845, %v2844
      %v2868 = vpack.c.b16 %v2847, %v2846
      %v2869 = vpack.c.b16 %v2849, %v2848
      %v2870 = vpack.c.b16 %v2851, %v2850
      %v2871 = vpack.c.b16 %v2853, %v2852
      %v2872 = vpack.c.b16 %v2855, %v2854
      %v2873 = vpack.c.b16 %v2857, %v2856
      %2874 = vrot.lane.b32.xlu0 %v2858, 12
      %v2875 = vpop.permute.xlu0 %2874
      %2876 = vrot.lane.b32.xlu0 %v2859, 12
      %v2877 = vpop.permute.xlu0 %2876
      %2878 = vrot.lane.b32.xlu0 %v2860, 12
      %v2879 = vpop.permute.xlu0 %2878
      %2880 = vrot.lane.b32.xlu0 %v2861, 12
      %v2881 = vpop.permute.xlu0 %2880
      %2882 = vrot.lane.b32.xlu0 %v2862, 12
      %v2883 = vpop.permute.xlu0 %2882
      %2884 = vrot.lane.b32.xlu0 %v2863, 12
      %v2885 = vpop.permute.xlu0 %2884
      %2886 = vrot.lane.b32.xlu0 %v2864, 12
      %v2887 = vpop.permute.xlu0 %2886
      %2888 = vrot.lane.b32.xlu0 %v2865, 12
      %v2889 = vpop.permute.xlu0 %2888
      %2890 = vrot.lane.b32.xlu0 %v2866, 12
      %v2891 = vpop.permute.xlu0 %2890
      %2892 = vrot.lane.b32.xlu0 %v2867, 12
      %v2893 = vpop.permute.xlu0 %2892
      %2894 = vrot.lane.b32.xlu0 %v2868, 12
      %v2895 = vpop.permute.xlu0 %2894
      %2896 = vrot.lane.b32.xlu0 %v2869, 12
      %v2897 = vpop.permute.xlu0 %2896
      %2898 = vrot.lane.b32.xlu0 %v2870, 12
      %v2899 = vpop.permute.xlu0 %2898
      %2900 = vrot.lane.b32.xlu0 %v2871, 12
      %v2901 = vpop.permute.xlu0 %2900
      %2902 = vrot.lane.b32.xlu0 %v2872, 12
      %v2903 = vpop.permute.xlu0 %2902
      %2904 = vrot.lane.b32.xlu0 %v2873, 12
      %v2905 = vpop.permute.xlu0 %2904
      %v2906 = vunpack.c.l.b16 %v1430
      %v2907 = vunpack.c.l.b16 %v1440
      %v2908 = vunpack.c.l.b16 %v1454
      %v2909 = vunpack.c.l.b16 %v1464
      %v2910 = vunpack.c.l.b16 %v1478
      %v2911 = vunpack.c.l.b16 %v1488
      %v2912 = vunpack.c.l.b16 %v1502
      %v2913 = vunpack.c.l.b16 %v1512
      %v2914 = vunpack.c.l.b16 %v1526
      %v2915 = vunpack.c.l.b16 %v1536
      %v2916 = vunpack.c.l.b16 %v1550
      %v2917 = vunpack.c.l.b16 %v1560
      %v2918 = vunpack.c.l.b16 %v1574
      %v2919 = vunpack.c.l.b16 %v1584
      %v2920 = vunpack.c.l.b16 %v1598
      %v2921 = vunpack.c.l.b16 %v1608
      %v2922 = vunpack.c.l.b16 %v1622
      %v2923 = vunpack.c.l.b16 %v1632
      %v2924 = vunpack.c.l.b16 %v1646
      %v2925 = vunpack.c.l.b16 %v1656
      %v2926 = vunpack.c.l.b16 %v1670
      %v2927 = vunpack.c.l.b16 %v1680
      %v2928 = vunpack.c.l.b16 %v1694
      %v2929 = vunpack.c.l.b16 %v1704
      %v2930 = vunpack.c.l.b16 %v1718
      %v2931 = vunpack.c.l.b16 %v1728
      %v2932 = vunpack.c.l.b16 %v1742
      %v2933 = vunpack.c.l.b16 %v1752
      %v2934 = vunpack.c.l.b16 %v1766
      %v2935 = vunpack.c.l.b16 %v1776
      %v2936 = vunpack.c.l.b16 %v1790
      %v2937 = vunpack.c.l.b16 %v1800
      %v2938 = vpack.c.b16 %v2907, %v2906
      %v2939 = vpack.c.b16 %v2909, %v2908
      %v2940 = vpack.c.b16 %v2911, %v2910
      %v2941 = vpack.c.b16 %v2913, %v2912
      %v2942 = vpack.c.b16 %v2915, %v2914
      %v2943 = vpack.c.b16 %v2917, %v2916
      %v2944 = vpack.c.b16 %v2919, %v2918
      %v2945 = vpack.c.b16 %v2921, %v2920
      %v2946 = vpack.c.b16 %v2923, %v2922
      %v2947 = vpack.c.b16 %v2925, %v2924
      %v2948 = vpack.c.b16 %v2927, %v2926
      %v2949 = vpack.c.b16 %v2929, %v2928
      %v2950 = vpack.c.b16 %v2931, %v2930
      %v2951 = vpack.c.b16 %v2933, %v2932
      %v2952 = vpack.c.b16 %v2935, %v2934
      %v2953 = vpack.c.b16 %v2937, %v2936
      %2954 = vrot.lane.b32.xlu0 %v2938, 16
      %v2955 = vpop.permute.xlu0 %2954
      %2956 = vrot.lane.b32.xlu0 %v2939, 16
      %v2957 = vpop.permute.xlu0 %2956
      %2958 = vrot.lane.b32.xlu0 %v2940, 16
      %v2959 = vpop.permute.xlu0 %2958
      %2960 = vrot.lane.b32.xlu0 %v2941, 16
      %v2961 = vpop.permute.xlu0 %2960
      %2962 = vrot.lane.b32.xlu0 %v2942, 16
      %v2963 = vpop.permute.xlu0 %2962
      %2964 = vrot.lane.b32.xlu0 %v2943, 16
      %v2965 = vpop.permute.xlu0 %2964
      %2966 = vrot.lane.b32.xlu0 %v2944, 16
      %v2967 = vpop.permute.xlu0 %2966
      %2968 = vrot.lane.b32.xlu0 %v2945, 16
      %v2969 = vpop.permute.xlu0 %2968
      %2970 = vrot.lane.b32.xlu0 %v2946, 16
      %v2971 = vpop.permute.xlu0 %2970
      %2972 = vrot.lane.b32.xlu0 %v2947, 16
      %v2973 = vpop.permute.xlu0 %2972
      %2974 = vrot.lane.b32.xlu0 %v2948, 16
      %v2975 = vpop.permute.xlu0 %2974
      %2976 = vrot.lane.b32.xlu0 %v2949, 16
      %v2977 = vpop.permute.xlu0 %2976
      %2978 = vrot.lane.b32.xlu0 %v2950, 16
      %v2979 = vpop.permute.xlu0 %2978
      %2980 = vrot.lane.b32.xlu0 %v2951, 16
      %v2981 = vpop.permute.xlu0 %2980
      %2982 = vrot.lane.b32.xlu0 %v2952, 16
      %v2983 = vpop.permute.xlu0 %2982
      %2984 = vrot.lane.b32.xlu0 %v2953, 16
      %v2985 = vpop.permute.xlu0 %2984
      %v2986 = vunpack.c.l.b16 %v1868
      %v2987 = vunpack.c.l.b16 %v1871
      %v2988 = vunpack.c.l.b16 %v1875
      %v2989 = vunpack.c.l.b16 %v1878
      %v2990 = vunpack.c.l.b16 %v1882
      %v2991 = vunpack.c.l.b16 %v1885
      %v2992 = vunpack.c.l.b16 %v1889
      %v2993 = vunpack.c.l.b16 %v1892
      %v2994 = vunpack.c.l.b16 %v1896
      %v2995 = vunpack.c.l.b16 %v1899
      %v2996 = vunpack.c.l.b16 %v1903
      %v2997 = vunpack.c.l.b16 %v1906
      %v2998 = vunpack.c.l.b16 %v1910
      %v2999 = vunpack.c.l.b16 %v1913
      %v3000 = vunpack.c.l.b16 %v1917
      %v3001 = vunpack.c.l.b16 %v1920
      %v3002 = vunpack.c.l.b16 %v1924
      %v3003 = vunpack.c.l.b16 %v1927
      %v3004 = vunpack.c.l.b16 %v1931
      %v3005 = vunpack.c.l.b16 %v1934
      %v3006 = vunpack.c.l.b16 %v1938
      %v3007 = vunpack.c.l.b16 %v1941
      %v3008 = vunpack.c.l.b16 %v1945
      %v3009 = vunpack.c.l.b16 %v1948
      %v3010 = vunpack.c.l.b16 %v1952
      %v3011 = vunpack.c.l.b16 %v1955
      %v3012 = vunpack.c.l.b16 %v1959
      %v3013 = vunpack.c.l.b16 %v1962
      %v3014 = vunpack.c.l.b16 %v1966
      %v3015 = vunpack.c.l.b16 %v1969
      %v3016 = vunpack.c.l.b16 %v1973
      %v3017 = vunpack.c.l.b16 %v1976
      %v3018 = vpack.c.b16 %v2987, %v2986
      %v3019 = vpack.c.b16 %v2989, %v2988
      %v3020 = vpack.c.b16 %v2991, %v2990
      %v3021 = vpack.c.b16 %v2993, %v2992
      %v3022 = vpack.c.b16 %v2995, %v2994
      %v3023 = vpack.c.b16 %v2997, %v2996
      %v3024 = vpack.c.b16 %v2999, %v2998
      %v3025 = vpack.c.b16 %v3001, %v3000
      %v3026 = vpack.c.b16 %v3003, %v3002
      %v3027 = vpack.c.b16 %v3005, %v3004
      %v3028 = vpack.c.b16 %v3007, %v3006
      %v3029 = vpack.c.b16 %v3009, %v3008
      %v3030 = vpack.c.b16 %v3011, %v3010
      %v3031 = vpack.c.b16 %v3013, %v3012
      %v3032 = vpack.c.b16 %v3015, %v3014
      %v3033 = vpack.c.b16 %v3017, %v3016
      %3034 = vrot.lane.b32.xlu0 %v3018, 20
      %v3035 = vpop.permute.xlu0 %3034
      %3036 = vrot.lane.b32.xlu0 %v3019, 20
      %v3037 = vpop.permute.xlu0 %3036
      %3038 = vrot.lane.b32.xlu0 %v3020, 20
      %v3039 = vpop.permute.xlu0 %3038
      %3040 = vrot.lane.b32.xlu0 %v3021, 20
      %v3041 = vpop.permute.xlu0 %3040
      %3042 = vrot.lane.b32.xlu0 %v3022, 20
      %v3043 = vpop.permute.xlu0 %3042
      %3044 = vrot.lane.b32.xlu0 %v3023, 20
      %v3045 = vpop.permute.xlu0 %3044
      %3046 = vrot.lane.b32.xlu0 %v3024, 20
      %v3047 = vpop.permute.xlu0 %3046
      %3048 = vrot.lane.b32.xlu0 %v3025, 20
      %v3049 = vpop.permute.xlu0 %3048
      %3050 = vrot.lane.b32.xlu0 %v3026, 20
      %v3051 = vpop.permute.xlu0 %3050
      %3052 = vrot.lane.b32.xlu0 %v3027, 20
      %v3053 = vpop.permute.xlu0 %3052
      %3054 = vrot.lane.b32.xlu0 %v3028, 20
      %v3055 = vpop.permute.xlu0 %3054
      %3056 = vrot.lane.b32.xlu0 %v3029, 20
      %v3057 = vpop.permute.xlu0 %3056
      %3058 = vrot.lane.b32.xlu0 %v3030, 20
      %v3059 = vpop.permute.xlu0 %3058
      %3060 = vrot.lane.b32.xlu0 %v3031, 20
      %v3061 = vpop.permute.xlu0 %3060
      %3062 = vrot.lane.b32.xlu0 %v3032, 20
      %v3063 = vpop.permute.xlu0 %3062
      %3064 = vrot.lane.b32.xlu0 %v3033, 20
      %v3065 = vpop.permute.xlu0 %3064
      %v3082 = vunpack.c.l.b16 %v1978
      %v3083 = vunpack.c.l.b16 %v1979
      %v3084 = vunpack.c.l.b16 %v1980
      %v3085 = vunpack.c.l.b16 %v1981
      %v3086 = vunpack.c.l.b16 %v1982
      %v3087 = vunpack.c.l.b16 %v1983
      %v3088 = vunpack.c.l.b16 %v1984
      %v3089 = vunpack.c.l.b16 %v1985
      %v3090 = vunpack.c.l.b16 %v1986
      %v3091 = vunpack.c.l.b16 %v1987
      %v3092 = vunpack.c.l.b16 %v1988
      %v3093 = vunpack.c.l.b16 %v1989
      %v3094 = vunpack.c.l.b16 %v1990
      %v3095 = vunpack.c.l.b16 %v1991
      %v3096 = vunpack.c.l.b16 %v1992
      %v3097 = vunpack.c.l.b16 %v1993
      %v3098 = vunpack.c.l.b16 %v1994
      %v3099 = vunpack.c.l.b16 %v1995
      %v3100 = vunpack.c.l.b16 %v1996
      %v3101 = vunpack.c.l.b16 %v1997
      %v3102 = vunpack.c.l.b16 %v1998
      %v3103 = vunpack.c.l.b16 %v1999
      %v3104 = vunpack.c.l.b16 %v2000
      %v3105 = vunpack.c.l.b16 %v2001
      %v3106 = vunpack.c.l.b16 %v2002
      %v3107 = vunpack.c.l.b16 %v2003
      %v3108 = vunpack.c.l.b16 %v2004
      %v3109 = vunpack.c.l.b16 %v2005
      %v3110 = vunpack.c.l.b16 %v2006
      %v3111 = vunpack.c.l.b16 %v2007
      %v3112 = vunpack.c.l.b16 %v2008
      %v3113 = vunpack.c.l.b16 %v2009
      %v3114 = vpack.c.b16 %v3083, %v3082
      %v3115 = vpack.c.b16 %v3085, %v3084
      %v3116 = vpack.c.b16 %v3087, %v3086
      %v3117 = vpack.c.b16 %v3089, %v3088
      %v3118 = vpack.c.b16 %v3091, %v3090
      %v3119 = vpack.c.b16 %v3093, %v3092
      %v3120 = vpack.c.b16 %v3095, %v3094
      %v3121 = vpack.c.b16 %v3097, %v3096
      %v3122 = vpack.c.b16 %v3099, %v3098
      %v3123 = vpack.c.b16 %v3101, %v3100
      %v3124 = vpack.c.b16 %v3103, %v3102
      %v3125 = vpack.c.b16 %v3105, %v3104
      %v3126 = vpack.c.b16 %v3107, %v3106
      %v3127 = vpack.c.b16 %v3109, %v3108
      %v3128 = vpack.c.b16 %v3111, %v3110
      %v3129 = vpack.c.b16 %v3113, %v3112
      %3130 = vrot.lane.b32.xlu0 %v3114, 24
      %v3131 = vpop.permute.xlu0 %3130
      %3132 = vrot.lane.b32.xlu0 %v3115, 24
      %v3133 = vpop.permute.xlu0 %3132
      %3134 = vrot.lane.b32.xlu0 %v3116, 24
      %v3135 = vpop.permute.xlu0 %3134
      %3136 = vrot.lane.b32.xlu0 %v3117, 24
      %v3137 = vpop.permute.xlu0 %3136
      %3138 = vrot.lane.b32.xlu0 %v3118, 24
      %v3139 = vpop.permute.xlu0 %3138
      %3140 = vrot.lane.b32.xlu0 %v3119, 24
      %v3141 = vpop.permute.xlu0 %3140
      %3142 = vrot.lane.b32.xlu0 %v3120, 24
      %v3143 = vpop.permute.xlu0 %3142
      %3144 = vrot.lane.b32.xlu0 %v3121, 24
      %v3145 = vpop.permute.xlu0 %3144
      %3146 = vrot.lane.b32.xlu0 %v3122, 24
      %v3147 = vpop.permute.xlu0 %3146
      %3148 = vrot.lane.b32.xlu0 %v3123, 24
      %v3149 = vpop.permute.xlu0 %3148
      %3150 = vrot.lane.b32.xlu0 %v3124, 24
      %v3151 = vpop.permute.xlu0 %3150
      %3152 = vrot.lane.b32.xlu0 %v3125, 24
      %v3153 = vpop.permute.xlu0 %3152
      %3154 = vrot.lane.b32.xlu0 %v3126, 24
      %v3155 = vpop.permute.xlu0 %3154
      %3156 = vrot.lane.b32.xlu0 %v3127, 24
      %v3157 = vpop.permute.xlu0 %3156
      %3158 = vrot.lane.b32.xlu0 %v3128, 24
      %v3159 = vpop.permute.xlu0 %3158
      %3160 = vrot.lane.b32.xlu0 %v3129, 24
      %v3161 = vpop.permute.xlu0 %3160
      %v3162 = vunpack.c.l.b16 %v2039
      %v3163 = vunpack.c.l.b16 %v2049
      %v3164 = vunpack.c.l.b16 %v2063
      %v3165 = vunpack.c.l.b16 %v2073
      %v3166 = vunpack.c.l.b16 %v2087
      %v3167 = vunpack.c.l.b16 %v2097
      %v3168 = vunpack.c.l.b16 %v2111
      %v3169 = vunpack.c.l.b16 %v2121
      %v3170 = vunpack.c.l.b16 %v2135
      %v3171 = vunpack.c.l.b16 %v2145
      %v3172 = vunpack.c.l.b16 %v2159
      %v3173 = vunpack.c.l.b16 %v2169
      %v3174 = vunpack.c.l.b16 %v2183
      %v3175 = vunpack.c.l.b16 %v2193
      %v3176 = vunpack.c.l.b16 %v2207
      %v3177 = vunpack.c.l.b16 %v2217
      %v3178 = vunpack.c.l.b16 %v2231
      %v3179 = vunpack.c.l.b16 %v2241
      %v3180 = vunpack.c.l.b16 %v2255
      %v3181 = vunpack.c.l.b16 %v2265
      %v3182 = vunpack.c.l.b16 %v2279
      %v3183 = vunpack.c.l.b16 %v2289
      %v3184 = vunpack.c.l.b16 %v2303
      %v3185 = vunpack.c.l.b16 %v2313
      %v3186 = vunpack.c.l.b16 %v2327
      %v3187 = vunpack.c.l.b16 %v2337
      %v3188 = vunpack.c.l.b16 %v2351
      %v3189 = vunpack.c.l.b16 %v2361
      %v3190 = vunpack.c.l.b16 %v2375
      %v3191 = vunpack.c.l.b16 %v2385
      %v3192 = vunpack.c.l.b16 %v2399
      %v3193 = vunpack.c.l.b16 %v2409
      %v3194 = vpack.c.b16 %v3163, %v3162
      %v3195 = vpack.c.b16 %v3165, %v3164
      %v3196 = vpack.c.b16 %v3167, %v3166
      %v3197 = vpack.c.b16 %v3169, %v3168
      %v3198 = vpack.c.b16 %v3171, %v3170
      %v3199 = vpack.c.b16 %v3173, %v3172
      %v3200 = vpack.c.b16 %v3175, %v3174
      %v3201 = vpack.c.b16 %v3177, %v3176
      %v3202 = vpack.c.b16 %v3179, %v3178
      %v3203 = vpack.c.b16 %v3181, %v3180
      %v3204 = vpack.c.b16 %v3183, %v3182
      %v3205 = vpack.c.b16 %v3185, %v3184
      %v3206 = vpack.c.b16 %v3187, %v3186
      %v3207 = vpack.c.b16 %v3189, %v3188
      %v3208 = vpack.c.b16 %v3191, %v3190
      %v3209 = vpack.c.b16 %v3193, %v3192
      %3210 = vrot.lane.b32.xlu0 %v3194, 28
      %v3211 = vpop.permute.xlu0 %3210
      %3212 = vrot.lane.b32.xlu0 %v3195, 28
      %v3213 = vpop.permute.xlu0 %3212
      %3214 = vrot.lane.b32.xlu0 %v3196, 28
      %v3215 = vpop.permute.xlu0 %3214
      %3216 = vrot.lane.b32.xlu0 %v3197, 28
      %v3217 = vpop.permute.xlu0 %3216
      %3218 = vrot.lane.b32.xlu0 %v3198, 28
      %v3219 = vpop.permute.xlu0 %3218
      %3220 = vrot.lane.b32.xlu0 %v3199, 28
      %v3221 = vpop.permute.xlu0 %3220
      %3222 = vrot.lane.b32.xlu0 %v3200, 28
      %v3223 = vpop.permute.xlu0 %3222
      %3224 = vrot.lane.b32.xlu0 %v3201, 28
      %v3225 = vpop.permute.xlu0 %3224
      %3226 = vrot.lane.b32.xlu0 %v3202, 28
      %v3227 = vpop.permute.xlu0 %3226
      %3228 = vrot.lane.b32.xlu0 %v3203, 28
      %v3229 = vpop.permute.xlu0 %3228
      %3230 = vrot.lane.b32.xlu0 %v3204, 28
      %v3231 = vpop.permute.xlu0 %3230
      %3232 = vrot.lane.b32.xlu0 %v3205, 28
      %v3233 = vpop.permute.xlu0 %3232
      %3234 = vrot.lane.b32.xlu0 %v3206, 28
      %v3235 = vpop.permute.xlu0 %3234
      %3236 = vrot.lane.b32.xlu0 %v3207, 28
      %v3237 = vpop.permute.xlu0 %3236
      %3238 = vrot.lane.b32.xlu0 %v3208, 28
      %v3239 = vpop.permute.xlu0 %3238
      %3240 = vrot.lane.b32.xlu0 %v3209, 28
      %v3241 = vpop.permute.xlu0 %3240
      %v3242 = vunpack.c.l.b16 %v2477
      %v3243 = vunpack.c.l.b16 %v2480
      %v3244 = vunpack.c.l.b16 %v2484
      %v3245 = vunpack.c.l.b16 %v2487
      %v3246 = vunpack.c.l.b16 %v2491
      %v3247 = vunpack.c.l.b16 %v2494
      %v3248 = vunpack.c.l.b16 %v2498
      %v3249 = vunpack.c.l.b16 %v2501
      %v3250 = vunpack.c.l.b16 %v2505
      %v3251 = vunpack.c.l.b16 %v2508
      %v3252 = vunpack.c.l.b16 %v2512
      %v3253 = vunpack.c.l.b16 %v2515
      %v3254 = vunpack.c.l.b16 %v2519
      %v3255 = vunpack.c.l.b16 %v2522
      %v3256 = vunpack.c.l.b16 %v2526
      %v3257 = vunpack.c.l.b16 %v2529
      %v3258 = vunpack.c.l.b16 %v2533
      %v3259 = vunpack.c.l.b16 %v2536
      %v3260 = vunpack.c.l.b16 %v2540
      %v3261 = vunpack.c.l.b16 %v2543
      %v3262 = vunpack.c.l.b16 %v2547
      %v3263 = vunpack.c.l.b16 %v2550
      %v3264 = vunpack.c.l.b16 %v2554
      %v3265 = vunpack.c.l.b16 %v2557
      %v3266 = vunpack.c.l.b16 %v2561
      %v3267 = vunpack.c.l.b16 %v2564
      %v3268 = vunpack.c.l.b16 %v2568
      %v3269 = vunpack.c.l.b16 %v2571
      %v3270 = vunpack.c.l.b16 %v2575
      %v3271 = vunpack.c.l.b16 %v2578
      %v3272 = vunpack.c.l.b16 %v2582
      %v3273 = vunpack.c.l.b16 %v2585
      %v3274 = vpack.c.b16 %v3243, %v3242
      %v3275 = vpack.c.b16 %v3245, %v3244
      %v3276 = vpack.c.b16 %v3247, %v3246
      %v3277 = vpack.c.b16 %v3249, %v3248
      %v3278 = vpack.c.b16 %v3251, %v3250
      %v3279 = vpack.c.b16 %v3253, %v3252
      %v3280 = vpack.c.b16 %v3255, %v3254
      %v3281 = vpack.c.b16 %v3257, %v3256
      %v3282 = vpack.c.b16 %v3259, %v3258
      %v3283 = vpack.c.b16 %v3261, %v3260
      %v3284 = vpack.c.b16 %v3263, %v3262
      %v3285 = vpack.c.b16 %v3265, %v3264
      %v3286 = vpack.c.b16 %v3267, %v3266
      %v3287 = vpack.c.b16 %v3269, %v3268
      %v3288 = vpack.c.b16 %v3271, %v3270
      %v3289 = vpack.c.b16 %v3273, %v3272
      %3290 = vrot.lane.b32.xlu0 %v3274, 32
      %v3291 = vpop.permute.xlu0 %3290
      %3292 = vrot.lane.b32.xlu0 %v3275, 32
      %v3293 = vpop.permute.xlu0 %3292
      %3294 = vrot.lane.b32.xlu0 %v3276, 32
      %v3295 = vpop.permute.xlu0 %3294
      %3296 = vrot.lane.b32.xlu0 %v3277, 32
      %v3297 = vpop.permute.xlu0 %3296
      %3298 = vrot.lane.b32.xlu0 %v3278, 32
      %v3299 = vpop.permute.xlu0 %3298
      %3300 = vrot.lane.b32.xlu0 %v3279, 32
      %v3301 = vpop.permute.xlu0 %3300
      %3302 = vrot.lane.b32.xlu0 %v3280, 32
      %v3303 = vpop.permute.xlu0 %3302
      %3304 = vrot.lane.b32.xlu0 %v3281, 32
      %v3305 = vpop.permute.xlu0 %3304
      %3306 = vrot.lane.b32.xlu0 %v3282, 32
      %v3307 = vpop.permute.xlu0 %3306
      %3308 = vrot.lane.b32.xlu0 %v3283, 32
      %v3309 = vpop.permute.xlu0 %3308
      %3310 = vrot.lane.b32.xlu0 %v3284, 32
      %v3311 = vpop.permute.xlu0 %3310
      %3312 = vrot.lane.b32.xlu0 %v3285, 32
      %v3313 = vpop.permute.xlu0 %3312
      %3314 = vrot.lane.b32.xlu0 %v3286, 32
      %v3315 = vpop.permute.xlu0 %3314
      %3316 = vrot.lane.b32.xlu0 %v3287, 32
      %v3317 = vpop.permute.xlu0 %3316
      %3318 = vrot.lane.b32.xlu0 %v3288, 32
      %v3319 = vpop.permute.xlu0 %3318
      %3320 = vrot.lane.b32.xlu0 %v3289, 32
      %v3321 = vpop.permute.xlu0 %3320
      %vm3322 = vcmask 31744
      %v3325 = vsel %vm3322, %v2634, %v2699
      %v3328 = vsel %vm3322, %v2635, %v2701
      %v3331 = vsel %vm3322, %v2636, %v2703
      %v3334 = vsel %vm3322, %v2637, %v2705
      %v3337 = vsel %vm3322, %v2638, %v2707
      %v3340 = vsel %vm3322, %v2639, %v2709
      %v3343 = vsel %vm3322, %v2640, %v2711
      %v3346 = vsel %vm3322, %v2641, %v2713
      %v3349 = vsel %vm3322, %v2642, %v2715
      %v3352 = vsel %vm3322, %v2643, %v2717
      %v3355 = vsel %vm3322, %v2644, %v2719
      %v3358 = vsel %vm3322, %v2645, %v2721
      %v3361 = vsel %vm3322, %v2646, %v2723
      %v3364 = vsel %vm3322, %v2647, %v2725
      %v3367 = vsel %vm3322, %v2648, %v2727
      %v3370 = vsel %vm3322, %v2649, %v2729
      %vm3371 = vcmask 64512
      %v3373 = vsel %vm3371, %v3325, %v2779
      %v3375 = vsel %vm3371, %v3328, %v2781
      %v3377 = vsel %vm3371, %v3331, %v2783
      %v3379 = vsel %vm3371, %v3334, %v2785
      %v3381 = vsel %vm3371, %v3337, %v2787
      %v3383 = vsel %vm3371, %v3340, %v2789
      %v3385 = vsel %vm3371, %v3343, %v2791
      %v3387 = vsel %vm3371, %v3346, %v2793
      %v3389 = vsel %vm3371, %v3349, %v2795
      %v3391 = vsel %vm3371, %v3352, %v2797
      %v3393 = vsel %vm3371, %v3355, %v2799
      %v3395 = vsel %vm3371, %v3358, %v2801
      %v3397 = vsel %vm3371, %v3361, %v2803
      %v3399 = vsel %vm3371, %v3364, %v2805
      %v3401 = vsel %vm3371, %v3367, %v2807
      %v3403 = vsel %vm3371, %v3370, %v2809
      %vm3404 = vcmask 97280
      %v3406 = vsel %vm3404, %v3373, %v2875
      %v3408 = vsel %vm3404, %v3375, %v2877
      %v3410 = vsel %vm3404, %v3377, %v2879
      %v3412 = vsel %vm3404, %v3379, %v2881
      %v3414 = vsel %vm3404, %v3381, %v2883
      %v3416 = vsel %vm3404, %v3383, %v2885
      %v3418 = vsel %vm3404, %v3385, %v2887
      %v3420 = vsel %vm3404, %v3387, %v2889
      %v3422 = vsel %vm3404, %v3389, %v2891
      %v3424 = vsel %vm3404, %v3391, %v2893
      %v3426 = vsel %vm3404, %v3393, %v2895
      %v3428 = vsel %vm3404, %v3395, %v2897
      %v3430 = vsel %vm3404, %v3397, %v2899
      %v3432 = vsel %vm3404, %v3399, %v2901
      %v3434 = vsel %vm3404, %v3401, %v2903
      %v3436 = vsel %vm3404, %v3403, %v2905
      %vm3437 = vcmask 130048
      %v3439 = vsel %vm3437, %v3406, %v2955
      %v3441 = vsel %vm3437, %v3408, %v2957
      %v3443 = vsel %vm3437, %v3410, %v2959
      %v3445 = vsel %vm3437, %v3412, %v2961
      %v3447 = vsel %vm3437, %v3414, %v2963
      %v3449 = vsel %vm3437, %v3416, %v2965
      %v3451 = vsel %vm3437, %v3418, %v2967
      %v3453 = vsel %vm3437, %v3420, %v2969
      %v3455 = vsel %vm3437, %v3422, %v2971
      %v3457 = vsel %vm3437, %v3424, %v2973
      %v3459 = vsel %vm3437, %v3426, %v2975
      %v3461 = vsel %vm3437, %v3428, %v2977
      %v3463 = vsel %vm3437, %v3430, %v2979
      %v3465 = vsel %vm3437, %v3432, %v2981
      %v3467 = vsel %vm3437, %v3434, %v2983
      %v3469 = vsel %vm3437, %v3436, %v2985
      %vm3470 = vcmask 162816
      %v3472 = vsel %vm3470, %v3439, %v3035
      %v3474 = vsel %vm3470, %v3441, %v3037
      %v3476 = vsel %vm3470, %v3443, %v3039
      %v3478 = vsel %vm3470, %v3445, %v3041
      %v3480 = vsel %vm3470, %v3447, %v3043
      %v3482 = vsel %vm3470, %v3449, %v3045
      %v3484 = vsel %vm3470, %v3451, %v3047
      %v3486 = vsel %vm3470, %v3453, %v3049
      %v3488 = vsel %vm3470, %v3455, %v3051
      %v3490 = vsel %vm3470, %v3457, %v3053
      %v3492 = vsel %vm3470, %v3459, %v3055
      %v3494 = vsel %vm3470, %v3461, %v3057
      %v3496 = vsel %vm3470, %v3463, %v3059
      %v3498 = vsel %vm3470, %v3465, %v3061
      %v3500 = vsel %vm3470, %v3467, %v3063
      %v3502 = vsel %vm3470, %v3469, %v3065
      %vm3503 = vcmask 195584
      %v3505 = vsel %vm3503, %v3472, %v3131
      %v3507 = vsel %vm3503, %v3474, %v3133
      %v3509 = vsel %vm3503, %v3476, %v3135
      %v3511 = vsel %vm3503, %v3478, %v3137
      %v3513 = vsel %vm3503, %v3480, %v3139
      %v3515 = vsel %vm3503, %v3482, %v3141
      %v3517 = vsel %vm3503, %v3484, %v3143
      %v3519 = vsel %vm3503, %v3486, %v3145
      %v3521 = vsel %vm3503, %v3488, %v3147
      %v3523 = vsel %vm3503, %v3490, %v3149
      %v3525 = vsel %vm3503, %v3492, %v3151
      %v3527 = vsel %vm3503, %v3494, %v3153
      %v3529 = vsel %vm3503, %v3496, %v3155
      %v3531 = vsel %vm3503, %v3498, %v3157
      %v3533 = vsel %vm3503, %v3500, %v3159
      %v3535 = vsel %vm3503, %v3502, %v3161
      %vm3536 = vcmask 228352
      %v3538 = vsel %vm3536, %v3505, %v3211
      %v3540 = vsel %vm3536, %v3507, %v3213
      %v3542 = vsel %vm3536, %v3509, %v3215
      %v3544 = vsel %vm3536, %v3511, %v3217
      %v3546 = vsel %vm3536, %v3513, %v3219
      %v3548 = vsel %vm3536, %v3515, %v3221
      %v3550 = vsel %vm3536, %v3517, %v3223
      %v3552 = vsel %vm3536, %v3519, %v3225
      %v3554 = vsel %vm3536, %v3521, %v3227
      %v3556 = vsel %vm3536, %v3523, %v3229
      %v3558 = vsel %vm3536, %v3525, %v3231
      %v3560 = vsel %vm3536, %v3527, %v3233
      %v3562 = vsel %vm3536, %v3529, %v3235
      %v3564 = vsel %vm3536, %v3531, %v3237
      %v3566 = vsel %vm3536, %v3533, %v3239
      %v3568 = vsel %vm3536, %v3535, %v3241
      %vm3569 = vcmask 261120
      %v3571 = vsel %vm3569, %v3538, %v3291
      %v3573 = vsel %vm3569, %v3540, %v3293
      %v3575 = vsel %vm3569, %v3542, %v3295
      %v3577 = vsel %vm3569, %v3544, %v3297
      %v3579 = vsel %vm3569, %v3546, %v3299
      %v3581 = vsel %vm3569, %v3548, %v3301
      %v3583 = vsel %vm3569, %v3550, %v3303
      %v3585 = vsel %vm3569, %v3552, %v3305
      %v3587 = vsel %vm3569, %v3554, %v3307
      %v3589 = vsel %vm3569, %v3556, %v3309
      %v3591 = vsel %vm3569, %v3558, %v3311
      %v3593 = vsel %vm3569, %v3560, %v3313
      %v3595 = vsel %vm3569, %v3562, %v3315
      %v3597 = vsel %vm3569, %v3564, %v3317
      %v3599 = vsel %vm3569, %v3566, %v3319
      %v3601 = vsel %vm3569, %v3568, %v3321
      %v3602 = vld [vmem:[%s1] sm:$0xf]
      %v3603 = vld [vmem:[%s1 + $0x4] sm:$0xf]
      %v3604 = vld [vmem:[%s1 + $0x8] sm:$0xf]
      %v3605 = vld [vmem:[%s1 + $0xc] sm:$0xf]
      %v3606 = vld [vmem:[%s1 + $0x10] sm:$0x3]
      %v3607 = vld [vmem:[%s2] sm:$0x1]
      %v3609 = vperm.slane %v3607, 0
      %v3616 = vunpack.c.l.b16 %v3602
      %v3617 = vunpack.c.l.b16 %v3603
      %v3618 = vunpack.c.l.b16 %v3604
      %v3619 = vunpack.c.l.b16 %v3605
      %v3620 = vunpack.c.l.b16 %v3606
      %v3621 = vpack.c.b16 %v3617, %v3616
      %v3622 = vpack.c.b16 %v3619, %v3618
      %v3623 = vpack.c.b16 %v3620, %v3620
      %vm3626 = vcmask 293888
      %v3627 = vsel %vm3626, %v3571, 0
      %v3629 = vsel %vm3626, %v3573, 0
      %v3631 = vsel %vm3626, %v3575, 0
      %v3633 = vsel %vm3626, %v3577, 0
      %v3635 = vsel %vm3626, %v3579, 0
      %v3637 = vsel %vm3626, %v3581, 0
      %v3639 = vsel %vm3626, %v3583, 0
      %v3641 = vsel %vm3626, %v3585, 0
      %v3643 = vsel %vm3626, %v3587, 0
      %v3645 = vsel %vm3626, %v3589, 0
      %v3647 = vsel %vm3626, %v3591, 0
      %v3649 = vsel %vm3626, %v3593, 0
      %v3651 = vsel %vm3626, %v3595, 0
      %v3653 = vsel %vm3626, %v3597, 0
      %v3655 = vsel %vm3626, %v3599, 0
      %v3657 = vsel %vm3626, %v3601, 0
      %vm3659 = vcmask 1041408
      %v3661 = vsel %vm3659, %v3623, 0
      %3663 = vmatpush.bf16.msra.mxu0 0
      %3664 = vmatpush.bf16.msra.mxu0 0
      %3665 = vmatpush.bf16.msra.mxu0 0
      %3666 = vmatpush.bf16.msra.mxu0 0
      %3667 = vmatpush.bf16.msra.mxu0 0
      %3668 = vmatpush.bf16.msra.mxu0 %v3661
      %3669 = vmatpush.bf16.msra.mxu0 %v3622
      %3670 = vmatpush.bf16.msra.mxu0 %v3621
      %3671 = vmatmul.bf16.gmra.mxu0 %v3627
      %v3672 = vpop.f32.mrf.mxu0
      %v3673 = vadd.f32 %v3609, %v3672
      %v3674 = vpop.f32.mrf.mxu0
      %v3675 = vadd.f32 %v3609, %v3674
      %3676 = vmatmul.bf16.gmra.mxu0 %v3629
      %v3677 = vpop.f32.mrf.mxu0
      %v3678 = vadd.f32 %v3609, %v3677
      %v3679 = vpop.f32.mrf.mxu0
      %v3680 = vadd.f32 %v3609, %v3679
      %3681 = vmatmul.bf16.gmra.mxu0 %v3631
      %v3682 = vpop.f32.mrf.mxu0
      %v3683 = vadd.f32 %v3609, %v3682
      %v3684 = vpop.f32.mrf.mxu0
      %v3685 = vadd.f32 %v3609, %v3684
      %3686 = vmatmul.bf16.gmra.mxu0 %v3633
      %v3687 = vpop.f32.mrf.mxu0
      %v3688 = vadd.f32 %v3609, %v3687
      %v3689 = vpop.f32.mrf.mxu0
      %v3690 = vadd.f32 %v3609, %v3689
      %3691 = vmatmul.bf16.gmra.mxu0 %v3635
      %v3692 = vpop.f32.mrf.mxu0
      %v3693 = vadd.f32 %v3609, %v3692
      %v3694 = vpop.f32.mrf.mxu0
      %v3695 = vadd.f32 %v3609, %v3694
      %3696 = vmatmul.bf16.gmra.mxu0 %v3637
      %v3697 = vpop.f32.mrf.mxu0
      %v3698 = vadd.f32 %v3609, %v3697
      %v3699 = vpop.f32.mrf.mxu0
      %v3700 = vadd.f32 %v3609, %v3699
      %3701 = vmatmul.bf16.gmra.mxu0 %v3639
      %v3702 = vpop.f32.mrf.mxu0
      %v3703 = vadd.f32 %v3609, %v3702
      %v3704 = vpop.f32.mrf.mxu0
      %v3705 = vadd.f32 %v3609, %v3704
      %3706 = vmatmul.bf16.gmra.mxu0 %v3641
      %v3707 = vpop.f32.mrf.mxu0
      %v3708 = vadd.f32 %v3609, %v3707
      %v3709 = vpop.f32.mrf.mxu0
      %v3710 = vadd.f32 %v3609, %v3709
      %3711 = vmatmul.bf16.gmra.mxu0 %v3643
      %v3712 = vpop.f32.mrf.mxu0
      %v3713 = vadd.f32 %v3609, %v3712
      %v3714 = vpop.f32.mrf.mxu0
      %v3715 = vadd.f32 %v3609, %v3714
      %3716 = vmatmul.bf16.gmra.mxu0 %v3645
      %v3717 = vpop.f32.mrf.mxu0
      %v3718 = vadd.f32 %v3609, %v3717
      %v3719 = vpop.f32.mrf.mxu0
      %v3720 = vadd.f32 %v3609, %v3719
      %3721 = vmatmul.bf16.gmra.mxu0 %v3647
      %v3722 = vpop.f32.mrf.mxu0
      %v3723 = vadd.f32 %v3609, %v3722
      %v3724 = vpop.f32.mrf.mxu0
      %v3725 = vadd.f32 %v3609, %v3724
      %3726 = vmatmul.bf16.gmra.mxu0 %v3649
      %v3727 = vpop.f32.mrf.mxu0
      %v3728 = vadd.f32 %v3609, %v3727
      %v3729 = vpop.f32.mrf.mxu0
      %v3730 = vadd.f32 %v3609, %v3729
      %3731 = vmatmul.bf16.gmra.mxu0 %v3651
      %v3732 = vpop.f32.mrf.mxu0
      %v3733 = vadd.f32 %v3609, %v3732
      %v3734 = vpop.f32.mrf.mxu0
      %v3735 = vadd.f32 %v3609, %v3734
      %3736 = vmatmul.bf16.gmra.mxu0 %v3653
      %v3737 = vpop.f32.mrf.mxu0
      %v3738 = vadd.f32 %v3609, %v3737
      %v3739 = vpop.f32.mrf.mxu0
      %v3740 = vadd.f32 %v3609, %v3739
      %3741 = vmatmul.bf16.gmra.mxu0 %v3655
      %v3742 = vpop.f32.mrf.mxu0
      %v3743 = vadd.f32 %v3609, %v3742
      %v3744 = vpop.f32.mrf.mxu0
      %v3745 = vadd.f32 %v3609, %v3744
      %3746 = vmatmul.bf16.gmra.mxu0 %v3657
      %v3747 = vpop.f32.mrf.mxu0
      %v3748 = vadd.f32 %v3609, %v3747
      %v3749 = vpop.f32.mrf.mxu0
      %v3750 = vadd.f32 %v3609, %v3749
      %3751 = vdwg.mxu0
      %v3752 = vmax.f32 %v3673, 0.0
      %v3753 = vmax.f32 %v3675, 0.0
      %v3754 = vmax.f32 %v3678, 0.0
      %v3755 = vmax.f32 %v3680, 0.0
      %v3756 = vmax.f32 %v3683, 0.0
      %v3757 = vmax.f32 %v3685, 0.0
      %v3758 = vmax.f32 %v3688, 0.0
      %v3759 = vmax.f32 %v3690, 0.0
      %v3760 = vmax.f32 %v3693, 0.0
      %v3761 = vmax.f32 %v3695, 0.0
      %v3762 = vmax.f32 %v3698, 0.0
      %v3763 = vmax.f32 %v3700, 0.0
      %v3764 = vmax.f32 %v3703, 0.0
      %v3765 = vmax.f32 %v3705, 0.0
      %v3766 = vmax.f32 %v3708, 0.0
      %v3767 = vmax.f32 %v3710, 0.0
      %v3768 = vmax.f32 %v3713, 0.0
      %v3769 = vmax.f32 %v3715, 0.0
      %v3770 = vmax.f32 %v3718, 0.0
      %v3771 = vmax.f32 %v3720, 0.0
      %v3772 = vmax.f32 %v3723, 0.0
      %v3773 = vmax.f32 %v3725, 0.0
      %v3774 = vmax.f32 %v3728, 0.0
      %v3775 = vmax.f32 %v3730, 0.0
      %v3776 = vmax.f32 %v3733, 0.0
      %v3777 = vmax.f32 %v3735, 0.0
      %v3778 = vmax.f32 %v3738, 0.0
      %v3779 = vmax.f32 %v3740, 0.0
      %v3780 = vmax.f32 %v3743, 0.0
      %v3781 = vmax.f32 %v3745, 0.0
      %v3782 = vmax.f32 %v3748, 0.0
      %v3783 = vmax.f32 %v3750, 0.0
      %v3784 = vpack.c.bf16 %v3752, %v3752
      %v3785 = vpack.c.bf16 %v3753, %v3753
      %v3786 = vpack.c.bf16 %v3754, %v3754
      %v3787 = vpack.c.bf16 %v3755, %v3755
      %v3788 = vpack.c.bf16 %v3756, %v3756
      %v3789 = vpack.c.bf16 %v3757, %v3757
      %v3790 = vpack.c.bf16 %v3758, %v3758
      %v3791 = vpack.c.bf16 %v3759, %v3759
      %v3792 = vpack.c.bf16 %v3760, %v3760
      %v3793 = vpack.c.bf16 %v3761, %v3761
      %v3794 = vpack.c.bf16 %v3762, %v3762
      %v3795 = vpack.c.bf16 %v3763, %v3763
      %v3796 = vpack.c.bf16 %v3764, %v3764
      %v3797 = vpack.c.bf16 %v3765, %v3765
      %v3798 = vpack.c.bf16 %v3766, %v3766
      %v3799 = vpack.c.bf16 %v3767, %v3767
      %v3800 = vpack.c.bf16 %v3768, %v3768
      %v3801 = vpack.c.bf16 %v3769, %v3769
      %v3802 = vpack.c.bf16 %v3770, %v3770
      %v3803 = vpack.c.bf16 %v3771, %v3771
      %v3804 = vpack.c.bf16 %v3772, %v3772
      %v3805 = vpack.c.bf16 %v3773, %v3773
      %v3806 = vpack.c.bf16 %v3774, %v3774
      %v3807 = vpack.c.bf16 %v3775, %v3775
      %v3808 = vpack.c.bf16 %v3776, %v3776
      %v3809 = vpack.c.bf16 %v3777, %v3777
      %v3810 = vpack.c.bf16 %v3778, %v3778
      %v3811 = vpack.c.bf16 %v3779, %v3779
      %v3812 = vpack.c.bf16 %v3780, %v3780
      %v3813 = vpack.c.bf16 %v3781, %v3781
      %v3814 = vpack.c.bf16 %v3782, %v3782
      %v3815 = vpack.c.bf16 %v3783, %v3783
      %3816 = vst.msk [vmem:[#allocation3] sm:$0xf] %vm258, 0
      %3817 = vst.msk [vmem:[#allocation3 + $0x4] sm:$0xf] %vm258, 0
      %3818 = vst.msk [vmem:[#allocation3 + $0x8] sm:$0x1] %vm261, 0
      %3819 = vst.msk [vmem:[#allocation3 + $0xc] sm:$0xf] %vm258, 0
      %3820 = vst.msk [vmem:[#allocation3 + $0x10] sm:$0xf] %vm258, 0
      %3821 = vst.msk [vmem:[#allocation3 + $0x14] sm:$0x1] %vm261, 0
      %3822 = vst.msk [vmem:[#allocation3 + $0x18] sm:$0xf] %vm258, 0
      %3823 = vst.msk [vmem:[#allocation3 + $0x1c] sm:$0xf] %vm258, 0
      %3824 = vst.msk [vmem:[#allocation3 + $0x20] sm:$0x1] %vm261, 0
      %3825 = vst.msk [vmem:[#allocation3 + $0x24] sm:$0xf] %vm258, 0
      %3826 = vst.msk [vmem:[#allocation3 + $0x28] sm:$0xf] %vm258, 0
      %3827 = vst.msk [vmem:[#allocation3 + $0x2c] sm:$0x1] %vm261, 0
      %3828 = vst.msk [vmem:[#allocation3 + $0x30] sm:$0xf] %vm258, 0
      %3829 = vst.msk [vmem:[#allocation3 + $0x34] sm:$0xf] %vm258, 0
      %3830 = vst.msk [vmem:[#allocation3 + $0x38] sm:$0x1] %vm261, 0
      %3831 = vst.msk [vmem:[#allocation3 + $0x3c] sm:$0xf] %vm258, 0
      %3832 = vst.msk [vmem:[#allocation3 + $0x40] sm:$0xf] %vm258, 0
      %3833 = vst.msk [vmem:[#allocation3 + $0x44] sm:$0x1] %vm261, 0
      %3834 = vst.msk [vmem:[#allocation3 + $0x48] sm:$0xf] %vm258, 0
      %3835 = vst.msk [vmem:[#allocation3 + $0x4c] sm:$0xf] %vm258, 0
      %3836 = vst.msk [vmem:[#allocation3 + $0x50] sm:$0x1] %vm261, 0
      %3837 = vst.msk [vmem:[#allocation3 + $0x54] sm:$0xf] %vm258, 0
      %3838 = vst.msk [vmem:[#allocation3 + $0x58] sm:$0xf] %vm258, 0
      %3839 = vst.msk [vmem:[#allocation3 + $0x5c] sm:$0x1] %vm261, 0
      %3840 = vst.msk [vmem:[#allocation3 + $0x60] sm:$0xf] %vm258, 0
      %3841 = vst.msk [vmem:[#allocation3 + $0x64] sm:$0xf] %vm258, 0
      %3842 = vst.msk [vmem:[#allocation3 + $0x68] sm:$0x1] %vm261, 0
      %3843 = vst.msk [vmem:[#allocation3 + $0x6c] sm:$0xf] %vm258, 0
      %3844 = vst.msk [vmem:[#allocation3 + $0x70] sm:$0xf] %vm258, 0
      %3845 = vst.msk [vmem:[#allocation3 + $0x74] sm:$0x1] %vm261, 0
      %3846 = vst.msk [vmem:[#allocation3 + $0x78] sm:$0xf] %vm258, 0
      %3847 = vst.msk [vmem:[#allocation3 + $0x7c] sm:$0xf] %vm258, 0
      %3848 = vst.msk [vmem:[#allocation3 + $0x80] sm:$0x1] %vm261, 0
      %3849 = vst.msk [vmem:[#allocation3 + $0x84] sm:$0xf] %vm258, 0
      %3850 = vst.msk [vmem:[#allocation3 + $0x88] sm:$0xf] %vm258, 0
      %3851 = vst.msk [vmem:[#allocation3 + $0x8c] sm:$0x1] %vm261, 0
      %3852 = vst.msk [vmem:[#allocation3 + $0x90] sm:$0xf] %vm258, 0
      %3853 = vst.msk [vmem:[#allocation3 + $0x94] sm:$0xf] %vm258, 0
      %3854 = vst.msk [vmem:[#allocation3 + $0x98] sm:$0x1] %vm261, 0
      %3855 = vst.msk [vmem:[#allocation3 + $0x9c] sm:$0xf] %vm258, 0
      %3856 = vst.msk [vmem:[#allocation3 + $0xa0] sm:$0xf] %vm258, 0
      %3857 = vst.msk [vmem:[#allocation3 + $0xa4] sm:$0x1] %vm261, 0
      %3858 = vst.msk [vmem:[#allocation3 + $0xa8] sm:$0xf] %vm258, 0
      %3859 = vst.msk [vmem:[#allocation3 + $0xac] sm:$0xf] %vm258, 0
      %3860 = vst.msk [vmem:[#allocation3 + $0xb0] sm:$0x1] %vm261, 0
      %3861 = vst.msk [vmem:[#allocation3 + $0xb4] sm:$0xf] %vm258, 0
      %3862 = vst.msk [vmem:[#allocation3 + $0xb8] sm:$0xf] %vm258, 0
      %3863 = vst.msk [vmem:[#allocation3 + $0xbc] sm:$0x1] %vm261, 0
      %3864 = vst.msk [vmem:[#allocation3 + $0xc0] sm:$0xf] %vm258, 0
      %3865 = vst.msk [vmem:[#allocation3 + $0xc4] sm:$0xf] %vm258, 0
      %3866 = vst.msk [vmem:[#allocation3 + $0xc8] sm:$0x1] %vm261, 0
      %3867 = vst.msk [vmem:[#allocation3 + $0xcc] sm:$0xf] %vm258, 0
      %3868 = vst.msk [vmem:[#allocation3 + $0xd0] sm:$0xf] %vm258, 0
      %3869 = vst.msk [vmem:[#allocation3 + $0xd4] sm:$0x1] %vm261, 0
      %v3871 = vshrl.u32 %v3784, 16
      %v3873 = vrot.slane %v3871, 7
      %v3874 = vshll.u32 %v3784, 16
      %v3876 = vor.u32 %v3873, %v3874
      %v3877 = vrot.slane %v3873, 4
      %v3879 = vshrl.u32 %v3785, 16
      %v3881 = vrot.slane %v3879, 7
      %v3882 = vshll.u32 %v3785, 16
      %v3884 = vor.u32 %v3881, %v3882
      %v3885 = vsel %vm316, %v3877, %v3884
      %v3886 = vrot.slane %v3881, 4
      %v3888 = vshrl.u32 %v3786, 16
      %v3890 = vrot.slane %v3888, 7
      %v3891 = vshll.u32 %v3786, 16
      %v3893 = vor.u32 %v3890, %v3891
      %v3894 = vrot.slane %v3890, 4
      %v3896 = vshrl.u32 %v3787, 16
      %v3898 = vrot.slane %v3896, 7
      %v3899 = vshll.u32 %v3787, 16
      %v3901 = vor.u32 %v3898, %v3899
      %v3902 = vsel %vm316, %v3894, %v3901
      %v3903 = vrot.slane %v3898, 4
      %v3905 = vshrl.u32 %v3788, 16
      %v3907 = vrot.slane %v3905, 7
      %v3908 = vshll.u32 %v3788, 16
      %v3910 = vor.u32 %v3907, %v3908
      %v3911 = vrot.slane %v3907, 4
      %v3913 = vshrl.u32 %v3789, 16
      %v3915 = vrot.slane %v3913, 7
      %v3916 = vshll.u32 %v3789, 16
      %v3918 = vor.u32 %v3915, %v3916
      %v3919 = vsel %vm316, %v3911, %v3918
      %v3920 = vrot.slane %v3915, 4
      %v3922 = vshrl.u32 %v3790, 16
      %v3924 = vrot.slane %v3922, 7
      %v3925 = vshll.u32 %v3790, 16
      %v3927 = vor.u32 %v3924, %v3925
      %v3928 = vrot.slane %v3924, 4
      %v3930 = vshrl.u32 %v3791, 16
      %v3932 = vrot.slane %v3930, 7
      %v3933 = vshll.u32 %v3791, 16
      %v3935 = vor.u32 %v3932, %v3933
      %v3936 = vsel %vm316, %v3928, %v3935
      %v3937 = vrot.slane %v3932, 4
      %v3939 = vshrl.u32 %v3792, 16
      %v3941 = vrot.slane %v3939, 7
      %v3942 = vshll.u32 %v3792, 16
      %v3944 = vor.u32 %v3941, %v3942
      %v3945 = vrot.slane %v3941, 4
      %v3947 = vshrl.u32 %v3793, 16
      %v3949 = vrot.slane %v3947, 7
      %v3950 = vshll.u32 %v3793, 16
      %v3952 = vor.u32 %v3949, %v3950
      %v3953 = vsel %vm316, %v3945, %v3952
      %v3954 = vrot.slane %v3949, 4
      %v3956 = vshrl.u32 %v3794, 16
      %v3958 = vrot.slane %v3956, 7
      %v3959 = vshll.u32 %v3794, 16
      %v3961 = vor.u32 %v3958, %v3959
      %v3962 = vrot.slane %v3958, 4
      %v3964 = vshrl.u32 %v3795, 16
      %v3966 = vrot.slane %v3964, 7
      %v3967 = vshll.u32 %v3795, 16
      %v3969 = vor.u32 %v3966, %v3967
      %v3970 = vsel %vm316, %v3962, %v3969
      %v3971 = vrot.slane %v3966, 4
      %v3973 = vshrl.u32 %v3796, 16
      %v3975 = vrot.slane %v3973, 7
      %v3976 = vshll.u32 %v3796, 16
      %v3978 = vor.u32 %v3975, %v3976
      %v3979 = vrot.slane %v3975, 4
      %v3981 = vshrl.u32 %v3797, 16
      %v3983 = vrot.slane %v3981, 7
      %v3984 = vshll.u32 %v3797, 16
      %v3986 = vor.u32 %v3983, %v3984
      %v3987 = vsel %vm316, %v3979, %v3986
      %v3988 = vrot.slane %v3983, 4
      %v3990 = vshrl.u32 %v3798, 16
      %v3992 = vrot.slane %v3990, 7
      %v3993 = vshll.u32 %v3798, 16
      %v3995 = vor.u32 %v3992, %v3993
      %v3996 = vrot.slane %v3992, 4
      %v3998 = vshrl.u32 %v3799, 16
      %v4000 = vrot.slane %v3998, 7
      %v4001 = vshll.u32 %v3799, 16
      %v4003 = vor.u32 %v4000, %v4001
      %v4004 = vsel %vm316, %v3996, %v4003
      %v4005 = vrot.slane %v4000, 4
      %v4007 = vshrl.u32 %v3800, 16
      %v4009 = vrot.slane %v4007, 7
      %v4010 = vshll.u32 %v3800, 16
      %v4012 = vor.u32 %v4009, %v4010
      %v4013 = vrot.slane %v4009, 4
      %v4015 = vshrl.u32 %v3801, 16
      %v4017 = vrot.slane %v4015, 7
      %v4018 = vshll.u32 %v3801, 16
      %v4020 = vor.u32 %v4017, %v4018
      %v4021 = vsel %vm316, %v4013, %v4020
      %v4022 = vrot.slane %v4017, 4
      %v4024 = vshrl.u32 %v3802, 16
      %v4026 = vrot.slane %v4024, 7
      %v4027 = vshll.u32 %v3802, 16
      %v4029 = vor.u32 %v4026, %v4027
      %v4030 = vrot.slane %v4026, 4
      %v4032 = vshrl.u32 %v3803, 16
      %v4034 = vrot.slane %v4032, 7
      %v4035 = vshll.u32 %v3803, 16
      %v4037 = vor.u32 %v4034, %v4035
      %v4038 = vsel %vm316, %v4030, %v4037
      %v4039 = vrot.slane %v4034, 4
      %v4041 = vshrl.u32 %v3804, 16
      %v4043 = vrot.slane %v4041, 7
      %v4044 = vshll.u32 %v3804, 16
      %v4046 = vor.u32 %v4043, %v4044
      %v4047 = vrot.slane %v4043, 4
      %v4049 = vshrl.u32 %v3805, 16
      %v4051 = vrot.slane %v4049, 7
      %v4052 = vshll.u32 %v3805, 16
      %v4054 = vor.u32 %v4051, %v4052
      %v4055 = vsel %vm316, %v4047, %v4054
      %v4056 = vrot.slane %v4051, 4
      %v4058 = vshrl.u32 %v3806, 16
      %v4060 = vrot.slane %v4058, 7
      %v4061 = vshll.u32 %v3806, 16
      %v4063 = vor.u32 %v4060, %v4061
      %v4064 = vrot.slane %v4060, 4
      %v4066 = vshrl.u32 %v3807, 16
      %v4068 = vrot.slane %v4066, 7
      %v4069 = vshll.u32 %v3807, 16
      %v4071 = vor.u32 %v4068, %v4069
      %v4072 = vsel %vm316, %v4064, %v4071
      %v4073 = vrot.slane %v4068, 4
      %v4075 = vshrl.u32 %v3808, 16
      %v4077 = vrot.slane %v4075, 7
      %v4078 = vshll.u32 %v3808, 16
      %v4080 = vor.u32 %v4077, %v4078
      %v4081 = vrot.slane %v4077, 4
      %v4083 = vshrl.u32 %v3809, 16
      %v4085 = vrot.slane %v4083, 7
      %v4086 = vshll.u32 %v3809, 16
      %v4088 = vor.u32 %v4085, %v4086
      %v4089 = vsel %vm316, %v4081, %v4088
      %v4090 = vrot.slane %v4085, 4
      %v4092 = vshrl.u32 %v3810, 16
      %v4094 = vrot.slane %v4092, 7
      %v4095 = vshll.u32 %v3810, 16
      %v4097 = vor.u32 %v4094, %v4095
      %v4098 = vrot.slane %v4094, 4
      %v4100 = vshrl.u32 %v3811, 16
      %v4102 = vrot.slane %v4100, 7
      %v4103 = vshll.u32 %v3811, 16
      %v4105 = vor.u32 %v4102, %v4103
      %v4106 = vsel %vm316, %v4098, %v4105
      %v4107 = vrot.slane %v4102, 4
      %v4109 = vshrl.u32 %v3812, 16
      %v4111 = vrot.slane %v4109, 7
      %v4112 = vshll.u32 %v3812, 16
      %v4114 = vor.u32 %v4111, %v4112
      %v4115 = vrot.slane %v4111, 4
      %v4117 = vshrl.u32 %v3813, 16
      %v4119 = vrot.slane %v4117, 7
      %v4120 = vshll.u32 %v3813, 16
      %v4122 = vor.u32 %v4119, %v4120
      %v4123 = vsel %vm316, %v4115, %v4122
      %v4124 = vrot.slane %v4119, 4
      %v4126 = vshrl.u32 %v3814, 16
      %v4128 = vrot.slane %v4126, 7
      %v4129 = vshll.u32 %v3814, 16
      %v4131 = vor.u32 %v4128, %v4129
      %v4132 = vrot.slane %v4128, 4
      %v4134 = vshrl.u32 %v3815, 16
      %v4136 = vrot.slane %v4134, 7
      %v4137 = vshll.u32 %v3815, 16
      %v4139 = vor.u32 %v4136, %v4137
      %v4140 = vsel %vm316, %v4132, %v4139
      %v4141 = vrot.slane %v4136, 4
      %s4190 = scalar_lea.vmem [#allocation3], 12
      %v4191 = vld [vmem:[%s4190] sm:$0xf]
      %v4192 = vsel %vm640, %v3876, %v4191
      %4193 = vst [vmem:[%s4190] sm:$0xf] %v4192
      %4194 = vst.msk [vmem:[%s4190 + $0x4] sm:$0xf] %vm258, %v3885
      %v4195 = vld [vmem:[%s4190 + $0x8] sm:$0x1]
      %v4196 = vsel %vm646, %v3886, %v4195
      %4197 = vst [vmem:[%s4190 + $0x8] sm:$0x1] %v4196
      %v4198 = vld [vmem:[%s4190 + $0xc] sm:$0xf]
      %v4199 = vsel %vm640, %v3893, %v4198
      %4200 = vst [vmem:[%s4190 + $0xc] sm:$0xf] %v4199
      %4201 = vst.msk [vmem:[%s4190 + $0x10] sm:$0xf] %vm258, %v3902
      %v4202 = vld [vmem:[%s4190 + $0x14] sm:$0x1]
      %v4203 = vsel %vm646, %v3903, %v4202
      %4204 = vst [vmem:[%s4190 + $0x14] sm:$0x1] %v4203
      %v4205 = vld [vmem:[%s4190 + $0x18] sm:$0xf]
      %v4206 = vsel %vm640, %v3910, %v4205
      %4207 = vst [vmem:[%s4190 + $0x18] sm:$0xf] %v4206
      %4208 = vst.msk [vmem:[%s4190 + $0x1c] sm:$0xf] %vm258, %v3919
      %v4209 = vld [vmem:[%s4190 + $0x20] sm:$0x1]
      %v4210 = vsel %vm646, %v3920, %v4209
      %4211 = vst [vmem:[%s4190 + $0x20] sm:$0x1] %v4210
      %v4212 = vld [vmem:[%s4190 + $0x24] sm:$0xf]
      %v4213 = vsel %vm640, %v3927, %v4212
      %4214 = vst [vmem:[%s4190 + $0x24] sm:$0xf] %v4213
      %4215 = vst.msk [vmem:[%s4190 + $0x28] sm:$0xf] %vm258, %v3936
      %v4216 = vld [vmem:[%s4190 + $0x2c] sm:$0x1]
      %v4217 = vsel %vm646, %v3937, %v4216
      %4218 = vst [vmem:[%s4190 + $0x2c] sm:$0x1] %v4217
      %v4219 = vld [vmem:[%s4190 + $0x30] sm:$0xf]
      %v4220 = vsel %vm640, %v3944, %v4219
      %4221 = vst [vmem:[%s4190 + $0x30] sm:$0xf] %v4220
      %4222 = vst.msk [vmem:[%s4190 + $0x34] sm:$0xf] %vm258, %v3953
      %v4223 = vld [vmem:[%s4190 + $0x38] sm:$0x1]
      %v4224 = vsel %vm646, %v3954, %v4223
      %4225 = vst [vmem:[%s4190 + $0x38] sm:$0x1] %v4224
      %v4226 = vld [vmem:[%s4190 + $0x3c] sm:$0xf]
      %v4227 = vsel %vm640, %v3961, %v4226
      %4228 = vst [vmem:[%s4190 + $0x3c] sm:$0xf] %v4227
      %4229 = vst.msk [vmem:[%s4190 + $0x40] sm:$0xf] %vm258, %v3970
      %v4230 = vld [vmem:[%s4190 + $0x44] sm:$0x1]
      %v4231 = vsel %vm646, %v3971, %v4230
      %4232 = vst [vmem:[%s4190 + $0x44] sm:$0x1] %v4231
      %v4233 = vld [vmem:[%s4190 + $0x48] sm:$0xf]
      %v4234 = vsel %vm640, %v3978, %v4233
      %4235 = vst [vmem:[%s4190 + $0x48] sm:$0xf] %v4234
      %4236 = vst.msk [vmem:[%s4190 + $0x4c] sm:$0xf] %vm258, %v3987
      %v4237 = vld [vmem:[%s4190 + $0x50] sm:$0x1]
      %v4238 = vsel %vm646, %v3988, %v4237
      %4239 = vst [vmem:[%s4190 + $0x50] sm:$0x1] %v4238
      %v4240 = vld [vmem:[%s4190 + $0x54] sm:$0xf]
      %v4241 = vsel %vm640, %v3995, %v4240
      %4242 = vst [vmem:[%s4190 + $0x54] sm:$0xf] %v4241
      %4243 = vst.msk [vmem:[%s4190 + $0x58] sm:$0xf] %vm258, %v4004
      %v4244 = vld [vmem:[%s4190 + $0x5c] sm:$0x1]
      %v4245 = vsel %vm646, %v4005, %v4244
      %4246 = vst [vmem:[%s4190 + $0x5c] sm:$0x1] %v4245
      %v4247 = vld [vmem:[%s4190 + $0x60] sm:$0xf]
      %v4248 = vsel %vm640, %v4012, %v4247
      %4249 = vst [vmem:[%s4190 + $0x60] sm:$0xf] %v4248
      %4250 = vst.msk [vmem:[%s4190 + $0x64] sm:$0xf] %vm258, %v4021
      %v4251 = vld [vmem:[%s4190 + $0x68] sm:$0x1]
      %v4252 = vsel %vm646, %v4022, %v4251
      %4253 = vst [vmem:[%s4190 + $0x68] sm:$0x1] %v4252
      %v4254 = vld [vmem:[%s4190 + $0x6c] sm:$0xf]
      %v4255 = vsel %vm640, %v4029, %v4254
      %4256 = vst [vmem:[%s4190 + $0x6c] sm:$0xf] %v4255
      %4257 = vst.msk [vmem:[%s4190 + $0x70] sm:$0xf] %vm258, %v4038
      %v4258 = vld [vmem:[%s4190 + $0x74] sm:$0x1]
      %v4259 = vsel %vm646, %v4039, %v4258
      %4260 = vst [vmem:[%s4190 + $0x74] sm:$0x1] %v4259
      %v4261 = vld [vmem:[%s4190 + $0x78] sm:$0xf]
      %v4262 = vsel %vm640, %v4046, %v4261
      %4263 = vst [vmem:[%s4190 + $0x78] sm:$0xf] %v4262
      %4264 = vst.msk [vmem:[%s4190 + $0x7c] sm:$0xf] %vm258, %v4055
      %v4265 = vld [vmem:[%s4190 + $0x80] sm:$0x1]
      %v4266 = vsel %vm646, %v4056, %v4265
      %4267 = vst [vmem:[%s4190 + $0x80] sm:$0x1] %v4266
      %v4268 = vld [vmem:[%s4190 + $0x84] sm:$0xf]
      %v4269 = vsel %vm640, %v4063, %v4268
      %4270 = vst [vmem:[%s4190 + $0x84] sm:$0xf] %v4269
      %4271 = vst.msk [vmem:[%s4190 + $0x88] sm:$0xf] %vm258, %v4072
      %v4272 = vld [vmem:[%s4190 + $0x8c] sm:$0x1]
      %v4273 = vsel %vm646, %v4073, %v4272
      %4274 = vst [vmem:[%s4190 + $0x8c] sm:$0x1] %v4273
      %v4275 = vld [vmem:[%s4190 + $0x90] sm:$0xf]
      %v4276 = vsel %vm640, %v4080, %v4275
      %4277 = vst [vmem:[%s4190 + $0x90] sm:$0xf] %v4276
      %4278 = vst.msk [vmem:[%s4190 + $0x94] sm:$0xf] %vm258, %v4089
      %v4279 = vld [vmem:[%s4190 + $0x98] sm:$0x1]
      %v4280 = vsel %vm646, %v4090, %v4279
      %4281 = vst [vmem:[%s4190 + $0x98] sm:$0x1] %v4280
      %v4282 = vld [vmem:[%s4190 + $0x9c] sm:$0xf]
      %v4283 = vsel %vm640, %v4097, %v4282
      %4284 = vst [vmem:[%s4190 + $0x9c] sm:$0xf] %v4283
      %4285 = vst.msk [vmem:[%s4190 + $0xa0] sm:$0xf] %vm258, %v4106
      %v4286 = vld [vmem:[%s4190 + $0xa4] sm:$0x1]
      %v4287 = vsel %vm646, %v4107, %v4286
      %4288 = vst [vmem:[%s4190 + $0xa4] sm:$0x1] %v4287
      %v4289 = vld [vmem:[%s4190 + $0xa8] sm:$0xf]
      %v4290 = vsel %vm640, %v4114, %v4289
      %4291 = vst [vmem:[%s4190 + $0xa8] sm:$0xf] %v4290
      %4292 = vst.msk [vmem:[%s4190 + $0xac] sm:$0xf] %vm258, %v4123
      %v4293 = vld [vmem:[%s4190 + $0xb0] sm:$0x1]
      %v4294 = vsel %vm646, %v4124, %v4293
      %4295 = vst [vmem:[%s4190 + $0xb0] sm:$0x1] %v4294
      %v4296 = vld [vmem:[%s4190 + $0xb4] sm:$0xf]
      %v4297 = vsel %vm640, %v4131, %v4296
      %4298 = vst [vmem:[%s4190 + $0xb4] sm:$0xf] %v4297
      %4299 = vst.msk [vmem:[%s4190 + $0xb8] sm:$0xf] %vm258, %v4140
      %v4300 = vld [vmem:[%s4190 + $0xbc] sm:$0x1]
      %v4301 = vsel %vm646, %v4141, %v4300
      %4302 = vst [vmem:[%s4190 + $0xbc] sm:$0x1] %v4301
      %v4303 = vld [vmem:[#allocation3] sm:$0xf]
      %v4304 = vld [vmem:[#allocation3 + $0x4] sm:$0xf]
      %v4305 = vld [vmem:[#allocation3 + $0xc] sm:$0xf]
      %v4306 = vld [vmem:[#allocation3 + $0x10] sm:$0xf]
      %v4307 = vld [vmem:[#allocation3 + $0x18] sm:$0xf]
      %v4308 = vld [vmem:[#allocation3 + $0x1c] sm:$0xf]
      %v4309 = vld [vmem:[#allocation3 + $0x24] sm:$0xf]
      %v4310 = vld [vmem:[#allocation3 + $0x28] sm:$0xf]
      %v4311 = vld [vmem:[#allocation3 + $0x30] sm:$0xf]
      %v4312 = vld [vmem:[#allocation3 + $0x34] sm:$0xf]
      %v4313 = vld [vmem:[#allocation3 + $0x3c] sm:$0xf]
      %v4314 = vld [vmem:[#allocation3 + $0x40] sm:$0xf]
      %v4315 = vld [vmem:[#allocation3 + $0x48] sm:$0xf]
      %v4316 = vld [vmem:[#allocation3 + $0x4c] sm:$0xf]
      %v4317 = vld [vmem:[#allocation3 + $0x54] sm:$0xf]
      %v4318 = vld [vmem:[#allocation3 + $0x58] sm:$0xf]
      %v4319 = vld [vmem:[#allocation3 + $0x60] sm:$0xf]
      %v4320 = vld [vmem:[#allocation3 + $0x64] sm:$0xf]
      %v4321 = vld [vmem:[#allocation3 + $0x6c] sm:$0xf]
      %v4322 = vld [vmem:[#allocation3 + $0x70] sm:$0xf]
      %v4323 = vld [vmem:[#allocation3 + $0x78] sm:$0xf]
      %v4324 = vld [vmem:[#allocation3 + $0x7c] sm:$0xf]
      %v4325 = vld [vmem:[#allocation3 + $0x84] sm:$0xf]
      %v4326 = vld [vmem:[#allocation3 + $0x88] sm:$0xf]
      %v4327 = vld [vmem:[#allocation3 + $0x90] sm:$0xf]
      %v4328 = vld [vmem:[#allocation3 + $0x94] sm:$0xf]
      %v4329 = vld [vmem:[#allocation3 + $0x9c] sm:$0xf]
      %v4330 = vld [vmem:[#allocation3 + $0xa0] sm:$0xf]
      %v4331 = vld [vmem:[#allocation3 + $0xa8] sm:$0xf]
      %v4332 = vld [vmem:[#allocation3 + $0xac] sm:$0xf]
      %v4333 = vld [vmem:[#allocation3 + $0xb4] sm:$0xf]
      %v4334 = vld [vmem:[#allocation3 + $0xb8] sm:$0xf]
      %v4335 = vld [vmem:[#allocation3 + $0x8] sm:$0x1]
      %v4336 = vld [vmem:[#allocation3 + $0x14] sm:$0x1]
      %v4337 = vld [vmem:[#allocation3 + $0x20] sm:$0x1]
      %v4338 = vld [vmem:[#allocation3 + $0x2c] sm:$0x1]
      %v4339 = vld [vmem:[#allocation3 + $0x38] sm:$0x1]
      %v4340 = vld [vmem:[#allocation3 + $0x44] sm:$0x1]
      %v4341 = vld [vmem:[#allocation3 + $0x50] sm:$0x1]
      %v4342 = vld [vmem:[#allocation3 + $0x5c] sm:$0x1]
      %v4343 = vld [vmem:[#allocation3 + $0x68] sm:$0x1]
      %v4344 = vld [vmem:[#allocation3 + $0x74] sm:$0x1]
      %v4345 = vld [vmem:[#allocation3 + $0x80] sm:$0x1]
      %v4346 = vld [vmem:[#allocation3 + $0x8c] sm:$0x1]
      %v4347 = vld [vmem:[#allocation3 + $0x98] sm:$0x1]
      %v4348 = vld [vmem:[#allocation3 + $0xa4] sm:$0x1]
      %v4349 = vld [vmem:[#allocation3 + $0xb0] sm:$0x1]
      %v4350 = vld [vmem:[#allocation3 + $0xbc] sm:$0x1]
      %v4352 = vshrl.u32 %v4303, 16
      %v4354 = vrot.slane %v4352, 4
      %v4355 = vshll.u32 %v4303, 16
      %v4357 = vrot.slane %v4355, 5
      %v4358 = vor.u32 %v4354, %v4357
      %v4359 = vrot.slane %v4358, 4
      %v4361 = vshll.u32 %v4304, 16
      %v4363 = vrot.slane %v4361, 5
      %v4364 = vsel %vm805, %v4359, %v4363
      %v4365 = vshrl.u32 %v4304, 16
      %v4367 = vrot.slane %v4365, 4
      %v4368 = vor.u32 %v4367, %v4363
      %v4369 = vrot.slane %v4368, 4
      %v4371 = vshll.u32 %v4335, 16
      %v4373 = vrot.slane %v4371, 5
      %v4374 = vsel %vm805, %v4369, %v4373
      %v4376 = vshrl.u32 %v4305, 16
      %v4378 = vrot.slane %v4376, 4
      %v4379 = vshll.u32 %v4305, 16
      %v4381 = vrot.slane %v4379, 5
      %v4382 = vor.u32 %v4378, %v4381
      %v4383 = vrot.slane %v4382, 4
      %v4385 = vshll.u32 %v4306, 16
      %v4387 = vrot.slane %v4385, 5
      %v4388 = vsel %vm805, %v4383, %v4387
      %v4389 = vshrl.u32 %v4306, 16
      %v4391 = vrot.slane %v4389, 4
      %v4392 = vor.u32 %v4391, %v4387
      %v4393 = vrot.slane %v4392, 4
      %v4395 = vshll.u32 %v4336, 16
      %v4397 = vrot.slane %v4395, 5
      %v4398 = vsel %vm805, %v4393, %v4397
      %v4400 = vshrl.u32 %v4307, 16
      %v4402 = vrot.slane %v4400, 4
      %v4403 = vshll.u32 %v4307, 16
      %v4405 = vrot.slane %v4403, 5
      %v4406 = vor.u32 %v4402, %v4405
      %v4407 = vrot.slane %v4406, 4
      %v4409 = vshll.u32 %v4308, 16
      %v4411 = vrot.slane %v4409, 5
      %v4412 = vsel %vm805, %v4407, %v4411
      %v4413 = vshrl.u32 %v4308, 16
      %v4415 = vrot.slane %v4413, 4
      %v4416 = vor.u32 %v4415, %v4411
      %v4417 = vrot.slane %v4416, 4
      %v4419 = vshll.u32 %v4337, 16
      %v4421 = vrot.slane %v4419, 5
      %v4422 = vsel %vm805, %v4417, %v4421
      %v4424 = vshrl.u32 %v4309, 16
      %v4426 = vrot.slane %v4424, 4
      %v4427 = vshll.u32 %v4309, 16
      %v4429 = vrot.slane %v4427, 5
      %v4430 = vor.u32 %v4426, %v4429
      %v4431 = vrot.slane %v4430, 4
      %v4433 = vshll.u32 %v4310, 16
      %v4435 = vrot.slane %v4433, 5
      %v4436 = vsel %vm805, %v4431, %v4435
      %v4437 = vshrl.u32 %v4310, 16
      %v4439 = vrot.slane %v4437, 4
      %v4440 = vor.u32 %v4439, %v4435
      %v4441 = vrot.slane %v4440, 4
      %v4443 = vshll.u32 %v4338, 16
      %v4445 = vrot.slane %v4443, 5
      %v4446 = vsel %vm805, %v4441, %v4445
      %v4448 = vshrl.u32 %v4311, 16
      %v4450 = vrot.slane %v4448, 4
      %v4451 = vshll.u32 %v4311, 16
      %v4453 = vrot.slane %v4451, 5
      %v4454 = vor.u32 %v4450, %v4453
      %v4455 = vrot.slane %v4454, 4
      %v4457 = vshll.u32 %v4312, 16
      %v4459 = vrot.slane %v4457, 5
      %v4460 = vsel %vm805, %v4455, %v4459
      %v4461 = vshrl.u32 %v4312, 16
      %v4463 = vrot.slane %v4461, 4
      %v4464 = vor.u32 %v4463, %v4459
      %v4465 = vrot.slane %v4464, 4
      %v4467 = vshll.u32 %v4339, 16
      %v4469 = vrot.slane %v4467, 5
      %v4470 = vsel %vm805, %v4465, %v4469
      %v4472 = vshrl.u32 %v4313, 16
      %v4474 = vrot.slane %v4472, 4
      %v4475 = vshll.u32 %v4313, 16
      %v4477 = vrot.slane %v4475, 5
      %v4478 = vor.u32 %v4474, %v4477
      %v4479 = vrot.slane %v4478, 4
      %v4481 = vshll.u32 %v4314, 16
      %v4483 = vrot.slane %v4481, 5
      %v4484 = vsel %vm805, %v4479, %v4483
      %v4485 = vshrl.u32 %v4314, 16
      %v4487 = vrot.slane %v4485, 4
      %v4488 = vor.u32 %v4487, %v4483
      %v4489 = vrot.slane %v4488, 4
      %v4491 = vshll.u32 %v4340, 16
      %v4493 = vrot.slane %v4491, 5
      %v4494 = vsel %vm805, %v4489, %v4493
      %v4496 = vshrl.u32 %v4315, 16
      %v4498 = vrot.slane %v4496, 4
      %v4499 = vshll.u32 %v4315, 16
      %v4501 = vrot.slane %v4499, 5
      %v4502 = vor.u32 %v4498, %v4501
      %v4503 = vrot.slane %v4502, 4
      %v4505 = vshll.u32 %v4316, 16
      %v4507 = vrot.slane %v4505, 5
      %v4508 = vsel %vm805, %v4503, %v4507
      %v4509 = vshrl.u32 %v4316, 16
      %v4511 = vrot.slane %v4509, 4
      %v4512 = vor.u32 %v4511, %v4507
      %v4513 = vrot.slane %v4512, 4
      %v4515 = vshll.u32 %v4341, 16
      %v4517 = vrot.slane %v4515, 5
      %v4518 = vsel %vm805, %v4513, %v4517
      %v4520 = vshrl.u32 %v4317, 16
      %v4522 = vrot.slane %v4520, 4
      %v4523 = vshll.u32 %v4317, 16
      %v4525 = vrot.slane %v4523, 5
      %v4526 = vor.u32 %v4522, %v4525
      %v4527 = vrot.slane %v4526, 4
      %v4529 = vshll.u32 %v4318, 16
      %v4531 = vrot.slane %v4529, 5
      %v4532 = vsel %vm805, %v4527, %v4531
      %v4533 = vshrl.u32 %v4318, 16
      %v4535 = vrot.slane %v4533, 4
      %v4536 = vor.u32 %v4535, %v4531
      %v4537 = vrot.slane %v4536, 4
      %v4539 = vshll.u32 %v4342, 16
      %v4541 = vrot.slane %v4539, 5
      %v4542 = vsel %vm805, %v4537, %v4541
      %v4544 = vshrl.u32 %v4319, 16
      %v4546 = vrot.slane %v4544, 4
      %v4547 = vshll.u32 %v4319, 16
      %v4549 = vrot.slane %v4547, 5
      %v4550 = vor.u32 %v4546, %v4549
      %v4551 = vrot.slane %v4550, 4
      %v4553 = vshll.u32 %v4320, 16
      %v4555 = vrot.slane %v4553, 5
      %v4556 = vsel %vm805, %v4551, %v4555
      %v4557 = vshrl.u32 %v4320, 16
      %v4559 = vrot.slane %v4557, 4
      %v4560 = vor.u32 %v4559, %v4555
      %v4561 = vrot.slane %v4560, 4
      %v4563 = vshll.u32 %v4343, 16
      %v4565 = vrot.slane %v4563, 5
      %v4566 = vsel %vm805, %v4561, %v4565
      %v4568 = vshrl.u32 %v4321, 16
      %v4570 = vrot.slane %v4568, 4
      %v4571 = vshll.u32 %v4321, 16
      %v4573 = vrot.slane %v4571, 5
      %v4574 = vor.u32 %v4570, %v4573
      %v4575 = vrot.slane %v4574, 4
      %v4577 = vshll.u32 %v4322, 16
      %v4579 = vrot.slane %v4577, 5
      %v4580 = vsel %vm805, %v4575, %v4579
      %v4581 = vshrl.u32 %v4322, 16
      %v4583 = vrot.slane %v4581, 4
      %v4584 = vor.u32 %v4583, %v4579
      %v4585 = vrot.slane %v4584, 4
      %v4587 = vshll.u32 %v4344, 16
      %v4589 = vrot.slane %v4587, 5
      %v4590 = vsel %vm805, %v4585, %v4589
      %v4592 = vshrl.u32 %v4323, 16
      %v4594 = vrot.slane %v4592, 4
      %v4595 = vshll.u32 %v4323, 16
      %v4597 = vrot.slane %v4595, 5
      %v4598 = vor.u32 %v4594, %v4597
      %v4599 = vrot.slane %v4598, 4
      %v4601 = vshll.u32 %v4324, 16
      %v4603 = vrot.slane %v4601, 5
      %v4604 = vsel %vm805, %v4599, %v4603
      %v4605 = vshrl.u32 %v4324, 16
      %v4607 = vrot.slane %v4605, 4
      %v4608 = vor.u32 %v4607, %v4603
      %v4609 = vrot.slane %v4608, 4
      %v4611 = vshll.u32 %v4345, 16
      %v4613 = vrot.slane %v4611, 5
      %v4614 = vsel %vm805, %v4609, %v4613
      %v4616 = vshrl.u32 %v4325, 16
      %v4618 = vrot.slane %v4616, 4
      %v4619 = vshll.u32 %v4325, 16
      %v4621 = vrot.slane %v4619, 5
      %v4622 = vor.u32 %v4618, %v4621
      %v4623 = vrot.slane %v4622, 4
      %v4625 = vshll.u32 %v4326, 16
      %v4627 = vrot.slane %v4625, 5
      %v4628 = vsel %vm805, %v4623, %v4627
      %v4629 = vshrl.u32 %v4326, 16
      %v4631 = vrot.slane %v4629, 4
      %v4632 = vor.u32 %v4631, %v4627
      %v4633 = vrot.slane %v4632, 4
      %v4635 = vshll.u32 %v4346, 16
      %v4637 = vrot.slane %v4635, 5
      %v4638 = vsel %vm805, %v4633, %v4637
      %v4640 = vshrl.u32 %v4327, 16
      %v4642 = vrot.slane %v4640, 4
      %v4643 = vshll.u32 %v4327, 16
      %v4645 = vrot.slane %v4643, 5
      %v4646 = vor.u32 %v4642, %v4645
      %v4647 = vrot.slane %v4646, 4
      %v4649 = vshll.u32 %v4328, 16
      %v4651 = vrot.slane %v4649, 5
      %v4652 = vsel %vm805, %v4647, %v4651
      %v4653 = vshrl.u32 %v4328, 16
      %v4655 = vrot.slane %v4653, 4
      %v4656 = vor.u32 %v4655, %v4651
      %v4657 = vrot.slane %v4656, 4
      %v4659 = vshll.u32 %v4347, 16
      %v4661 = vrot.slane %v4659, 5
      %v4662 = vsel %vm805, %v4657, %v4661
      %v4664 = vshrl.u32 %v4329, 16
      %v4666 = vrot.slane %v4664, 4
      %v4667 = vshll.u32 %v4329, 16
      %v4669 = vrot.slane %v4667, 5
      %v4670 = vor.u32 %v4666, %v4669
      %v4671 = vrot.slane %v4670, 4
      %v4673 = vshll.u32 %v4330, 16
      %v4675 = vrot.slane %v4673, 5
      %v4676 = vsel %vm805, %v4671, %v4675
      %v4677 = vshrl.u32 %v4330, 16
      %v4679 = vrot.slane %v4677, 4
      %v4680 = vor.u32 %v4679, %v4675
      %v4681 = vrot.slane %v4680, 4
      %v4683 = vshll.u32 %v4348, 16
      %v4685 = vrot.slane %v4683, 5
      %v4686 = vsel %vm805, %v4681, %v4685
      %v4688 = vshrl.u32 %v4331, 16
      %v4690 = vrot.slane %v4688, 4
      %v4691 = vshll.u32 %v4331, 16
      %v4693 = vrot.slane %v4691, 5
      %v4694 = vor.u32 %v4690, %v4693
      %v4695 = vrot.slane %v4694, 4
      %v4697 = vshll.u32 %v4332, 16
      %v4699 = vrot.slane %v4697, 5
      %v4700 = vsel %vm805, %v4695, %v4699
      %v4701 = vshrl.u32 %v4332, 16
      %v4703 = vrot.slane %v4701, 4
      %v4704 = vor.u32 %v4703, %v4699
      %v4705 = vrot.slane %v4704, 4
      %v4707 = vshll.u32 %v4349, 16
      %v4709 = vrot.slane %v4707, 5
      %v4710 = vsel %vm805, %v4705, %v4709
      %v4712 = vshrl.u32 %v4333, 16
      %v4714 = vrot.slane %v4712, 4
      %v4715 = vshll.u32 %v4333, 16
      %v4717 = vrot.slane %v4715, 5
      %v4718 = vor.u32 %v4714, %v4717
      %v4719 = vrot.slane %v4718, 4
      %v4721 = vshll.u32 %v4334, 16
      %v4723 = vrot.slane %v4721, 5
      %v4724 = vsel %vm805, %v4719, %v4723
      %v4725 = vshrl.u32 %v4334, 16
      %v4727 = vrot.slane %v4725, 4
      %v4728 = vor.u32 %v4727, %v4723
      %v4729 = vrot.slane %v4728, 4
      %v4731 = vshll.u32 %v4350, 16
      %v4733 = vrot.slane %v4731, 5
      %v4734 = vsel %vm805, %v4729, %v4733
      %v4735 = vld [vmem:[#allocation3] sm:$0xe]
      %v4736 = vld [vmem:[#allocation3 + $0xc] sm:$0xe]
      %v4737 = vld [vmem:[#allocation3 + $0x18] sm:$0xe]
      %v4738 = vld [vmem:[#allocation3 + $0x24] sm:$0xe]
      %v4739 = vld [vmem:[#allocation3 + $0x30] sm:$0xe]
      %v4740 = vld [vmem:[#allocation3 + $0x3c] sm:$0xe]
      %v4741 = vld [vmem:[#allocation3 + $0x48] sm:$0xe]
      %v4742 = vld [vmem:[#allocation3 + $0x54] sm:$0xe]
      %v4743 = vld [vmem:[#allocation3 + $0x60] sm:$0xe]
      %v4744 = vld [vmem:[#allocation3 + $0x6c] sm:$0xe]
      %v4745 = vld [vmem:[#allocation3 + $0x78] sm:$0xe]
      %v4746 = vld [vmem:[#allocation3 + $0x84] sm:$0xe]
      %v4747 = vld [vmem:[#allocation3 + $0x90] sm:$0xe]
      %v4748 = vld [vmem:[#allocation3 + $0x9c] sm:$0xe]
      %v4749 = vld [vmem:[#allocation3 + $0xa8] sm:$0xe]
      %v4750 = vld [vmem:[#allocation3 + $0xb4] sm:$0xe]
      %v4799 = vrot.slane %v4735, 5
      %v4800 = vrot.slane %v4799, 4
      %v4801 = vrot.slane %v4304, 5
      %v4802 = vsel %vm1256, %v4800, %v4801
      %v4803 = vrot.slane %v4801, 4
      %v4804 = vrot.slane %v4335, 5
      %v4805 = vsel %vm1256, %v4803, %v4804
      %v4806 = vrot.slane %v4736, 5
      %v4807 = vrot.slane %v4806, 4
      %v4808 = vrot.slane %v4306, 5
      %v4809 = vsel %vm1256, %v4807, %v4808
      %v4810 = vrot.slane %v4808, 4
      %v4811 = vrot.slane %v4336, 5
      %v4812 = vsel %vm1256, %v4810, %v4811
      %v4813 = vrot.slane %v4737, 5
      %v4814 = vrot.slane %v4813, 4
      %v4815 = vrot.slane %v4308, 5
      %v4816 = vsel %vm1256, %v4814, %v4815
      %v4817 = vrot.slane %v4815, 4
      %v4818 = vrot.slane %v4337, 5
      %v4819 = vsel %vm1256, %v4817, %v4818
      %v4820 = vrot.slane %v4738, 5
      %v4821 = vrot.slane %v4820, 4
      %v4822 = vrot.slane %v4310, 5
      %v4823 = vsel %vm1256, %v4821, %v4822
      %v4824 = vrot.slane %v4822, 4
      %v4825 = vrot.slane %v4338, 5
      %v4826 = vsel %vm1256, %v4824, %v4825
      %v4827 = vrot.slane %v4739, 5
      %v4828 = vrot.slane %v4827, 4
      %v4829 = vrot.slane %v4312, 5
      %v4830 = vsel %vm1256, %v4828, %v4829
      %v4831 = vrot.slane %v4829, 4
      %v4832 = vrot.slane %v4339, 5
      %v4833 = vsel %vm1256, %v4831, %v4832
      %v4834 = vrot.slane %v4740, 5
      %v4835 = vrot.slane %v4834, 4
      %v4836 = vrot.slane %v4314, 5
      %v4837 = vsel %vm1256, %v4835, %v4836
      %v4838 = vrot.slane %v4836, 4
      %v4839 = vrot.slane %v4340, 5
      %v4840 = vsel %vm1256, %v4838, %v4839
      %v4841 = vrot.slane %v4741, 5
      %v4842 = vrot.slane %v4841, 4
      %v4843 = vrot.slane %v4316, 5
      %v4844 = vsel %vm1256, %v4842, %v4843
      %v4845 = vrot.slane %v4843, 4
      %v4846 = vrot.slane %v4341, 5
      %v4847 = vsel %vm1256, %v4845, %v4846
      %v4848 = vrot.slane %v4742, 5
      %v4849 = vrot.slane %v4848, 4
      %v4850 = vrot.slane %v4318, 5
      %v4851 = vsel %vm1256, %v4849, %v4850
      %v4852 = vrot.slane %v4850, 4
      %v4853 = vrot.slane %v4342, 5
      %v4854 = vsel %vm1256, %v4852, %v4853
      %v4855 = vrot.slane %v4743, 5
      %v4856 = vrot.slane %v4855, 4
      %v4857 = vrot.slane %v4320, 5
      %v4858 = vsel %vm1256, %v4856, %v4857
      %v4859 = vrot.slane %v4857, 4
      %v4860 = vrot.slane %v4343, 5
      %v4861 = vsel %vm1256, %v4859, %v4860
      %v4862 = vrot.slane %v4744, 5
      %v4863 = vrot.slane %v4862, 4
      %v4864 = vrot.slane %v4322, 5
      %v4865 = vsel %vm1256, %v4863, %v4864
      %v4866 = vrot.slane %v4864, 4
      %v4867 = vrot.slane %v4344, 5
      %v4868 = vsel %vm1256, %v4866, %v4867
      %v4869 = vrot.slane %v4745, 5
      %v4870 = vrot.slane %v4869, 4
      %v4871 = vrot.slane %v4324, 5
      %v4872 = vsel %vm1256, %v4870, %v4871
      %v4873 = vrot.slane %v4871, 4
      %v4874 = vrot.slane %v4345, 5
      %v4875 = vsel %vm1256, %v4873, %v4874
      %v4876 = vrot.slane %v4746, 5
      %v4877 = vrot.slane %v4876, 4
      %v4878 = vrot.slane %v4326, 5
      %v4879 = vsel %vm1256, %v4877, %v4878
      %v4880 = vrot.slane %v4878, 4
      %v4881 = vrot.slane %v4346, 5
      %v4882 = vsel %vm1256, %v4880, %v4881
      %v4883 = vrot.slane %v4747, 5
      %v4884 = vrot.slane %v4883, 4
      %v4885 = vrot.slane %v4328, 5
      %v4886 = vsel %vm1256, %v4884, %v4885
      %v4887 = vrot.slane %v4885, 4
      %v4888 = vrot.slane %v4347, 5
      %v4889 = vsel %vm1256, %v4887, %v4888
      %v4890 = vrot.slane %v4748, 5
      %v4891 = vrot.slane %v4890, 4
      %v4892 = vrot.slane %v4330, 5
      %v4893 = vsel %vm1256, %v4891, %v4892
      %v4894 = vrot.slane %v4892, 4
      %v4895 = vrot.slane %v4348, 5
      %v4896 = vsel %vm1256, %v4894, %v4895
      %v4897 = vrot.slane %v4749, 5
      %v4898 = vrot.slane %v4897, 4
      %v4899 = vrot.slane %v4332, 5
      %v4900 = vsel %vm1256, %v4898, %v4899
      %v4901 = vrot.slane %v4899, 4
      %v4902 = vrot.slane %v4349, 5
      %v4903 = vsel %vm1256, %v4901, %v4902
      %v4904 = vrot.slane %v4750, 5
      %v4905 = vrot.slane %v4904, 4
      %v4906 = vrot.slane %v4334, 5
      %v4907 = vsel %vm1256, %v4905, %v4906
      %v4908 = vrot.slane %v4906, 4
      %v4909 = vrot.slane %v4350, 5
      %v4910 = vsel %vm1256, %v4908, %v4909
      %v4911 = vld [vmem:[%s4190] sm:$0xf]
      %v4912 = vld [vmem:[%s4190 + $0x4] sm:$0xf]
      %v4913 = vld [vmem:[%s4190 + $0xc] sm:$0xf]
      %v4914 = vld [vmem:[%s4190 + $0x10] sm:$0xf]
      %v4915 = vld [vmem:[%s4190 + $0x18] sm:$0xf]
      %v4916 = vld [vmem:[%s4190 + $0x1c] sm:$0xf]
      %v4917 = vld [vmem:[%s4190 + $0x24] sm:$0xf]
      %v4918 = vld [vmem:[%s4190 + $0x28] sm:$0xf]
      %v4919 = vld [vmem:[%s4190 + $0x30] sm:$0xf]
      %v4920 = vld [vmem:[%s4190 + $0x34] sm:$0xf]
      %v4921 = vld [vmem:[%s4190 + $0x3c] sm:$0xf]
      %v4922 = vld [vmem:[%s4190 + $0x40] sm:$0xf]
      %v4923 = vld [vmem:[%s4190 + $0x48] sm:$0xf]
      %v4924 = vld [vmem:[%s4190 + $0x4c] sm:$0xf]
      %v4925 = vld [vmem:[%s4190 + $0x54] sm:$0xf]
      %v4926 = vld [vmem:[%s4190 + $0x58] sm:$0xf]
      %v4927 = vld [vmem:[%s4190 + $0x60] sm:$0xf]
      %v4928 = vld [vmem:[%s4190 + $0x64] sm:$0xf]
      %v4929 = vld [vmem:[%s4190 + $0x6c] sm:$0xf]
      %v4930 = vld [vmem:[%s4190 + $0x70] sm:$0xf]
      %v4931 = vld [vmem:[%s4190 + $0x78] sm:$0xf]
      %v4932 = vld [vmem:[%s4190 + $0x7c] sm:$0xf]
      %v4933 = vld [vmem:[%s4190 + $0x84] sm:$0xf]
      %v4934 = vld [vmem:[%s4190 + $0x88] sm:$0xf]
      %v4935 = vld [vmem:[%s4190 + $0x90] sm:$0xf]
      %v4936 = vld [vmem:[%s4190 + $0x94] sm:$0xf]
      %v4937 = vld [vmem:[%s4190 + $0x9c] sm:$0xf]
      %v4938 = vld [vmem:[%s4190 + $0xa0] sm:$0xf]
      %v4939 = vld [vmem:[%s4190 + $0xa8] sm:$0xf]
      %v4940 = vld [vmem:[%s4190 + $0xac] sm:$0xf]
      %v4941 = vld [vmem:[%s4190 + $0xb4] sm:$0xf]
      %v4942 = vld [vmem:[%s4190 + $0xb8] sm:$0xf]
      %v4943 = vld [vmem:[%s4190 + $0x8] sm:$0x1]
      %v4944 = vld [vmem:[%s4190 + $0x14] sm:$0x1]
      %v4945 = vld [vmem:[%s4190 + $0x20] sm:$0x1]
      %v4946 = vld [vmem:[%s4190 + $0x2c] sm:$0x1]
      %v4947 = vld [vmem:[%s4190 + $0x38] sm:$0x1]
      %v4948 = vld [vmem:[%s4190 + $0x44] sm:$0x1]
      %v4949 = vld [vmem:[%s4190 + $0x50] sm:$0x1]
      %v4950 = vld [vmem:[%s4190 + $0x5c] sm:$0x1]
      %v4951 = vld [vmem:[%s4190 + $0x68] sm:$0x1]
      %v4952 = vld [vmem:[%s4190 + $0x74] sm:$0x1]
      %v4953 = vld [vmem:[%s4190 + $0x80] sm:$0x1]
      %v4954 = vld [vmem:[%s4190 + $0x8c] sm:$0x1]
      %v4955 = vld [vmem:[%s4190 + $0x98] sm:$0x1]
      %v4956 = vld [vmem:[%s4190 + $0xa4] sm:$0x1]
      %v4957 = vld [vmem:[%s4190 + $0xb0] sm:$0x1]
      %v4958 = vld [vmem:[%s4190 + $0xbc] sm:$0x1]
      %v4960 = vshrl.u32 %v4911, 16
      %v4962 = vrot.slane %v4960, 4
      %v4963 = vshll.u32 %v4911, 16
      %v4965 = vrot.slane %v4963, 5
      %v4966 = vor.u32 %v4962, %v4965
      %v4967 = vrot.slane %v4966, 4
      %v4969 = vshll.u32 %v4912, 16
      %v4971 = vrot.slane %v4969, 5
      %v4972 = vsel %vm805, %v4967, %v4971
      %v4973 = vshrl.u32 %v4912, 16
      %v4975 = vrot.slane %v4973, 4
      %v4976 = vor.u32 %v4975, %v4971
      %v4977 = vrot.slane %v4976, 4
      %v4979 = vshll.u32 %v4943, 16
      %v4981 = vrot.slane %v4979, 5
      %v4982 = vsel %vm805, %v4977, %v4981
      %v4984 = vshrl.u32 %v4913, 16
      %v4986 = vrot.slane %v4984, 4
      %v4987 = vshll.u32 %v4913, 16
      %v4989 = vrot.slane %v4987, 5
      %v4990 = vor.u32 %v4986, %v4989
      %v4991 = vrot.slane %v4990, 4
      %v4993 = vshll.u32 %v4914, 16
      %v4995 = vrot.slane %v4993, 5
      %v4996 = vsel %vm805, %v4991, %v4995
      %v4997 = vshrl.u32 %v4914, 16
      %v4999 = vrot.slane %v4997, 4
      %v5000 = vor.u32 %v4999, %v4995
      %v5001 = vrot.slane %v5000, 4
      %v5003 = vshll.u32 %v4944, 16
      %v5005 = vrot.slane %v5003, 5
      %v5006 = vsel %vm805, %v5001, %v5005
      %v5008 = vshrl.u32 %v4915, 16
      %v5010 = vrot.slane %v5008, 4
      %v5011 = vshll.u32 %v4915, 16
      %v5013 = vrot.slane %v5011, 5
      %v5014 = vor.u32 %v5010, %v5013
      %v5015 = vrot.slane %v5014, 4
      %v5017 = vshll.u32 %v4916, 16
      %v5019 = vrot.slane %v5017, 5
      %v5020 = vsel %vm805, %v5015, %v5019
      %v5021 = vshrl.u32 %v4916, 16
      %v5023 = vrot.slane %v5021, 4
      %v5024 = vor.u32 %v5023, %v5019
      %v5025 = vrot.slane %v5024, 4
      %v5027 = vshll.u32 %v4945, 16
      %v5029 = vrot.slane %v5027, 5
      %v5030 = vsel %vm805, %v5025, %v5029
      %v5032 = vshrl.u32 %v4917, 16
      %v5034 = vrot.slane %v5032, 4
      %v5035 = vshll.u32 %v4917, 16
      %v5037 = vrot.slane %v5035, 5
      %v5038 = vor.u32 %v5034, %v5037
      %v5039 = vrot.slane %v5038, 4
      %v5041 = vshll.u32 %v4918, 16
      %v5043 = vrot.slane %v5041, 5
      %v5044 = vsel %vm805, %v5039, %v5043
      %v5045 = vshrl.u32 %v4918, 16
      %v5047 = vrot.slane %v5045, 4
      %v5048 = vor.u32 %v5047, %v5043
      %v5049 = vrot.slane %v5048, 4
      %v5051 = vshll.u32 %v4946, 16
      %v5053 = vrot.slane %v5051, 5
      %v5054 = vsel %vm805, %v5049, %v5053
      %v5056 = vshrl.u32 %v4919, 16
      %v5058 = vrot.slane %v5056, 4
      %v5059 = vshll.u32 %v4919, 16
      %v5061 = vrot.slane %v5059, 5
      %v5062 = vor.u32 %v5058, %v5061
      %v5063 = vrot.slane %v5062, 4
      %v5065 = vshll.u32 %v4920, 16
      %v5067 = vrot.slane %v5065, 5
      %v5068 = vsel %vm805, %v5063, %v5067
      %v5069 = vshrl.u32 %v4920, 16
      %v5071 = vrot.slane %v5069, 4
      %v5072 = vor.u32 %v5071, %v5067
      %v5073 = vrot.slane %v5072, 4
      %v5075 = vshll.u32 %v4947, 16
      %v5077 = vrot.slane %v5075, 5
      %v5078 = vsel %vm805, %v5073, %v5077
      %v5080 = vshrl.u32 %v4921, 16
      %v5082 = vrot.slane %v5080, 4
      %v5083 = vshll.u32 %v4921, 16
      %v5085 = vrot.slane %v5083, 5
      %v5086 = vor.u32 %v5082, %v5085
      %v5087 = vrot.slane %v5086, 4
      %v5089 = vshll.u32 %v4922, 16
      %v5091 = vrot.slane %v5089, 5
      %v5092 = vsel %vm805, %v5087, %v5091
      %v5093 = vshrl.u32 %v4922, 16
      %v5095 = vrot.slane %v5093, 4
      %v5096 = vor.u32 %v5095, %v5091
      %v5097 = vrot.slane %v5096, 4
      %v5099 = vshll.u32 %v4948, 16
      %v5101 = vrot.slane %v5099, 5
      %v5102 = vsel %vm805, %v5097, %v5101
      %v5104 = vshrl.u32 %v4923, 16
      %v5106 = vrot.slane %v5104, 4
      %v5107 = vshll.u32 %v4923, 16
      %v5109 = vrot.slane %v5107, 5
      %v5110 = vor.u32 %v5106, %v5109
      %v5111 = vrot.slane %v5110, 4
      %v5113 = vshll.u32 %v4924, 16
      %v5115 = vrot.slane %v5113, 5
      %v5116 = vsel %vm805, %v5111, %v5115
      %v5117 = vshrl.u32 %v4924, 16
      %v5119 = vrot.slane %v5117, 4
      %v5120 = vor.u32 %v5119, %v5115
      %v5121 = vrot.slane %v5120, 4
      %v5123 = vshll.u32 %v4949, 16
      %v5125 = vrot.slane %v5123, 5
      %v5126 = vsel %vm805, %v5121, %v5125
      %v5128 = vshrl.u32 %v4925, 16
      %v5130 = vrot.slane %v5128, 4
      %v5131 = vshll.u32 %v4925, 16
      %v5133 = vrot.slane %v5131, 5
      %v5134 = vor.u32 %v5130, %v5133
      %v5135 = vrot.slane %v5134, 4
      %v5137 = vshll.u32 %v4926, 16
      %v5139 = vrot.slane %v5137, 5
      %v5140 = vsel %vm805, %v5135, %v5139
      %v5141 = vshrl.u32 %v4926, 16
      %v5143 = vrot.slane %v5141, 4
      %v5144 = vor.u32 %v5143, %v5139
      %v5145 = vrot.slane %v5144, 4
      %v5147 = vshll.u32 %v4950, 16
      %v5149 = vrot.slane %v5147, 5
      %v5150 = vsel %vm805, %v5145, %v5149
      %v5152 = vshrl.u32 %v4927, 16
      %v5154 = vrot.slane %v5152, 4
      %v5155 = vshll.u32 %v4927, 16
      %v5157 = vrot.slane %v5155, 5
      %v5158 = vor.u32 %v5154, %v5157
      %v5159 = vrot.slane %v5158, 4
      %v5161 = vshll.u32 %v4928, 16
      %v5163 = vrot.slane %v5161, 5
      %v5164 = vsel %vm805, %v5159, %v5163
      %v5165 = vshrl.u32 %v4928, 16
      %v5167 = vrot.slane %v5165, 4
      %v5168 = vor.u32 %v5167, %v5163
      %v5169 = vrot.slane %v5168, 4
      %v5171 = vshll.u32 %v4951, 16
      %v5173 = vrot.slane %v5171, 5
      %v5174 = vsel %vm805, %v5169, %v5173
      %v5176 = vshrl.u32 %v4929, 16
      %v5178 = vrot.slane %v5176, 4
      %v5179 = vshll.u32 %v4929, 16
      %v5181 = vrot.slane %v5179, 5
      %v5182 = vor.u32 %v5178, %v5181
      %v5183 = vrot.slane %v5182, 4
      %v5185 = vshll.u32 %v4930, 16
      %v5187 = vrot.slane %v5185, 5
      %v5188 = vsel %vm805, %v5183, %v5187
      %v5189 = vshrl.u32 %v4930, 16
      %v5191 = vrot.slane %v5189, 4
      %v5192 = vor.u32 %v5191, %v5187
      %v5193 = vrot.slane %v5192, 4
      %v5195 = vshll.u32 %v4952, 16
      %v5197 = vrot.slane %v5195, 5
      %v5198 = vsel %vm805, %v5193, %v5197
      %v5200 = vshrl.u32 %v4931, 16
      %v5202 = vrot.slane %v5200, 4
      %v5203 = vshll.u32 %v4931, 16
      %v5205 = vrot.slane %v5203, 5
      %v5206 = vor.u32 %v5202, %v5205
      %v5207 = vrot.slane %v5206, 4
      %v5209 = vshll.u32 %v4932, 16
      %v5211 = vrot.slane %v5209, 5
      %v5212 = vsel %vm805, %v5207, %v5211
      %v5213 = vshrl.u32 %v4932, 16
      %v5215 = vrot.slane %v5213, 4
      %v5216 = vor.u32 %v5215, %v5211
      %v5217 = vrot.slane %v5216, 4
      %v5219 = vshll.u32 %v4953, 16
      %v5221 = vrot.slane %v5219, 5
      %v5222 = vsel %vm805, %v5217, %v5221
      %v5224 = vshrl.u32 %v4933, 16
      %v5226 = vrot.slane %v5224, 4
      %v5227 = vshll.u32 %v4933, 16
      %v5229 = vrot.slane %v5227, 5
      %v5230 = vor.u32 %v5226, %v5229
      %v5231 = vrot.slane %v5230, 4
      %v5233 = vshll.u32 %v4934, 16
      %v5235 = vrot.slane %v5233, 5
      %v5236 = vsel %vm805, %v5231, %v5235
      %v5237 = vshrl.u32 %v4934, 16
      %v5239 = vrot.slane %v5237, 4
      %v5240 = vor.u32 %v5239, %v5235
      %v5241 = vrot.slane %v5240, 4
      %v5243 = vshll.u32 %v4954, 16
      %v5245 = vrot.slane %v5243, 5
      %v5246 = vsel %vm805, %v5241, %v5245
      %v5248 = vshrl.u32 %v4935, 16
      %v5250 = vrot.slane %v5248, 4
      %v5251 = vshll.u32 %v4935, 16
      %v5253 = vrot.slane %v5251, 5
      %v5254 = vor.u32 %v5250, %v5253
      %v5255 = vrot.slane %v5254, 4
      %v5257 = vshll.u32 %v4936, 16
      %v5259 = vrot.slane %v5257, 5
      %v5260 = vsel %vm805, %v5255, %v5259
      %v5261 = vshrl.u32 %v4936, 16
      %v5263 = vrot.slane %v5261, 4
      %v5264 = vor.u32 %v5263, %v5259
      %v5265 = vrot.slane %v5264, 4
      %v5267 = vshll.u32 %v4955, 16
      %v5269 = vrot.slane %v5267, 5
      %v5270 = vsel %vm805, %v5265, %v5269
      %v5272 = vshrl.u32 %v4937, 16
      %v5274 = vrot.slane %v5272, 4
      %v5275 = vshll.u32 %v4937, 16
      %v5277 = vrot.slane %v5275, 5
      %v5278 = vor.u32 %v5274, %v5277
      %v5279 = vrot.slane %v5278, 4
      %v5281 = vshll.u32 %v4938, 16
      %v5283 = vrot.slane %v5281, 5
      %v5284 = vsel %vm805, %v5279, %v5283
      %v5285 = vshrl.u32 %v4938, 16
      %v5287 = vrot.slane %v5285, 4
      %v5288 = vor.u32 %v5287, %v5283
      %v5289 = vrot.slane %v5288, 4
      %v5291 = vshll.u32 %v4956, 16
      %v5293 = vrot.slane %v5291, 5
      %v5294 = vsel %vm805, %v5289, %v5293
      %v5296 = vshrl.u32 %v4939, 16
      %v5298 = vrot.slane %v5296, 4
      %v5299 = vshll.u32 %v4939, 16
      %v5301 = vrot.slane %v5299, 5
      %v5302 = vor.u32 %v5298, %v5301
      %v5303 = vrot.slane %v5302, 4
      %v5305 = vshll.u32 %v4940, 16
      %v5307 = vrot.slane %v5305, 5
      %v5308 = vsel %vm805, %v5303, %v5307
      %v5309 = vshrl.u32 %v4940, 16
      %v5311 = vrot.slane %v5309, 4
      %v5312 = vor.u32 %v5311, %v5307
      %v5313 = vrot.slane %v5312, 4
      %v5315 = vshll.u32 %v4957, 16
      %v5317 = vrot.slane %v5315, 5
      %v5318 = vsel %vm805, %v5313, %v5317
      %v5320 = vshrl.u32 %v4941, 16
      %v5322 = vrot.slane %v5320, 4
      %v5323 = vshll.u32 %v4941, 16
      %v5325 = vrot.slane %v5323, 5
      %v5326 = vor.u32 %v5322, %v5325
      %v5327 = vrot.slane %v5326, 4
      %v5329 = vshll.u32 %v4942, 16
      %v5331 = vrot.slane %v5329, 5
      %v5332 = vsel %vm805, %v5327, %v5331
      %v5333 = vshrl.u32 %v4942, 16
      %v5335 = vrot.slane %v5333, 4
      %v5336 = vor.u32 %v5335, %v5331
      %v5337 = vrot.slane %v5336, 4
      %v5339 = vshll.u32 %v4958, 16
      %v5341 = vrot.slane %v5339, 5
      %v5342 = vsel %vm805, %v5337, %v5341
      %v5343 = vld [vmem:[%s4190] sm:$0xe]
      %v5344 = vld [vmem:[%s4190 + $0xc] sm:$0xe]
      %v5345 = vld [vmem:[%s4190 + $0x18] sm:$0xe]
      %v5346 = vld [vmem:[%s4190 + $0x24] sm:$0xe]
      %v5347 = vld [vmem:[%s4190 + $0x30] sm:$0xe]
      %v5348 = vld [vmem:[%s4190 + $0x3c] sm:$0xe]
      %v5349 = vld [vmem:[%s4190 + $0x48] sm:$0xe]
      %v5350 = vld [vmem:[%s4190 + $0x54] sm:$0xe]
      %v5351 = vld [vmem:[%s4190 + $0x60] sm:$0xe]
      %v5352 = vld [vmem:[%s4190 + $0x6c] sm:$0xe]
      %v5353 = vld [vmem:[%s4190 + $0x78] sm:$0xe]
      %v5354 = vld [vmem:[%s4190 + $0x84] sm:$0xe]
      %v5355 = vld [vmem:[%s4190 + $0x90] sm:$0xe]
      %v5356 = vld [vmem:[%s4190 + $0x9c] sm:$0xe]
      %v5357 = vld [vmem:[%s4190 + $0xa8] sm:$0xe]
      %v5358 = vld [vmem:[%s4190 + $0xb4] sm:$0xe]
      %v5407 = vrot.slane %v5343, 5
      %v5408 = vrot.slane %v5407, 4
      %v5409 = vrot.slane %v4912, 5
      %v5410 = vsel %vm1256, %v5408, %v5409
      %v5411 = vrot.slane %v5409, 4
      %v5412 = vrot.slane %v4943, 5
      %v5413 = vsel %vm1256, %v5411, %v5412
      %v5414 = vrot.slane %v5344, 5
      %v5415 = vrot.slane %v5414, 4
      %v5416 = vrot.slane %v4914, 5
      %v5417 = vsel %vm1256, %v5415, %v5416
      %v5418 = vrot.slane %v5416, 4
      %v5419 = vrot.slane %v4944, 5
      %v5420 = vsel %vm1256, %v5418, %v5419
      %v5421 = vrot.slane %v5345, 5
      %v5422 = vrot.slane %v5421, 4
      %v5423 = vrot.slane %v4916, 5
      %v5424 = vsel %vm1256, %v5422, %v5423
      %v5425 = vrot.slane %v5423, 4
      %v5426 = vrot.slane %v4945, 5
      %v5427 = vsel %vm1256, %v5425, %v5426
      %v5428 = vrot.slane %v5346, 5
      %v5429 = vrot.slane %v5428, 4
      %v5430 = vrot.slane %v4918, 5
      %v5431 = vsel %vm1256, %v5429, %v5430
      %v5432 = vrot.slane %v5430, 4
      %v5433 = vrot.slane %v4946, 5
      %v5434 = vsel %vm1256, %v5432, %v5433
      %v5435 = vrot.slane %v5347, 5
      %v5436 = vrot.slane %v5435, 4
      %v5437 = vrot.slane %v4920, 5
      %v5438 = vsel %vm1256, %v5436, %v5437
      %v5439 = vrot.slane %v5437, 4
      %v5440 = vrot.slane %v4947, 5
      %v5441 = vsel %vm1256, %v5439, %v5440
      %v5442 = vrot.slane %v5348, 5
      %v5443 = vrot.slane %v5442, 4
      %v5444 = vrot.slane %v4922, 5
      %v5445 = vsel %vm1256, %v5443, %v5444
      %v5446 = vrot.slane %v5444, 4
      %v5447 = vrot.slane %v4948, 5
      %v5448 = vsel %vm1256, %v5446, %v5447
      %v5449 = vrot.slane %v5349, 5
      %v5450 = vrot.slane %v5449, 4
      %v5451 = vrot.slane %v4924, 5
      %v5452 = vsel %vm1256, %v5450, %v5451
      %v5453 = vrot.slane %v5451, 4
      %v5454 = vrot.slane %v4949, 5
      %v5455 = vsel %vm1256, %v5453, %v5454
      %v5456 = vrot.slane %v5350, 5
      %v5457 = vrot.slane %v5456, 4
      %v5458 = vrot.slane %v4926, 5
      %v5459 = vsel %vm1256, %v5457, %v5458
      %v5460 = vrot.slane %v5458, 4
      %v5461 = vrot.slane %v4950, 5
      %v5462 = vsel %vm1256, %v5460, %v5461
      %v5463 = vrot.slane %v5351, 5
      %v5464 = vrot.slane %v5463, 4
      %v5465 = vrot.slane %v4928, 5
      %v5466 = vsel %vm1256, %v5464, %v5465
      %v5467 = vrot.slane %v5465, 4
      %v5468 = vrot.slane %v4951, 5
      %v5469 = vsel %vm1256, %v5467, %v5468
      %v5470 = vrot.slane %v5352, 5
      %v5471 = vrot.slane %v5470, 4
      %v5472 = vrot.slane %v4930, 5
      %v5473 = vsel %vm1256, %v5471, %v5472
      %v5474 = vrot.slane %v5472, 4
      %v5475 = vrot.slane %v4952, 5
      %v5476 = vsel %vm1256, %v5474, %v5475
      %v5477 = vrot.slane %v5353, 5
      %v5478 = vrot.slane %v5477, 4
      %v5479 = vrot.slane %v4932, 5
      %v5480 = vsel %vm1256, %v5478, %v5479
      %v5481 = vrot.slane %v5479, 4
      %v5482 = vrot.slane %v4953, 5
      %v5483 = vsel %vm1256, %v5481, %v5482
      %v5484 = vrot.slane %v5354, 5
      %v5485 = vrot.slane %v5484, 4
      %v5486 = vrot.slane %v4934, 5
      %v5487 = vsel %vm1256, %v5485, %v5486
      %v5488 = vrot.slane %v5486, 4
      %v5489 = vrot.slane %v4954, 5
      %v5490 = vsel %vm1256, %v5488, %v5489
      %v5491 = vrot.slane %v5355, 5
      %v5492 = vrot.slane %v5491, 4
      %v5493 = vrot.slane %v4936, 5
      %v5494 = vsel %vm1256, %v5492, %v5493
      %v5495 = vrot.slane %v5493, 4
      %v5496 = vrot.slane %v4955, 5
      %v5497 = vsel %vm1256, %v5495, %v5496
      %v5498 = vrot.slane %v5356, 5
      %v5499 = vrot.slane %v5498, 4
      %v5500 = vrot.slane %v4938, 5
      %v5501 = vsel %vm1256, %v5499, %v5500
      %v5502 = vrot.slane %v5500, 4
      %v5503 = vrot.slane %v4956, 5
      %v5504 = vsel %vm1256, %v5502, %v5503
      %v5505 = vrot.slane %v5357, 5
      %v5506 = vrot.slane %v5505, 4
      %v5507 = vrot.slane %v4940, 5
      %v5508 = vsel %vm1256, %v5506, %v5507
      %v5509 = vrot.slane %v5507, 4
      %v5510 = vrot.slane %v4957, 5
      %v5511 = vsel %vm1256, %v5509, %v5510
      %v5512 = vrot.slane %v5358, 5
      %v5513 = vrot.slane %v5512, 4
      %v5514 = vrot.slane %v4942, 5
      %v5515 = vsel %vm1256, %v5513, %v5514
      %v5516 = vrot.slane %v5514, 4
      %v5517 = vrot.slane %v4958, 5
      %v5518 = vsel %vm1256, %v5516, %v5517
      %s5519 = scalar_lea.vmem [#allocation3], 24
      %v5520 = vld [vmem:[%s5519] sm:$0xf]
      %v5521 = vld [vmem:[%s5519 + $0x4] sm:$0xf]
      %v5522 = vld [vmem:[%s5519 + $0xc] sm:$0xf]
      %v5523 = vld [vmem:[%s5519 + $0x10] sm:$0xf]
      %v5524 = vld [vmem:[%s5519 + $0x18] sm:$0xf]
      %v5525 = vld [vmem:[%s5519 + $0x1c] sm:$0xf]
      %v5526 = vld [vmem:[%s5519 + $0x24] sm:$0xf]
      %v5527 = vld [vmem:[%s5519 + $0x28] sm:$0xf]
      %v5528 = vld [vmem:[%s5519 + $0x30] sm:$0xf]
      %v5529 = vld [vmem:[%s5519 + $0x34] sm:$0xf]
      %v5530 = vld [vmem:[%s5519 + $0x3c] sm:$0xf]
      %v5531 = vld [vmem:[%s5519 + $0x40] sm:$0xf]
      %v5532 = vld [vmem:[%s5519 + $0x48] sm:$0xf]
      %v5533 = vld [vmem:[%s5519 + $0x4c] sm:$0xf]
      %v5534 = vld [vmem:[%s5519 + $0x54] sm:$0xf]
      %v5535 = vld [vmem:[%s5519 + $0x58] sm:$0xf]
      %v5536 = vld [vmem:[%s5519 + $0x60] sm:$0xf]
      %v5537 = vld [vmem:[%s5519 + $0x64] sm:$0xf]
      %v5538 = vld [vmem:[%s5519 + $0x6c] sm:$0xf]
      %v5539 = vld [vmem:[%s5519 + $0x70] sm:$0xf]
      %v5540 = vld [vmem:[%s5519 + $0x78] sm:$0xf]
      %v5541 = vld [vmem:[%s5519 + $0x7c] sm:$0xf]
      %v5542 = vld [vmem:[%s5519 + $0x84] sm:$0xf]
      %v5543 = vld [vmem:[%s5519 + $0x88] sm:$0xf]
      %v5544 = vld [vmem:[%s5519 + $0x90] sm:$0xf]
      %v5545 = vld [vmem:[%s5519 + $0x94] sm:$0xf]
      %v5546 = vld [vmem:[%s5519 + $0x9c] sm:$0xf]
      %v5547 = vld [vmem:[%s5519 + $0xa0] sm:$0xf]
      %v5548 = vld [vmem:[%s5519 + $0xa8] sm:$0xf]
      %v5549 = vld [vmem:[%s5519 + $0xac] sm:$0xf]
      %v5550 = vld [vmem:[%s5519 + $0xb4] sm:$0xf]
      %v5551 = vld [vmem:[%s5519 + $0xb8] sm:$0xf]
      %v5552 = vld [vmem:[%s5519 + $0x8] sm:$0x1]
      %v5553 = vld [vmem:[%s5519 + $0x14] sm:$0x1]
      %v5554 = vld [vmem:[%s5519 + $0x20] sm:$0x1]
      %v5555 = vld [vmem:[%s5519 + $0x2c] sm:$0x1]
      %v5556 = vld [vmem:[%s5519 + $0x38] sm:$0x1]
      %v5557 = vld [vmem:[%s5519 + $0x44] sm:$0x1]
      %v5558 = vld [vmem:[%s5519 + $0x50] sm:$0x1]
      %v5559 = vld [vmem:[%s5519 + $0x5c] sm:$0x1]
      %v5560 = vld [vmem:[%s5519 + $0x68] sm:$0x1]
      %v5561 = vld [vmem:[%s5519 + $0x74] sm:$0x1]
      %v5562 = vld [vmem:[%s5519 + $0x80] sm:$0x1]
      %v5563 = vld [vmem:[%s5519 + $0x8c] sm:$0x1]
      %v5564 = vld [vmem:[%s5519 + $0x98] sm:$0x1]
      %v5565 = vld [vmem:[%s5519 + $0xa4] sm:$0x1]
      %v5566 = vld [vmem:[%s5519 + $0xb0] sm:$0x1]
      %v5567 = vld [vmem:[%s5519 + $0xbc] sm:$0x1]
      %v5569 = vshrl.u32 %v5520, 16
      %v5571 = vrot.slane %v5569, 4
      %v5572 = vshll.u32 %v5520, 16
      %v5574 = vrot.slane %v5572, 5
      %v5575 = vor.u32 %v5571, %v5574
      %v5576 = vrot.slane %v5575, 4
      %v5578 = vshll.u32 %v5521, 16
      %v5580 = vrot.slane %v5578, 5
      %v5581 = vsel %vm805, %v5576, %v5580
      %v5582 = vshrl.u32 %v5521, 16
      %v5584 = vrot.slane %v5582, 4
      %v5585 = vor.u32 %v5584, %v5580
      %v5586 = vrot.slane %v5585, 4
      %v5588 = vshll.u32 %v5552, 16
      %v5590 = vrot.slane %v5588, 5
      %v5591 = vsel %vm805, %v5586, %v5590
      %v5593 = vshrl.u32 %v5522, 16
      %v5595 = vrot.slane %v5593, 4
      %v5596 = vshll.u32 %v5522, 16
      %v5598 = vrot.slane %v5596, 5
      %v5599 = vor.u32 %v5595, %v5598
      %v5600 = vrot.slane %v5599, 4
      %v5602 = vshll.u32 %v5523, 16
      %v5604 = vrot.slane %v5602, 5
      %v5605 = vsel %vm805, %v5600, %v5604
      %v5606 = vshrl.u32 %v5523, 16
      %v5608 = vrot.slane %v5606, 4
      %v5609 = vor.u32 %v5608, %v5604
      %v5610 = vrot.slane %v5609, 4
      %v5612 = vshll.u32 %v5553, 16
      %v5614 = vrot.slane %v5612, 5
      %v5615 = vsel %vm805, %v5610, %v5614
      %v5617 = vshrl.u32 %v5524, 16
      %v5619 = vrot.slane %v5617, 4
      %v5620 = vshll.u32 %v5524, 16
      %v5622 = vrot.slane %v5620, 5
      %v5623 = vor.u32 %v5619, %v5622
      %v5624 = vrot.slane %v5623, 4
      %v5626 = vshll.u32 %v5525, 16
      %v5628 = vrot.slane %v5626, 5
      %v5629 = vsel %vm805, %v5624, %v5628
      %v5630 = vshrl.u32 %v5525, 16
      %v5632 = vrot.slane %v5630, 4
      %v5633 = vor.u32 %v5632, %v5628
      %v5634 = vrot.slane %v5633, 4
      %v5636 = vshll.u32 %v5554, 16
      %v5638 = vrot.slane %v5636, 5
      %v5639 = vsel %vm805, %v5634, %v5638
      %v5641 = vshrl.u32 %v5526, 16
      %v5643 = vrot.slane %v5641, 4
      %v5644 = vshll.u32 %v5526, 16
      %v5646 = vrot.slane %v5644, 5
      %v5647 = vor.u32 %v5643, %v5646
      %v5648 = vrot.slane %v5647, 4
      %v5650 = vshll.u32 %v5527, 16
      %v5652 = vrot.slane %v5650, 5
      %v5653 = vsel %vm805, %v5648, %v5652
      %v5654 = vshrl.u32 %v5527, 16
      %v5656 = vrot.slane %v5654, 4
      %v5657 = vor.u32 %v5656, %v5652
      %v5658 = vrot.slane %v5657, 4
      %v5660 = vshll.u32 %v5555, 16
      %v5662 = vrot.slane %v5660, 5
      %v5663 = vsel %vm805, %v5658, %v5662
      %v5665 = vshrl.u32 %v5528, 16
      %v5667 = vrot.slane %v5665, 4
      %v5668 = vshll.u32 %v5528, 16
      %v5670 = vrot.slane %v5668, 5
      %v5671 = vor.u32 %v5667, %v5670
      %v5672 = vrot.slane %v5671, 4
      %v5674 = vshll.u32 %v5529, 16
      %v5676 = vrot.slane %v5674, 5
      %v5677 = vsel %vm805, %v5672, %v5676
      %v5678 = vshrl.u32 %v5529, 16
      %v5680 = vrot.slane %v5678, 4
      %v5681 = vor.u32 %v5680, %v5676
      %v5682 = vrot.slane %v5681, 4
      %v5684 = vshll.u32 %v5556, 16
      %v5686 = vrot.slane %v5684, 5
      %v5687 = vsel %vm805, %v5682, %v5686
      %v5689 = vshrl.u32 %v5530, 16
      %v5691 = vrot.slane %v5689, 4
      %v5692 = vshll.u32 %v5530, 16
      %v5694 = vrot.slane %v5692, 5
      %v5695 = vor.u32 %v5691, %v5694
      %v5696 = vrot.slane %v5695, 4
      %v5698 = vshll.u32 %v5531, 16
      %v5700 = vrot.slane %v5698, 5
      %v5701 = vsel %vm805, %v5696, %v5700
      %v5702 = vshrl.u32 %v5531, 16
      %v5704 = vrot.slane %v5702, 4
      %v5705 = vor.u32 %v5704, %v5700
      %v5706 = vrot.slane %v5705, 4
      %v5708 = vshll.u32 %v5557, 16
      %v5710 = vrot.slane %v5708, 5
      %v5711 = vsel %vm805, %v5706, %v5710
      %v5713 = vshrl.u32 %v5532, 16
      %v5715 = vrot.slane %v5713, 4
      %v5716 = vshll.u32 %v5532, 16
      %v5718 = vrot.slane %v5716, 5
      %v5719 = vor.u32 %v5715, %v5718
      %v5720 = vrot.slane %v5719, 4
      %v5722 = vshll.u32 %v5533, 16
      %v5724 = vrot.slane %v5722, 5
      %v5725 = vsel %vm805, %v5720, %v5724
      %v5726 = vshrl.u32 %v5533, 16
      %v5728 = vrot.slane %v5726, 4
      %v5729 = vor.u32 %v5728, %v5724
      %v5730 = vrot.slane %v5729, 4
      %v5732 = vshll.u32 %v5558, 16
      %v5734 = vrot.slane %v5732, 5
      %v5735 = vsel %vm805, %v5730, %v5734
      %v5737 = vshrl.u32 %v5534, 16
      %v5739 = vrot.slane %v5737, 4
      %v5740 = vshll.u32 %v5534, 16
      %v5742 = vrot.slane %v5740, 5
      %v5743 = vor.u32 %v5739, %v5742
      %v5744 = vrot.slane %v5743, 4
      %v5746 = vshll.u32 %v5535, 16
      %v5748 = vrot.slane %v5746, 5
      %v5749 = vsel %vm805, %v5744, %v5748
      %v5750 = vshrl.u32 %v5535, 16
      %v5752 = vrot.slane %v5750, 4
      %v5753 = vor.u32 %v5752, %v5748
      %v5754 = vrot.slane %v5753, 4
      %v5756 = vshll.u32 %v5559, 16
      %v5758 = vrot.slane %v5756, 5
      %v5759 = vsel %vm805, %v5754, %v5758
      %v5761 = vshrl.u32 %v5536, 16
      %v5763 = vrot.slane %v5761, 4
      %v5764 = vshll.u32 %v5536, 16
      %v5766 = vrot.slane %v5764, 5
      %v5767 = vor.u32 %v5763, %v5766
      %v5768 = vrot.slane %v5767, 4
      %v5770 = vshll.u32 %v5537, 16
      %v5772 = vrot.slane %v5770, 5
      %v5773 = vsel %vm805, %v5768, %v5772
      %v5774 = vshrl.u32 %v5537, 16
      %v5776 = vrot.slane %v5774, 4
      %v5777 = vor.u32 %v5776, %v5772
      %v5778 = vrot.slane %v5777, 4
      %v5780 = vshll.u32 %v5560, 16
      %v5782 = vrot.slane %v5780, 5
      %v5783 = vsel %vm805, %v5778, %v5782
      %v5785 = vshrl.u32 %v5538, 16
      %v5787 = vrot.slane %v5785, 4
      %v5788 = vshll.u32 %v5538, 16
      %v5790 = vrot.slane %v5788, 5
      %v5791 = vor.u32 %v5787, %v5790
      %v5792 = vrot.slane %v5791, 4
      %v5794 = vshll.u32 %v5539, 16
      %v5796 = vrot.slane %v5794, 5
      %v5797 = vsel %vm805, %v5792, %v5796
      %v5798 = vshrl.u32 %v5539, 16
      %v5800 = vrot.slane %v5798, 4
      %v5801 = vor.u32 %v5800, %v5796
      %v5802 = vrot.slane %v5801, 4
      %v5804 = vshll.u32 %v5561, 16
      %v5806 = vrot.slane %v5804, 5
      %v5807 = vsel %vm805, %v5802, %v5806
      %v5809 = vshrl.u32 %v5540, 16
      %v5811 = vrot.slane %v5809, 4
      %v5812 = vshll.u32 %v5540, 16
      %v5814 = vrot.slane %v5812, 5
      %v5815 = vor.u32 %v5811, %v5814
      %v5816 = vrot.slane %v5815, 4
      %v5818 = vshll.u32 %v5541, 16
      %v5820 = vrot.slane %v5818, 5
      %v5821 = vsel %vm805, %v5816, %v5820
      %v5822 = vshrl.u32 %v5541, 16
      %v5824 = vrot.slane %v5822, 4
      %v5825 = vor.u32 %v5824, %v5820
      %v5826 = vrot.slane %v5825, 4
      %v5828 = vshll.u32 %v5562, 16
      %v5830 = vrot.slane %v5828, 5
      %v5831 = vsel %vm805, %v5826, %v5830
      %v5833 = vshrl.u32 %v5542, 16
      %v5835 = vrot.slane %v5833, 4
      %v5836 = vshll.u32 %v5542, 16
      %v5838 = vrot.slane %v5836, 5
      %v5839 = vor.u32 %v5835, %v5838
      %v5840 = vrot.slane %v5839, 4
      %v5842 = vshll.u32 %v5543, 16
      %v5844 = vrot.slane %v5842, 5
      %v5845 = vsel %vm805, %v5840, %v5844
      %v5846 = vshrl.u32 %v5543, 16
      %v5848 = vrot.slane %v5846, 4
      %v5849 = vor.u32 %v5848, %v5844
      %v5850 = vrot.slane %v5849, 4
      %v5852 = vshll.u32 %v5563, 16
      %v5854 = vrot.slane %v5852, 5
      %v5855 = vsel %vm805, %v5850, %v5854
      %v5857 = vshrl.u32 %v5544, 16
      %v5859 = vrot.slane %v5857, 4
      %v5860 = vshll.u32 %v5544, 16
      %v5862 = vrot.slane %v5860, 5
      %v5863 = vor.u32 %v5859, %v5862
      %v5864 = vrot.slane %v5863, 4
      %v5866 = vshll.u32 %v5545, 16
      %v5868 = vrot.slane %v5866, 5
      %v5869 = vsel %vm805, %v5864, %v5868
      %v5870 = vshrl.u32 %v5545, 16
      %v5872 = vrot.slane %v5870, 4
      %v5873 = vor.u32 %v5872, %v5868
      %v5874 = vrot.slane %v5873, 4
      %v5876 = vshll.u32 %v5564, 16
      %v5878 = vrot.slane %v5876, 5
      %v5879 = vsel %vm805, %v5874, %v5878
      %v5881 = vshrl.u32 %v5546, 16
      %v5883 = vrot.slane %v5881, 4
      %v5884 = vshll.u32 %v5546, 16
      %v5886 = vrot.slane %v5884, 5
      %v5887 = vor.u32 %v5883, %v5886
      %v5888 = vrot.slane %v5887, 4
      %v5890 = vshll.u32 %v5547, 16
      %v5892 = vrot.slane %v5890, 5
      %v5893 = vsel %vm805, %v5888, %v5892
      %v5894 = vshrl.u32 %v5547, 16
      %v5896 = vrot.slane %v5894, 4
      %v5897 = vor.u32 %v5896, %v5892
      %v5898 = vrot.slane %v5897, 4
      %v5900 = vshll.u32 %v5565, 16
      %v5902 = vrot.slane %v5900, 5
      %v5903 = vsel %vm805, %v5898, %v5902
      %v5905 = vshrl.u32 %v5548, 16
      %v5907 = vrot.slane %v5905, 4
      %v5908 = vshll.u32 %v5548, 16
      %v5910 = vrot.slane %v5908, 5
      %v5911 = vor.u32 %v5907, %v5910
      %v5912 = vrot.slane %v5911, 4
      %v5914 = vshll.u32 %v5549, 16
      %v5916 = vrot.slane %v5914, 5
      %v5917 = vsel %vm805, %v5912, %v5916
      %v5918 = vshrl.u32 %v5549, 16
      %v5920 = vrot.slane %v5918, 4
      %v5921 = vor.u32 %v5920, %v5916
      %v5922 = vrot.slane %v5921, 4
      %v5924 = vshll.u32 %v5566, 16
      %v5926 = vrot.slane %v5924, 5
      %v5927 = vsel %vm805, %v5922, %v5926
      %v5929 = vshrl.u32 %v5550, 16
      %v5931 = vrot.slane %v5929, 4
      %v5932 = vshll.u32 %v5550, 16
      %v5934 = vrot.slane %v5932, 5
      %v5935 = vor.u32 %v5931, %v5934
      %v5936 = vrot.slane %v5935, 4
      %v5938 = vshll.u32 %v5551, 16
      %v5940 = vrot.slane %v5938, 5
      %v5941 = vsel %vm805, %v5936, %v5940
      %v5942 = vshrl.u32 %v5551, 16
      %v5944 = vrot.slane %v5942, 4
      %v5945 = vor.u32 %v5944, %v5940
      %v5946 = vrot.slane %v5945, 4
      %v5948 = vshll.u32 %v5567, 16
      %v5950 = vrot.slane %v5948, 5
      %v5951 = vsel %vm805, %v5946, %v5950
      %v5952 = vld [vmem:[%s5519] sm:$0xe]
      %v5953 = vld [vmem:[%s5519 + $0xc] sm:$0xe]
      %v5954 = vld [vmem:[%s5519 + $0x18] sm:$0xe]
      %v5955 = vld [vmem:[%s5519 + $0x24] sm:$0xe]
      %v5956 = vld [vmem:[%s5519 + $0x30] sm:$0xe]
      %v5957 = vld [vmem:[%s5519 + $0x3c] sm:$0xe]
      %v5958 = vld [vmem:[%s5519 + $0x48] sm:$0xe]
      %v5959 = vld [vmem:[%s5519 + $0x54] sm:$0xe]
      %v5960 = vld [vmem:[%s5519 + $0x60] sm:$0xe]
      %v5961 = vld [vmem:[%s5519 + $0x6c] sm:$0xe]
      %v5962 = vld [vmem:[%s5519 + $0x78] sm:$0xe]
      %v5963 = vld [vmem:[%s5519 + $0x84] sm:$0xe]
      %v5964 = vld [vmem:[%s5519 + $0x90] sm:$0xe]
      %v5965 = vld [vmem:[%s5519 + $0x9c] sm:$0xe]
      %v5966 = vld [vmem:[%s5519 + $0xa8] sm:$0xe]
      %v5967 = vld [vmem:[%s5519 + $0xb4] sm:$0xe]
      %v6016 = vrot.slane %v5952, 5
      %v6017 = vrot.slane %v6016, 4
      %v6018 = vrot.slane %v5521, 5
      %v6019 = vsel %vm1256, %v6017, %v6018
      %v6020 = vrot.slane %v6018, 4
      %v6021 = vrot.slane %v5552, 5
      %v6022 = vsel %vm1256, %v6020, %v6021
      %v6023 = vrot.slane %v5953, 5
      %v6024 = vrot.slane %v6023, 4
      %v6025 = vrot.slane %v5523, 5
      %v6026 = vsel %vm1256, %v6024, %v6025
      %v6027 = vrot.slane %v6025, 4
      %v6028 = vrot.slane %v5553, 5
      %v6029 = vsel %vm1256, %v6027, %v6028
      %v6030 = vrot.slane %v5954, 5
      %v6031 = vrot.slane %v6030, 4
      %v6032 = vrot.slane %v5525, 5
      %v6033 = vsel %vm1256, %v6031, %v6032
      %v6034 = vrot.slane %v6032, 4
      %v6035 = vrot.slane %v5554, 5
      %v6036 = vsel %vm1256, %v6034, %v6035
      %v6037 = vrot.slane %v5955, 5
      %v6038 = vrot.slane %v6037, 4
      %v6039 = vrot.slane %v5527, 5
      %v6040 = vsel %vm1256, %v6038, %v6039
      %v6041 = vrot.slane %v6039, 4
      %v6042 = vrot.slane %v5555, 5
      %v6043 = vsel %vm1256, %v6041, %v6042
      %v6044 = vrot.slane %v5956, 5
      %v6045 = vrot.slane %v6044, 4
      %v6046 = vrot.slane %v5529, 5
      %v6047 = vsel %vm1256, %v6045, %v6046
      %v6048 = vrot.slane %v6046, 4
      %v6049 = vrot.slane %v5556, 5
      %v6050 = vsel %vm1256, %v6048, %v6049
      %v6051 = vrot.slane %v5957, 5
      %v6052 = vrot.slane %v6051, 4
      %v6053 = vrot.slane %v5531, 5
      %v6054 = vsel %vm1256, %v6052, %v6053
      %v6055 = vrot.slane %v6053, 4
      %v6056 = vrot.slane %v5557, 5
      %v6057 = vsel %vm1256, %v6055, %v6056
      %v6058 = vrot.slane %v5958, 5
      %v6059 = vrot.slane %v6058, 4
      %v6060 = vrot.slane %v5533, 5
      %v6061 = vsel %vm1256, %v6059, %v6060
      %v6062 = vrot.slane %v6060, 4
      %v6063 = vrot.slane %v5558, 5
      %v6064 = vsel %vm1256, %v6062, %v6063
      %v6065 = vrot.slane %v5959, 5
      %v6066 = vrot.slane %v6065, 4
      %v6067 = vrot.slane %v5535, 5
      %v6068 = vsel %vm1256, %v6066, %v6067
      %v6069 = vrot.slane %v6067, 4
      %v6070 = vrot.slane %v5559, 5
      %v6071 = vsel %vm1256, %v6069, %v6070
      %v6072 = vrot.slane %v5960, 5
      %v6073 = vrot.slane %v6072, 4
      %v6074 = vrot.slane %v5537, 5
      %v6075 = vsel %vm1256, %v6073, %v6074
      %v6076 = vrot.slane %v6074, 4
      %v6077 = vrot.slane %v5560, 5
      %v6078 = vsel %vm1256, %v6076, %v6077
      %v6079 = vrot.slane %v5961, 5
      %v6080 = vrot.slane %v6079, 4
      %v6081 = vrot.slane %v5539, 5
      %v6082 = vsel %vm1256, %v6080, %v6081
      %v6083 = vrot.slane %v6081, 4
      %v6084 = vrot.slane %v5561, 5
      %v6085 = vsel %vm1256, %v6083, %v6084
      %v6086 = vrot.slane %v5962, 5
      %v6087 = vrot.slane %v6086, 4
      %v6088 = vrot.slane %v5541, 5
      %v6089 = vsel %vm1256, %v6087, %v6088
      %v6090 = vrot.slane %v6088, 4
      %v6091 = vrot.slane %v5562, 5
      %v6092 = vsel %vm1256, %v6090, %v6091
      %v6093 = vrot.slane %v5963, 5
      %v6094 = vrot.slane %v6093, 4
      %v6095 = vrot.slane %v5543, 5
      %v6096 = vsel %vm1256, %v6094, %v6095
      %v6097 = vrot.slane %v6095, 4
      %v6098 = vrot.slane %v5563, 5
      %v6099 = vsel %vm1256, %v6097, %v6098
      %v6100 = vrot.slane %v5964, 5
      %v6101 = vrot.slane %v6100, 4
      %v6102 = vrot.slane %v5545, 5
      %v6103 = vsel %vm1256, %v6101, %v6102
      %v6104 = vrot.slane %v6102, 4
      %v6105 = vrot.slane %v5564, 5
      %v6106 = vsel %vm1256, %v6104, %v6105
      %v6107 = vrot.slane %v5965, 5
      %v6108 = vrot.slane %v6107, 4
      %v6109 = vrot.slane %v5547, 5
      %v6110 = vsel %vm1256, %v6108, %v6109
      %v6111 = vrot.slane %v6109, 4
      %v6112 = vrot.slane %v5565, 5
      %v6113 = vsel %vm1256, %v6111, %v6112
      %v6114 = vrot.slane %v5966, 5
      %v6115 = vrot.slane %v6114, 4
      %v6116 = vrot.slane %v5549, 5
      %v6117 = vsel %vm1256, %v6115, %v6116
      %v6118 = vrot.slane %v6116, 4
      %v6119 = vrot.slane %v5566, 5
      %v6120 = vsel %vm1256, %v6118, %v6119
      %v6121 = vrot.slane %v5967, 5
      %v6122 = vrot.slane %v6121, 4
      %v6123 = vrot.slane %v5551, 5
      %v6124 = vsel %vm1256, %v6122, %v6123
      %v6125 = vrot.slane %v6123, 4
      %v6126 = vrot.slane %v5567, 5
      %v6127 = vsel %vm1256, %v6125, %v6126
      %v6144 = vunpack.c.l.b16 %v4303
      %v6145 = vunpack.c.l.b16 %v4304
      %v6146 = vunpack.c.l.b16 %v4305
      %v6147 = vunpack.c.l.b16 %v4306
      %v6148 = vunpack.c.l.b16 %v4307
      %v6149 = vunpack.c.l.b16 %v4308
      %v6150 = vunpack.c.l.b16 %v4309
      %v6151 = vunpack.c.l.b16 %v4310
      %v6152 = vunpack.c.l.b16 %v4311
      %v6153 = vunpack.c.l.b16 %v4312
      %v6154 = vunpack.c.l.b16 %v4313
      %v6155 = vunpack.c.l.b16 %v4314
      %v6156 = vunpack.c.l.b16 %v4315
      %v6157 = vunpack.c.l.b16 %v4316
      %v6158 = vunpack.c.l.b16 %v4317
      %v6159 = vunpack.c.l.b16 %v4318
      %v6160 = vunpack.c.l.b16 %v4319
      %v6161 = vunpack.c.l.b16 %v4320
      %v6162 = vunpack.c.l.b16 %v4321
      %v6163 = vunpack.c.l.b16 %v4322
      %v6164 = vunpack.c.l.b16 %v4323
      %v6165 = vunpack.c.l.b16 %v4324
      %v6166 = vunpack.c.l.b16 %v4325
      %v6167 = vunpack.c.l.b16 %v4326
      %v6168 = vunpack.c.l.b16 %v4327
      %v6169 = vunpack.c.l.b16 %v4328
      %v6170 = vunpack.c.l.b16 %v4329
      %v6171 = vunpack.c.l.b16 %v4330
      %v6172 = vunpack.c.l.b16 %v4331
      %v6173 = vunpack.c.l.b16 %v4332
      %v6174 = vunpack.c.l.b16 %v4333
      %v6175 = vunpack.c.l.b16 %v4334
      %v6176 = vpack.c.b16 %v6145, %v6144
      %v6177 = vpack.c.b16 %v6147, %v6146
      %v6178 = vpack.c.b16 %v6149, %v6148
      %v6179 = vpack.c.b16 %v6151, %v6150
      %v6180 = vpack.c.b16 %v6153, %v6152
      %v6181 = vpack.c.b16 %v6155, %v6154
      %v6182 = vpack.c.b16 %v6157, %v6156
      %v6183 = vpack.c.b16 %v6159, %v6158
      %v6184 = vpack.c.b16 %v6161, %v6160
      %v6185 = vpack.c.b16 %v6163, %v6162
      %v6186 = vpack.c.b16 %v6165, %v6164
      %v6187 = vpack.c.b16 %v6167, %v6166
      %v6188 = vpack.c.b16 %v6169, %v6168
      %v6189 = vpack.c.b16 %v6171, %v6170
      %v6190 = vpack.c.b16 %v6173, %v6172
      %v6191 = vpack.c.b16 %v6175, %v6174
      %v6192 = vunpack.c.l.b16 %v4364
      %v6193 = vunpack.c.l.b16 %v4374
      %v6194 = vunpack.c.l.b16 %v4388
      %v6195 = vunpack.c.l.b16 %v4398
      %v6196 = vunpack.c.l.b16 %v4412
      %v6197 = vunpack.c.l.b16 %v4422
      %v6198 = vunpack.c.l.b16 %v4436
      %v6199 = vunpack.c.l.b16 %v4446
      %v6200 = vunpack.c.l.b16 %v4460
      %v6201 = vunpack.c.l.b16 %v4470
      %v6202 = vunpack.c.l.b16 %v4484
      %v6203 = vunpack.c.l.b16 %v4494
      %v6204 = vunpack.c.l.b16 %v4508
      %v6205 = vunpack.c.l.b16 %v4518
      %v6206 = vunpack.c.l.b16 %v4532
      %v6207 = vunpack.c.l.b16 %v4542
      %v6208 = vunpack.c.l.b16 %v4556
      %v6209 = vunpack.c.l.b16 %v4566
      %v6210 = vunpack.c.l.b16 %v4580
      %v6211 = vunpack.c.l.b16 %v4590
      %v6212 = vunpack.c.l.b16 %v4604
      %v6213 = vunpack.c.l.b16 %v4614
      %v6214 = vunpack.c.l.b16 %v4628
      %v6215 = vunpack.c.l.b16 %v4638
      %v6216 = vunpack.c.l.b16 %v4652
      %v6217 = vunpack.c.l.b16 %v4662
      %v6218 = vunpack.c.l.b16 %v4676
      %v6219 = vunpack.c.l.b16 %v4686
      %v6220 = vunpack.c.l.b16 %v4700
      %v6221 = vunpack.c.l.b16 %v4710
      %v6222 = vunpack.c.l.b16 %v4724
      %v6223 = vunpack.c.l.b16 %v4734
      %v6224 = vpack.c.b16 %v6193, %v6192
      %v6225 = vpack.c.b16 %v6195, %v6194
      %v6226 = vpack.c.b16 %v6197, %v6196
      %v6227 = vpack.c.b16 %v6199, %v6198
      %v6228 = vpack.c.b16 %v6201, %v6200
      %v6229 = vpack.c.b16 %v6203, %v6202
      %v6230 = vpack.c.b16 %v6205, %v6204
      %v6231 = vpack.c.b16 %v6207, %v6206
      %v6232 = vpack.c.b16 %v6209, %v6208
      %v6233 = vpack.c.b16 %v6211, %v6210
      %v6234 = vpack.c.b16 %v6213, %v6212
      %v6235 = vpack.c.b16 %v6215, %v6214
      %v6236 = vpack.c.b16 %v6217, %v6216
      %v6237 = vpack.c.b16 %v6219, %v6218
      %v6238 = vpack.c.b16 %v6221, %v6220
      %v6239 = vpack.c.b16 %v6223, %v6222
      %6240 = vrot.lane.b32.xlu0 %v6224, 4
      %v6241 = vpop.permute.xlu0 %6240
      %6242 = vrot.lane.b32.xlu0 %v6225, 4
      %v6243 = vpop.permute.xlu0 %6242
      %6244 = vrot.lane.b32.xlu0 %v6226, 4
      %v6245 = vpop.permute.xlu0 %6244
      %6246 = vrot.lane.b32.xlu0 %v6227, 4
      %v6247 = vpop.permute.xlu0 %6246
      %6248 = vrot.lane.b32.xlu0 %v6228, 4
      %v6249 = vpop.permute.xlu0 %6248
      %6250 = vrot.lane.b32.xlu0 %v6229, 4
      %v6251 = vpop.permute.xlu0 %6250
      %6252 = vrot.lane.b32.xlu0 %v6230, 4
      %v6253 = vpop.permute.xlu0 %6252
      %6254 = vrot.lane.b32.xlu0 %v6231, 4
      %v6255 = vpop.permute.xlu0 %6254
      %6256 = vrot.lane.b32.xlu0 %v6232, 4
      %v6257 = vpop.permute.xlu0 %6256
      %6258 = vrot.lane.b32.xlu0 %v6233, 4
      %v6259 = vpop.permute.xlu0 %6258
      %6260 = vrot.lane.b32.xlu0 %v6234, 4
      %v6261 = vpop.permute.xlu0 %6260
      %6262 = vrot.lane.b32.xlu0 %v6235, 4
      %v6263 = vpop.permute.xlu0 %6262
      %6264 = vrot.lane.b32.xlu0 %v6236, 4
      %v6265 = vpop.permute.xlu0 %6264
      %6266 = vrot.lane.b32.xlu0 %v6237, 4
      %v6267 = vpop.permute.xlu0 %6266
      %6268 = vrot.lane.b32.xlu0 %v6238, 4
      %v6269 = vpop.permute.xlu0 %6268
      %6270 = vrot.lane.b32.xlu0 %v6239, 4
      %v6271 = vpop.permute.xlu0 %6270
      %v6272 = vunpack.c.l.b16 %v4802
      %v6273 = vunpack.c.l.b16 %v4805
      %v6274 = vunpack.c.l.b16 %v4809
      %v6275 = vunpack.c.l.b16 %v4812
      %v6276 = vunpack.c.l.b16 %v4816
      %v6277 = vunpack.c.l.b16 %v4819
      %v6278 = vunpack.c.l.b16 %v4823
      %v6279 = vunpack.c.l.b16 %v4826
      %v6280 = vunpack.c.l.b16 %v4830
      %v6281 = vunpack.c.l.b16 %v4833
      %v6282 = vunpack.c.l.b16 %v4837
      %v6283 = vunpack.c.l.b16 %v4840
      %v6284 = vunpack.c.l.b16 %v4844
      %v6285 = vunpack.c.l.b16 %v4847
      %v6286 = vunpack.c.l.b16 %v4851
      %v6287 = vunpack.c.l.b16 %v4854
      %v6288 = vunpack.c.l.b16 %v4858
      %v6289 = vunpack.c.l.b16 %v4861
      %v6290 = vunpack.c.l.b16 %v4865
      %v6291 = vunpack.c.l.b16 %v4868
      %v6292 = vunpack.c.l.b16 %v4872
      %v6293 = vunpack.c.l.b16 %v4875
      %v6294 = vunpack.c.l.b16 %v4879
      %v6295 = vunpack.c.l.b16 %v4882
      %v6296 = vunpack.c.l.b16 %v4886
      %v6297 = vunpack.c.l.b16 %v4889
      %v6298 = vunpack.c.l.b16 %v4893
      %v6299 = vunpack.c.l.b16 %v4896
      %v6300 = vunpack.c.l.b16 %v4900
      %v6301 = vunpack.c.l.b16 %v4903
      %v6302 = vunpack.c.l.b16 %v4907
      %v6303 = vunpack.c.l.b16 %v4910
      %v6304 = vpack.c.b16 %v6273, %v6272
      %v6305 = vpack.c.b16 %v6275, %v6274
      %v6306 = vpack.c.b16 %v6277, %v6276
      %v6307 = vpack.c.b16 %v6279, %v6278
      %v6308 = vpack.c.b16 %v6281, %v6280
      %v6309 = vpack.c.b16 %v6283, %v6282
      %v6310 = vpack.c.b16 %v6285, %v6284
      %v6311 = vpack.c.b16 %v6287, %v6286
      %v6312 = vpack.c.b16 %v6289, %v6288
      %v6313 = vpack.c.b16 %v6291, %v6290
      %v6314 = vpack.c.b16 %v6293, %v6292
      %v6315 = vpack.c.b16 %v6295, %v6294
      %v6316 = vpack.c.b16 %v6297, %v6296
      %v6317 = vpack.c.b16 %v6299, %v6298
      %v6318 = vpack.c.b16 %v6301, %v6300
      %v6319 = vpack.c.b16 %v6303, %v6302
      %6320 = vrot.lane.b32.xlu0 %v6304, 8
      %v6321 = vpop.permute.xlu0 %6320
      %6322 = vrot.lane.b32.xlu0 %v6305, 8
      %v6323 = vpop.permute.xlu0 %6322
      %6324 = vrot.lane.b32.xlu0 %v6306, 8
      %v6325 = vpop.permute.xlu0 %6324
      %6326 = vrot.lane.b32.xlu0 %v6307, 8
      %v6327 = vpop.permute.xlu0 %6326
      %6328 = vrot.lane.b32.xlu0 %v6308, 8
      %v6329 = vpop.permute.xlu0 %6328
      %6330 = vrot.lane.b32.xlu0 %v6309, 8
      %v6331 = vpop.permute.xlu0 %6330
      %6332 = vrot.lane.b32.xlu0 %v6310, 8
      %v6333 = vpop.permute.xlu0 %6332
      %6334 = vrot.lane.b32.xlu0 %v6311, 8
      %v6335 = vpop.permute.xlu0 %6334
      %6336 = vrot.lane.b32.xlu0 %v6312, 8
      %v6337 = vpop.permute.xlu0 %6336
      %6338 = vrot.lane.b32.xlu0 %v6313, 8
      %v6339 = vpop.permute.xlu0 %6338
      %6340 = vrot.lane.b32.xlu0 %v6314, 8
      %v6341 = vpop.permute.xlu0 %6340
      %6342 = vrot.lane.b32.xlu0 %v6315, 8
      %v6343 = vpop.permute.xlu0 %6342
      %6344 = vrot.lane.b32.xlu0 %v6316, 8
      %v6345 = vpop.permute.xlu0 %6344
      %6346 = vrot.lane.b32.xlu0 %v6317, 8
      %v6347 = vpop.permute.xlu0 %6346
      %6348 = vrot.lane.b32.xlu0 %v6318, 8
      %v6349 = vpop.permute.xlu0 %6348
      %6350 = vrot.lane.b32.xlu0 %v6319, 8
      %v6351 = vpop.permute.xlu0 %6350
      %v6368 = vunpack.c.l.b16 %v4911
      %v6369 = vunpack.c.l.b16 %v4912
      %v6370 = vunpack.c.l.b16 %v4913
      %v6371 = vunpack.c.l.b16 %v4914
      %v6372 = vunpack.c.l.b16 %v4915
      %v6373 = vunpack.c.l.b16 %v4916
      %v6374 = vunpack.c.l.b16 %v4917
      %v6375 = vunpack.c.l.b16 %v4918
      %v6376 = vunpack.c.l.b16 %v4919
      %v6377 = vunpack.c.l.b16 %v4920
      %v6378 = vunpack.c.l.b16 %v4921
      %v6379 = vunpack.c.l.b16 %v4922
      %v6380 = vunpack.c.l.b16 %v4923
      %v6381 = vunpack.c.l.b16 %v4924
      %v6382 = vunpack.c.l.b16 %v4925
      %v6383 = vunpack.c.l.b16 %v4926
      %v6384 = vunpack.c.l.b16 %v4927
      %v6385 = vunpack.c.l.b16 %v4928
      %v6386 = vunpack.c.l.b16 %v4929
      %v6387 = vunpack.c.l.b16 %v4930
      %v6388 = vunpack.c.l.b16 %v4931
      %v6389 = vunpack.c.l.b16 %v4932
      %v6390 = vunpack.c.l.b16 %v4933
      %v6391 = vunpack.c.l.b16 %v4934
      %v6392 = vunpack.c.l.b16 %v4935
      %v6393 = vunpack.c.l.b16 %v4936
      %v6394 = vunpack.c.l.b16 %v4937
      %v6395 = vunpack.c.l.b16 %v4938
      %v6396 = vunpack.c.l.b16 %v4939
      %v6397 = vunpack.c.l.b16 %v4940
      %v6398 = vunpack.c.l.b16 %v4941
      %v6399 = vunpack.c.l.b16 %v4942
      %v6400 = vpack.c.b16 %v6369, %v6368
      %v6401 = vpack.c.b16 %v6371, %v6370
      %v6402 = vpack.c.b16 %v6373, %v6372
      %v6403 = vpack.c.b16 %v6375, %v6374
      %v6404 = vpack.c.b16 %v6377, %v6376
      %v6405 = vpack.c.b16 %v6379, %v6378
      %v6406 = vpack.c.b16 %v6381, %v6380
      %v6407 = vpack.c.b16 %v6383, %v6382
      %v6408 = vpack.c.b16 %v6385, %v6384
      %v6409 = vpack.c.b16 %v6387, %v6386
      %v6410 = vpack.c.b16 %v6389, %v6388
      %v6411 = vpack.c.b16 %v6391, %v6390
      %v6412 = vpack.c.b16 %v6393, %v6392
      %v6413 = vpack.c.b16 %v6395, %v6394
      %v6414 = vpack.c.b16 %v6397, %v6396
      %v6415 = vpack.c.b16 %v6399, %v6398
      %6416 = vrot.lane.b32.xlu0 %v6400, 12
      %v6417 = vpop.permute.xlu0 %6416
      %6418 = vrot.lane.b32.xlu0 %v6401, 12
      %v6419 = vpop.permute.xlu0 %6418
      %6420 = vrot.lane.b32.xlu0 %v6402, 12
      %v6421 = vpop.permute.xlu0 %6420
      %6422 = vrot.lane.b32.xlu0 %v6403, 12
      %v6423 = vpop.permute.xlu0 %6422
      %6424 = vrot.lane.b32.xlu0 %v6404, 12
      %v6425 = vpop.permute.xlu0 %6424
      %6426 = vrot.lane.b32.xlu0 %v6405, 12
      %v6427 = vpop.permute.xlu0 %6426
      %6428 = vrot.lane.b32.xlu0 %v6406, 12
      %v6429 = vpop.permute.xlu0 %6428
      %6430 = vrot.lane.b32.xlu0 %v6407, 12
      %v6431 = vpop.permute.xlu0 %6430
      %6432 = vrot.lane.b32.xlu0 %v6408, 12
      %v6433 = vpop.permute.xlu0 %6432
      %6434 = vrot.lane.b32.xlu0 %v6409, 12
      %v6435 = vpop.permute.xlu0 %6434
      %6436 = vrot.lane.b32.xlu0 %v6410, 12
      %v6437 = vpop.permute.xlu0 %6436
      %6438 = vrot.lane.b32.xlu0 %v6411, 12
      %v6439 = vpop.permute.xlu0 %6438
      %6440 = vrot.lane.b32.xlu0 %v6412, 12
      %v6441 = vpop.permute.xlu0 %6440
      %6442 = vrot.lane.b32.xlu0 %v6413, 12
      %v6443 = vpop.permute.xlu0 %6442
      %6444 = vrot.lane.b32.xlu0 %v6414, 12
      %v6445 = vpop.permute.xlu0 %6444
      %6446 = vrot.lane.b32.xlu0 %v6415, 12
      %v6447 = vpop.permute.xlu0 %6446
      %v6448 = vunpack.c.l.b16 %v4972
      %v6449 = vunpack.c.l.b16 %v4982
      %v6450 = vunpack.c.l.b16 %v4996
      %v6451 = vunpack.c.l.b16 %v5006
      %v6452 = vunpack.c.l.b16 %v5020
      %v6453 = vunpack.c.l.b16 %v5030
      %v6454 = vunpack.c.l.b16 %v5044
      %v6455 = vunpack.c.l.b16 %v5054
      %v6456 = vunpack.c.l.b16 %v5068
      %v6457 = vunpack.c.l.b16 %v5078
      %v6458 = vunpack.c.l.b16 %v5092
      %v6459 = vunpack.c.l.b16 %v5102
      %v6460 = vunpack.c.l.b16 %v5116
      %v6461 = vunpack.c.l.b16 %v5126
      %v6462 = vunpack.c.l.b16 %v5140
      %v6463 = vunpack.c.l.b16 %v5150
      %v6464 = vunpack.c.l.b16 %v5164
      %v6465 = vunpack.c.l.b16 %v5174
      %v6466 = vunpack.c.l.b16 %v5188
      %v6467 = vunpack.c.l.b16 %v5198
      %v6468 = vunpack.c.l.b16 %v5212
      %v6469 = vunpack.c.l.b16 %v5222
      %v6470 = vunpack.c.l.b16 %v5236
      %v6471 = vunpack.c.l.b16 %v5246
      %v6472 = vunpack.c.l.b16 %v5260
      %v6473 = vunpack.c.l.b16 %v5270
      %v6474 = vunpack.c.l.b16 %v5284
      %v6475 = vunpack.c.l.b16 %v5294
      %v6476 = vunpack.c.l.b16 %v5308
      %v6477 = vunpack.c.l.b16 %v5318
      %v6478 = vunpack.c.l.b16 %v5332
      %v6479 = vunpack.c.l.b16 %v5342
      %v6480 = vpack.c.b16 %v6449, %v6448
      %v6481 = vpack.c.b16 %v6451, %v6450
      %v6482 = vpack.c.b16 %v6453, %v6452
      %v6483 = vpack.c.b16 %v6455, %v6454
      %v6484 = vpack.c.b16 %v6457, %v6456
      %v6485 = vpack.c.b16 %v6459, %v6458
      %v6486 = vpack.c.b16 %v6461, %v6460
      %v6487 = vpack.c.b16 %v6463, %v6462
      %v6488 = vpack.c.b16 %v6465, %v6464
      %v6489 = vpack.c.b16 %v6467, %v6466
      %v6490 = vpack.c.b16 %v6469, %v6468
      %v6491 = vpack.c.b16 %v6471, %v6470
      %v6492 = vpack.c.b16 %v6473, %v6472
      %v6493 = vpack.c.b16 %v6475, %v6474
      %v6494 = vpack.c.b16 %v6477, %v6476
      %v6495 = vpack.c.b16 %v6479, %v6478
      %6496 = vrot.lane.b32.xlu0 %v6480, 16
      %v6497 = vpop.permute.xlu0 %6496
      %6498 = vrot.lane.b32.xlu0 %v6481, 16
      %v6499 = vpop.permute.xlu0 %6498
      %6500 = vrot.lane.b32.xlu0 %v6482, 16
      %v6501 = vpop.permute.xlu0 %6500
      %6502 = vrot.lane.b32.xlu0 %v6483, 16
      %v6503 = vpop.permute.xlu0 %6502
      %6504 = vrot.lane.b32.xlu0 %v6484, 16
      %v6505 = vpop.permute.xlu0 %6504
      %6506 = vrot.lane.b32.xlu0 %v6485, 16
      %v6507 = vpop.permute.xlu0 %6506
      %6508 = vrot.lane.b32.xlu0 %v6486, 16
      %v6509 = vpop.permute.xlu0 %6508
      %6510 = vrot.lane.b32.xlu0 %v6487, 16
      %v6511 = vpop.permute.xlu0 %6510
      %6512 = vrot.lane.b32.xlu0 %v6488, 16
      %v6513 = vpop.permute.xlu0 %6512
      %6514 = vrot.lane.b32.xlu0 %v6489, 16
      %v6515 = vpop.permute.xlu0 %6514
      %6516 = vrot.lane.b32.xlu0 %v6490, 16
      %v6517 = vpop.permute.xlu0 %6516
      %6518 = vrot.lane.b32.xlu0 %v6491, 16
      %v6519 = vpop.permute.xlu0 %6518
      %6520 = vrot.lane.b32.xlu0 %v6492, 16
      %v6521 = vpop.permute.xlu0 %6520
      %6522 = vrot.lane.b32.xlu0 %v6493, 16
      %v6523 = vpop.permute.xlu0 %6522
      %6524 = vrot.lane.b32.xlu0 %v6494, 16
      %v6525 = vpop.permute.xlu0 %6524
      %6526 = vrot.lane.b32.xlu0 %v6495, 16
      %v6527 = vpop.permute.xlu0 %6526
      %v6528 = vunpack.c.l.b16 %v5410
      %v6529 = vunpack.c.l.b16 %v5413
      %v6530 = vunpack.c.l.b16 %v5417
      %v6531 = vunpack.c.l.b16 %v5420
      %v6532 = vunpack.c.l.b16 %v5424
      %v6533 = vunpack.c.l.b16 %v5427
      %v6534 = vunpack.c.l.b16 %v5431
      %v6535 = vunpack.c.l.b16 %v5434
      %v6536 = vunpack.c.l.b16 %v5438
      %v6537 = vunpack.c.l.b16 %v5441
      %v6538 = vunpack.c.l.b16 %v5445
      %v6539 = vunpack.c.l.b16 %v5448
      %v6540 = vunpack.c.l.b16 %v5452
      %v6541 = vunpack.c.l.b16 %v5455
      %v6542 = vunpack.c.l.b16 %v5459
      %v6543 = vunpack.c.l.b16 %v5462
      %v6544 = vunpack.c.l.b16 %v5466
      %v6545 = vunpack.c.l.b16 %v5469
      %v6546 = vunpack.c.l.b16 %v5473
      %v6547 = vunpack.c.l.b16 %v5476
      %v6548 = vunpack.c.l.b16 %v5480
      %v6549 = vunpack.c.l.b16 %v5483
      %v6550 = vunpack.c.l.b16 %v5487
      %v6551 = vunpack.c.l.b16 %v5490
      %v6552 = vunpack.c.l.b16 %v5494
      %v6553 = vunpack.c.l.b16 %v5497
      %v6554 = vunpack.c.l.b16 %v5501
      %v6555 = vunpack.c.l.b16 %v5504
      %v6556 = vunpack.c.l.b16 %v5508
      %v6557 = vunpack.c.l.b16 %v5511
      %v6558 = vunpack.c.l.b16 %v5515
      %v6559 = vunpack.c.l.b16 %v5518
      %v6560 = vpack.c.b16 %v6529, %v6528
      %v6561 = vpack.c.b16 %v6531, %v6530
      %v6562 = vpack.c.b16 %v6533, %v6532
      %v6563 = vpack.c.b16 %v6535, %v6534
      %v6564 = vpack.c.b16 %v6537, %v6536
      %v6565 = vpack.c.b16 %v6539, %v6538
      %v6566 = vpack.c.b16 %v6541, %v6540
      %v6567 = vpack.c.b16 %v6543, %v6542
      %v6568 = vpack.c.b16 %v6545, %v6544
      %v6569 = vpack.c.b16 %v6547, %v6546
      %v6570 = vpack.c.b16 %v6549, %v6548
      %v6571 = vpack.c.b16 %v6551, %v6550
      %v6572 = vpack.c.b16 %v6553, %v6552
      %v6573 = vpack.c.b16 %v6555, %v6554
      %v6574 = vpack.c.b16 %v6557, %v6556
      %v6575 = vpack.c.b16 %v6559, %v6558
      %6576 = vrot.lane.b32.xlu0 %v6560, 20
      %v6577 = vpop.permute.xlu0 %6576
      %6578 = vrot.lane.b32.xlu0 %v6561, 20
      %v6579 = vpop.permute.xlu0 %6578
      %6580 = vrot.lane.b32.xlu0 %v6562, 20
      %v6581 = vpop.permute.xlu0 %6580
      %6582 = vrot.lane.b32.xlu0 %v6563, 20
      %v6583 = vpop.permute.xlu0 %6582
      %6584 = vrot.lane.b32.xlu0 %v6564, 20
      %v6585 = vpop.permute.xlu0 %6584
      %6586 = vrot.lane.b32.xlu0 %v6565, 20
      %v6587 = vpop.permute.xlu0 %6586
      %6588 = vrot.lane.b32.xlu0 %v6566, 20
      %v6589 = vpop.permute.xlu0 %6588
      %6590 = vrot.lane.b32.xlu0 %v6567, 20
      %v6591 = vpop.permute.xlu0 %6590
      %6592 = vrot.lane.b32.xlu0 %v6568, 20
      %v6593 = vpop.permute.xlu0 %6592
      %6594 = vrot.lane.b32.xlu0 %v6569, 20
      %v6595 = vpop.permute.xlu0 %6594
      %6596 = vrot.lane.b32.xlu0 %v6570, 20
      %v6597 = vpop.permute.xlu0 %6596
      %6598 = vrot.lane.b32.xlu0 %v6571, 20
      %v6599 = vpop.permute.xlu0 %6598
      %6600 = vrot.lane.b32.xlu0 %v6572, 20
      %v6601 = vpop.permute.xlu0 %6600
      %6602 = vrot.lane.b32.xlu0 %v6573, 20
      %v6603 = vpop.permute.xlu0 %6602
      %6604 = vrot.lane.b32.xlu0 %v6574, 20
      %v6605 = vpop.permute.xlu0 %6604
      %6606 = vrot.lane.b32.xlu0 %v6575, 20
      %v6607 = vpop.permute.xlu0 %6606
      %v6624 = vunpack.c.l.b16 %v5520
      %v6625 = vunpack.c.l.b16 %v5521
      %v6626 = vunpack.c.l.b16 %v5522
      %v6627 = vunpack.c.l.b16 %v5523
      %v6628 = vunpack.c.l.b16 %v5524
      %v6629 = vunpack.c.l.b16 %v5525
      %v6630 = vunpack.c.l.b16 %v5526
      %v6631 = vunpack.c.l.b16 %v5527
      %v6632 = vunpack.c.l.b16 %v5528
      %v6633 = vunpack.c.l.b16 %v5529
      %v6634 = vunpack.c.l.b16 %v5530
      %v6635 = vunpack.c.l.b16 %v5531
      %v6636 = vunpack.c.l.b16 %v5532
      %v6637 = vunpack.c.l.b16 %v5533
      %v6638 = vunpack.c.l.b16 %v5534
      %v6639 = vunpack.c.l.b16 %v5535
      %v6640 = vunpack.c.l.b16 %v5536
      %v6641 = vunpack.c.l.b16 %v5537
      %v6642 = vunpack.c.l.b16 %v5538
      %v6643 = vunpack.c.l.b16 %v5539
      %v6644 = vunpack.c.l.b16 %v5540
      %v6645 = vunpack.c.l.b16 %v5541
      %v6646 = vunpack.c.l.b16 %v5542
      %v6647 = vunpack.c.l.b16 %v5543
      %v6648 = vunpack.c.l.b16 %v5544
      %v6649 = vunpack.c.l.b16 %v5545
      %v6650 = vunpack.c.l.b16 %v5546
      %v6651 = vunpack.c.l.b16 %v5547
      %v6652 = vunpack.c.l.b16 %v5548
      %v6653 = vunpack.c.l.b16 %v5549
      %v6654 = vunpack.c.l.b16 %v5550
      %v6655 = vunpack.c.l.b16 %v5551
      %v6656 = vpack.c.b16 %v6625, %v6624
      %v6657 = vpack.c.b16 %v6627, %v6626
      %v6658 = vpack.c.b16 %v6629, %v6628
      %v6659 = vpack.c.b16 %v6631, %v6630
      %v6660 = vpack.c.b16 %v6633, %v6632
      %v6661 = vpack.c.b16 %v6635, %v6634
      %v6662 = vpack.c.b16 %v6637, %v6636
      %v6663 = vpack.c.b16 %v6639, %v6638
      %v6664 = vpack.c.b16 %v6641, %v6640
      %v6665 = vpack.c.b16 %v6643, %v6642
      %v6666 = vpack.c.b16 %v6645, %v6644
      %v6667 = vpack.c.b16 %v6647, %v6646
      %v6668 = vpack.c.b16 %v6649, %v6648
      %v6669 = vpack.c.b16 %v6651, %v6650
      %v6670 = vpack.c.b16 %v6653, %v6652
      %v6671 = vpack.c.b16 %v6655, %v6654
      %6672 = vrot.lane.b32.xlu0 %v6656, 24
      %v6673 = vpop.permute.xlu0 %6672
      %6674 = vrot.lane.b32.xlu0 %v6657, 24
      %v6675 = vpop.permute.xlu0 %6674
      %6676 = vrot.lane.b32.xlu0 %v6658, 24
      %v6677 = vpop.permute.xlu0 %6676
      %6678 = vrot.lane.b32.xlu0 %v6659, 24
      %v6679 = vpop.permute.xlu0 %6678
      %6680 = vrot.lane.b32.xlu0 %v6660, 24
      %v6681 = vpop.permute.xlu0 %6680
      %6682 = vrot.lane.b32.xlu0 %v6661, 24
      %v6683 = vpop.permute.xlu0 %6682
      %6684 = vrot.lane.b32.xlu0 %v6662, 24
      %v6685 = vpop.permute.xlu0 %6684
      %6686 = vrot.lane.b32.xlu0 %v6663, 24
      %v6687 = vpop.permute.xlu0 %6686
      %6688 = vrot.lane.b32.xlu0 %v6664, 24
      %v6689 = vpop.permute.xlu0 %6688
      %6690 = vrot.lane.b32.xlu0 %v6665, 24
      %v6691 = vpop.permute.xlu0 %6690
      %6692 = vrot.lane.b32.xlu0 %v6666, 24
      %v6693 = vpop.permute.xlu0 %6692
      %6694 = vrot.lane.b32.xlu0 %v6667, 24
      %v6695 = vpop.permute.xlu0 %6694
      %6696 = vrot.lane.b32.xlu0 %v6668, 24
      %v6697 = vpop.permute.xlu0 %6696
      %6698 = vrot.lane.b32.xlu0 %v6669, 24
      %v6699 = vpop.permute.xlu0 %6698
      %6700 = vrot.lane.b32.xlu0 %v6670, 24
      %v6701 = vpop.permute.xlu0 %6700
      %6702 = vrot.lane.b32.xlu0 %v6671, 24
      %v6703 = vpop.permute.xlu0 %6702
      %v6704 = vunpack.c.l.b16 %v5581
      %v6705 = vunpack.c.l.b16 %v5591
      %v6706 = vunpack.c.l.b16 %v5605
      %v6707 = vunpack.c.l.b16 %v5615
      %v6708 = vunpack.c.l.b16 %v5629
      %v6709 = vunpack.c.l.b16 %v5639
      %v6710 = vunpack.c.l.b16 %v5653
      %v6711 = vunpack.c.l.b16 %v5663
      %v6712 = vunpack.c.l.b16 %v5677
      %v6713 = vunpack.c.l.b16 %v5687
      %v6714 = vunpack.c.l.b16 %v5701
      %v6715 = vunpack.c.l.b16 %v5711
      %v6716 = vunpack.c.l.b16 %v5725
      %v6717 = vunpack.c.l.b16 %v5735
      %v6718 = vunpack.c.l.b16 %v5749
      %v6719 = vunpack.c.l.b16 %v5759
      %v6720 = vunpack.c.l.b16 %v5773
      %v6721 = vunpack.c.l.b16 %v5783
      %v6722 = vunpack.c.l.b16 %v5797
      %v6723 = vunpack.c.l.b16 %v5807
      %v6724 = vunpack.c.l.b16 %v5821
      %v6725 = vunpack.c.l.b16 %v5831
      %v6726 = vunpack.c.l.b16 %v5845
      %v6727 = vunpack.c.l.b16 %v5855
      %v6728 = vunpack.c.l.b16 %v5869
      %v6729 = vunpack.c.l.b16 %v5879
      %v6730 = vunpack.c.l.b16 %v5893
      %v6731 = vunpack.c.l.b16 %v5903
      %v6732 = vunpack.c.l.b16 %v5917
      %v6733 = vunpack.c.l.b16 %v5927
      %v6734 = vunpack.c.l.b16 %v5941
      %v6735 = vunpack.c.l.b16 %v5951
      %v6736 = vpack.c.b16 %v6705, %v6704
      %v6737 = vpack.c.b16 %v6707, %v6706
      %v6738 = vpack.c.b16 %v6709, %v6708
      %v6739 = vpack.c.b16 %v6711, %v6710
      %v6740 = vpack.c.b16 %v6713, %v6712
      %v6741 = vpack.c.b16 %v6715, %v6714
      %v6742 = vpack.c.b16 %v6717, %v6716
      %v6743 = vpack.c.b16 %v6719, %v6718
      %v6744 = vpack.c.b16 %v6721, %v6720
      %v6745 = vpack.c.b16 %v6723, %v6722
      %v6746 = vpack.c.b16 %v6725, %v6724
      %v6747 = vpack.c.b16 %v6727, %v6726
      %v6748 = vpack.c.b16 %v6729, %v6728
      %v6749 = vpack.c.b16 %v6731, %v6730
      %v6750 = vpack.c.b16 %v6733, %v6732
      %v6751 = vpack.c.b16 %v6735, %v6734
      %6752 = vrot.lane.b32.xlu0 %v6736, 28
      %v6753 = vpop.permute.xlu0 %6752
      %6754 = vrot.lane.b32.xlu0 %v6737, 28
      %v6755 = vpop.permute.xlu0 %6754
      %6756 = vrot.lane.b32.xlu0 %v6738, 28
      %v6757 = vpop.permute.xlu0 %6756
      %6758 = vrot.lane.b32.xlu0 %v6739, 28
      %v6759 = vpop.permute.xlu0 %6758
      %6760 = vrot.lane.b32.xlu0 %v6740, 28
      %v6761 = vpop.permute.xlu0 %6760
      %6762 = vrot.lane.b32.xlu0 %v6741, 28
      %v6763 = vpop.permute.xlu0 %6762
      %6764 = vrot.lane.b32.xlu0 %v6742, 28
      %v6765 = vpop.permute.xlu0 %6764
      %6766 = vrot.lane.b32.xlu0 %v6743, 28
      %v6767 = vpop.permute.xlu0 %6766
      %6768 = vrot.lane.b32.xlu0 %v6744, 28
      %v6769 = vpop.permute.xlu0 %6768
      %6770 = vrot.lane.b32.xlu0 %v6745, 28
      %v6771 = vpop.permute.xlu0 %6770
      %6772 = vrot.lane.b32.xlu0 %v6746, 28
      %v6773 = vpop.permute.xlu0 %6772
      %6774 = vrot.lane.b32.xlu0 %v6747, 28
      %v6775 = vpop.permute.xlu0 %6774
      %6776 = vrot.lane.b32.xlu0 %v6748, 28
      %v6777 = vpop.permute.xlu0 %6776
      %6778 = vrot.lane.b32.xlu0 %v6749, 28
      %v6779 = vpop.permute.xlu0 %6778
      %6780 = vrot.lane.b32.xlu0 %v6750, 28
      %v6781 = vpop.permute.xlu0 %6780
      %6782 = vrot.lane.b32.xlu0 %v6751, 28
      %v6783 = vpop.permute.xlu0 %6782
      %v6784 = vunpack.c.l.b16 %v6019
      %v6785 = vunpack.c.l.b16 %v6022
      %v6786 = vunpack.c.l.b16 %v6026
      %v6787 = vunpack.c.l.b16 %v6029
      %v6788 = vunpack.c.l.b16 %v6033
      %v6789 = vunpack.c.l.b16 %v6036
      %v6790 = vunpack.c.l.b16 %v6040
      %v6791 = vunpack.c.l.b16 %v6043
      %v6792 = vunpack.c.l.b16 %v6047
      %v6793 = vunpack.c.l.b16 %v6050
      %v6794 = vunpack.c.l.b16 %v6054
      %v6795 = vunpack.c.l.b16 %v6057
      %v6796 = vunpack.c.l.b16 %v6061
      %v6797 = vunpack.c.l.b16 %v6064
      %v6798 = vunpack.c.l.b16 %v6068
      %v6799 = vunpack.c.l.b16 %v6071
      %v6800 = vunpack.c.l.b16 %v6075
      %v6801 = vunpack.c.l.b16 %v6078
      %v6802 = vunpack.c.l.b16 %v6082
      %v6803 = vunpack.c.l.b16 %v6085
      %v6804 = vunpack.c.l.b16 %v6089
      %v6805 = vunpack.c.l.b16 %v6092
      %v6806 = vunpack.c.l.b16 %v6096
      %v6807 = vunpack.c.l.b16 %v6099
      %v6808 = vunpack.c.l.b16 %v6103
      %v6809 = vunpack.c.l.b16 %v6106
      %v6810 = vunpack.c.l.b16 %v6110
      %v6811 = vunpack.c.l.b16 %v6113
      %v6812 = vunpack.c.l.b16 %v6117
      %v6813 = vunpack.c.l.b16 %v6120
      %v6814 = vunpack.c.l.b16 %v6124
      %v6815 = vunpack.c.l.b16 %v6127
      %v6816 = vpack.c.b16 %v6785, %v6784
      %v6817 = vpack.c.b16 %v6787, %v6786
      %v6818 = vpack.c.b16 %v6789, %v6788
      %v6819 = vpack.c.b16 %v6791, %v6790
      %v6820 = vpack.c.b16 %v6793, %v6792
      %v6821 = vpack.c.b16 %v6795, %v6794
      %v6822 = vpack.c.b16 %v6797, %v6796
      %v6823 = vpack.c.b16 %v6799, %v6798
      %v6824 = vpack.c.b16 %v6801, %v6800
      %v6825 = vpack.c.b16 %v6803, %v6802
      %v6826 = vpack.c.b16 %v6805, %v6804
      %v6827 = vpack.c.b16 %v6807, %v6806
      %v6828 = vpack.c.b16 %v6809, %v6808
      %v6829 = vpack.c.b16 %v6811, %v6810
      %v6830 = vpack.c.b16 %v6813, %v6812
      %v6831 = vpack.c.b16 %v6815, %v6814
      %6832 = vrot.lane.b32.xlu0 %v6816, 32
      %v6833 = vpop.permute.xlu0 %6832
      %6834 = vrot.lane.b32.xlu0 %v6817, 32
      %v6835 = vpop.permute.xlu0 %6834
      %6836 = vrot.lane.b32.xlu0 %v6818, 32
      %v6837 = vpop.permute.xlu0 %6836
      %6838 = vrot.lane.b32.xlu0 %v6819, 32
      %v6839 = vpop.permute.xlu0 %6838
      %6840 = vrot.lane.b32.xlu0 %v6820, 32
      %v6841 = vpop.permute.xlu0 %6840
      %6842 = vrot.lane.b32.xlu0 %v6821, 32
      %v6843 = vpop.permute.xlu0 %6842
      %6844 = vrot.lane.b32.xlu0 %v6822, 32
      %v6845 = vpop.permute.xlu0 %6844
      %6846 = vrot.lane.b32.xlu0 %v6823, 32
      %v6847 = vpop.permute.xlu0 %6846
      %6848 = vrot.lane.b32.xlu0 %v6824, 32
      %v6849 = vpop.permute.xlu0 %6848
      %6850 = vrot.lane.b32.xlu0 %v6825, 32
      %v6851 = vpop.permute.xlu0 %6850
      %6852 = vrot.lane.b32.xlu0 %v6826, 32
      %v6853 = vpop.permute.xlu0 %6852
      %6854 = vrot.lane.b32.xlu0 %v6827, 32
      %v6855 = vpop.permute.xlu0 %6854
      %6856 = vrot.lane.b32.xlu0 %v6828, 32
      %v6857 = vpop.permute.xlu0 %6856
      %6858 = vrot.lane.b32.xlu0 %v6829, 32
      %v6859 = vpop.permute.xlu0 %6858
      %6860 = vrot.lane.b32.xlu0 %v6830, 32
      %v6861 = vpop.permute.xlu0 %6860
      %6862 = vrot.lane.b32.xlu0 %v6831, 32
      %v6863 = vpop.permute.xlu0 %6862
      %v6866 = vsel %vm3322, %v6176, %v6241
      %v6869 = vsel %vm3322, %v6177, %v6243
      %v6872 = vsel %vm3322, %v6178, %v6245
      %v6875 = vsel %vm3322, %v6179, %v6247
      %v6878 = vsel %vm3322, %v6180, %v6249
      %v6881 = vsel %vm3322, %v6181, %v6251
      %v6884 = vsel %vm3322, %v6182, %v6253
      %v6887 = vsel %vm3322, %v6183, %v6255
      %v6890 = vsel %vm3322, %v6184, %v6257
      %v6893 = vsel %vm3322, %v6185, %v6259
      %v6896 = vsel %vm3322, %v6186, %v6261
      %v6899 = vsel %vm3322, %v6187, %v6263
      %v6902 = vsel %vm3322, %v6188, %v6265
      %v6905 = vsel %vm3322, %v6189, %v6267
      %v6908 = vsel %vm3322, %v6190, %v6269
      %v6911 = vsel %vm3322, %v6191, %v6271
      %v6913 = vsel %vm3371, %v6866, %v6321
      %v6915 = vsel %vm3371, %v6869, %v6323
      %v6917 = vsel %vm3371, %v6872, %v6325
      %v6919 = vsel %vm3371, %v6875, %v6327
      %v6921 = vsel %vm3371, %v6878, %v6329
      %v6923 = vsel %vm3371, %v6881, %v6331
      %v6925 = vsel %vm3371, %v6884, %v6333
      %v6927 = vsel %vm3371, %v6887, %v6335
      %v6929 = vsel %vm3371, %v6890, %v6337
      %v6931 = vsel %vm3371, %v6893, %v6339
      %v6933 = vsel %vm3371, %v6896, %v6341
      %v6935 = vsel %vm3371, %v6899, %v6343
      %v6937 = vsel %vm3371, %v6902, %v6345
      %v6939 = vsel %vm3371, %v6905, %v6347
      %v6941 = vsel %vm3371, %v6908, %v6349
      %v6943 = vsel %vm3371, %v6911, %v6351
      %v6945 = vsel %vm3404, %v6913, %v6417
      %v6947 = vsel %vm3404, %v6915, %v6419
      %v6949 = vsel %vm3404, %v6917, %v6421
      %v6951 = vsel %vm3404, %v6919, %v6423
      %v6953 = vsel %vm3404, %v6921, %v6425
      %v6955 = vsel %vm3404, %v6923, %v6427
      %v6957 = vsel %vm3404, %v6925, %v6429
      %v6959 = vsel %vm3404, %v6927, %v6431
      %v6961 = vsel %vm3404, %v6929, %v6433
      %v6963 = vsel %vm3404, %v6931, %v6435
      %v6965 = vsel %vm3404, %v6933, %v6437
      %v6967 = vsel %vm3404, %v6935, %v6439
      %v6969 = vsel %vm3404, %v6937, %v6441
      %v6971 = vsel %vm3404, %v6939, %v6443
      %v6973 = vsel %vm3404, %v6941, %v6445
      %v6975 = vsel %vm3404, %v6943, %v6447
      %v6977 = vsel %vm3437, %v6945, %v6497
      %v6979 = vsel %vm3437, %v6947, %v6499
      %v6981 = vsel %vm3437, %v6949, %v6501
      %v6983 = vsel %vm3437, %v6951, %v6503
      %v6985 = vsel %vm3437, %v6953, %v6505
      %v6987 = vsel %vm3437, %v6955, %v6507
      %v6989 = vsel %vm3437, %v6957, %v6509
      %v6991 = vsel %vm3437, %v6959, %v6511
      %v6993 = vsel %vm3437, %v6961, %v6513
      %v6995 = vsel %vm3437, %v6963, %v6515
      %v6997 = vsel %vm3437, %v6965, %v6517
      %v6999 = vsel %vm3437, %v6967, %v6519
      %v7001 = vsel %vm3437, %v6969, %v6521
      %v7003 = vsel %vm3437, %v6971, %v6523
      %v7005 = vsel %vm3437, %v6973, %v6525
      %v7007 = vsel %vm3437, %v6975, %v6527
      %v7009 = vsel %vm3470, %v6977, %v6577
      %v7011 = vsel %vm3470, %v6979, %v6579
      %v7013 = vsel %vm3470, %v6981, %v6581
      %v7015 = vsel %vm3470, %v6983, %v6583
      %v7017 = vsel %vm3470, %v6985, %v6585
      %v7019 = vsel %vm3470, %v6987, %v6587
      %v7021 = vsel %vm3470, %v6989, %v6589
      %v7023 = vsel %vm3470, %v6991, %v6591
      %v7025 = vsel %vm3470, %v6993, %v6593
      %v7027 = vsel %vm3470, %v6995, %v6595
      %v7029 = vsel %vm3470, %v6997, %v6597
      %v7031 = vsel %vm3470, %v6999, %v6599
      %v7033 = vsel %vm3470, %v7001, %v6601
      %v7035 = vsel %vm3470, %v7003, %v6603
      %v7037 = vsel %vm3470, %v7005, %v6605
      %v7039 = vsel %vm3470, %v7007, %v6607
      %v7041 = vsel %vm3503, %v7009, %v6673
      %v7043 = vsel %vm3503, %v7011, %v6675
      %v7045 = vsel %vm3503, %v7013, %v6677
      %v7047 = vsel %vm3503, %v7015, %v6679
      %v7049 = vsel %vm3503, %v7017, %v6681
      %v7051 = vsel %vm3503, %v7019, %v6683
      %v7053 = vsel %vm3503, %v7021, %v6685
      %v7055 = vsel %vm3503, %v7023, %v6687
      %v7057 = vsel %vm3503, %v7025, %v6689
      %v7059 = vsel %vm3503, %v7027, %v6691
      %v7061 = vsel %vm3503, %v7029, %v6693
      %v7063 = vsel %vm3503, %v7031, %v6695
      %v7065 = vsel %vm3503, %v7033, %v6697
      %v7067 = vsel %vm3503, %v7035, %v6699
      %v7069 = vsel %vm3503, %v7037, %v6701
      %v7071 = vsel %vm3503, %v7039, %v6703
      %v7073 = vsel %vm3536, %v7041, %v6753
      %v7075 = vsel %vm3536, %v7043, %v6755
      %v7077 = vsel %vm3536, %v7045, %v6757
      %v7079 = vsel %vm3536, %v7047, %v6759
      %v7081 = vsel %vm3536, %v7049, %v6761
      %v7083 = vsel %vm3536, %v7051, %v6763
      %v7085 = vsel %vm3536, %v7053, %v6765
      %v7087 = vsel %vm3536, %v7055, %v6767
      %v7089 = vsel %vm3536, %v7057, %v6769
      %v7091 = vsel %vm3536, %v7059, %v6771
      %v7093 = vsel %vm3536, %v7061, %v6773
      %v7095 = vsel %vm3536, %v7063, %v6775
      %v7097 = vsel %vm3536, %v7065, %v6777
      %v7099 = vsel %vm3536, %v7067, %v6779
      %v7101 = vsel %vm3536, %v7069, %v6781
      %v7103 = vsel %vm3536, %v7071, %v6783
      %v7105 = vsel %vm3569, %v7073, %v6833
      %v7107 = vsel %vm3569, %v7075, %v6835
      %v7109 = vsel %vm3569, %v7077, %v6837
      %v7111 = vsel %vm3569, %v7079, %v6839
      %v7113 = vsel %vm3569, %v7081, %v6841
      %v7115 = vsel %vm3569, %v7083, %v6843
      %v7117 = vsel %vm3569, %v7085, %v6845
      %v7119 = vsel %vm3569, %v7087, %v6847
      %v7121 = vsel %vm3569, %v7089, %v6849
      %v7123 = vsel %vm3569, %v7091, %v6851
      %v7125 = vsel %vm3569, %v7093, %v6853
      %v7127 = vsel %vm3569, %v7095, %v6855
      %v7129 = vsel %vm3569, %v7097, %v6857
      %v7131 = vsel %vm3569, %v7099, %v6859
      %v7133 = vsel %vm3569, %v7101, %v6861
      %v7135 = vsel %vm3569, %v7103, %v6863
      %v7136 = vld [vmem:[%s3] sm:$0xf]
      %v7137 = vld [vmem:[%s3 + $0x4] sm:$0xf]
      %v7138 = vld [vmem:[%s3 + $0x8] sm:$0xf]
      %v7139 = vld [vmem:[%s3 + $0xc] sm:$0xf]
      %v7140 = vld [vmem:[%s3 + $0x10] sm:$0x3]
      %v7141 = vld [vmem:[%s4] sm:$0x1]
      %v7143 = vperm.slane %v7141, 0
      %v7150 = vunpack.c.l.b16 %v7136
      %v7151 = vunpack.c.l.b16 %v7137
      %v7152 = vunpack.c.l.b16 %v7138
      %v7153 = vunpack.c.l.b16 %v7139
      %v7154 = vunpack.c.l.b16 %v7140
      %v7155 = vpack.c.b16 %v7151, %v7150
      %v7156 = vpack.c.b16 %v7153, %v7152
      %v7157 = vpack.c.b16 %v7154, %v7154
      %v7160 = vsel %vm3626, %v7105, 0
      %v7162 = vsel %vm3626, %v7107, 0
      %v7164 = vsel %vm3626, %v7109, 0
      %v7166 = vsel %vm3626, %v7111, 0
      %v7168 = vsel %vm3626, %v7113, 0
      %v7170 = vsel %vm3626, %v7115, 0
      %v7172 = vsel %vm3626, %v7117, 0
      %v7174 = vsel %vm3626, %v7119, 0
      %v7176 = vsel %vm3626, %v7121, 0
      %v7178 = vsel %vm3626, %v7123, 0
      %v7180 = vsel %vm3626, %v7125, 0
      %v7182 = vsel %vm3626, %v7127, 0
      %v7184 = vsel %vm3626, %v7129, 0
      %v7186 = vsel %vm3626, %v7131, 0
      %v7188 = vsel %vm3626, %v7133, 0
      %v7190 = vsel %vm3626, %v7135, 0
      %v7193 = vsel %vm3659, %v7157, 0
      %7195 = vmatpush.bf16.msra.mxu0 0
      %7196 = vmatpush.bf16.msra.mxu0 0
      %7197 = vmatpush.bf16.msra.mxu0 0
      %7198 = vmatpush.bf16.msra.mxu0 0
      %7199 = vmatpush.bf16.msra.mxu0 0
      %7200 = vmatpush.bf16.msra.mxu0 %v7193
      %7201 = vmatpush.bf16.msra.mxu0 %v7156
      %7202 = vmatpush.bf16.msra.mxu0 %v7155
      %7203 = vmatmul.bf16.gmra.mxu0 %v7160
      %v7204 = vpop.f32.mrf.mxu0
      %v7205 = vadd.f32 %v7143, %v7204
      %v7206 = vpop.f32.mrf.mxu0
      %v7207 = vadd.f32 %v7143, %v7206
      %7208 = vmatmul.bf16.gmra.mxu0 %v7162
      %v7209 = vpop.f32.mrf.mxu0
      %v7210 = vadd.f32 %v7143, %v7209
      %v7211 = vpop.f32.mrf.mxu0
      %v7212 = vadd.f32 %v7143, %v7211
      %7213 = vmatmul.bf16.gmra.mxu0 %v7164
      %v7214 = vpop.f32.mrf.mxu0
      %v7215 = vadd.f32 %v7143, %v7214
      %v7216 = vpop.f32.mrf.mxu0
      %v7217 = vadd.f32 %v7143, %v7216
      %7218 = vmatmul.bf16.gmra.mxu0 %v7166
      %v7219 = vpop.f32.mrf.mxu0
      %v7220 = vadd.f32 %v7143, %v7219
      %v7221 = vpop.f32.mrf.mxu0
      %v7222 = vadd.f32 %v7143, %v7221
      %7223 = vmatmul.bf16.gmra.mxu0 %v7168
      %v7224 = vpop.f32.mrf.mxu0
      %v7225 = vadd.f32 %v7143, %v7224
      %v7226 = vpop.f32.mrf.mxu0
      %v7227 = vadd.f32 %v7143, %v7226
      %7228 = vmatmul.bf16.gmra.mxu0 %v7170
      %v7229 = vpop.f32.mrf.mxu0
      %v7230 = vadd.f32 %v7143, %v7229
      %v7231 = vpop.f32.mrf.mxu0
      %v7232 = vadd.f32 %v7143, %v7231
      %7233 = vmatmul.bf16.gmra.mxu0 %v7172
      %v7234 = vpop.f32.mrf.mxu0
      %v7235 = vadd.f32 %v7143, %v7234
      %v7236 = vpop.f32.mrf.mxu0
      %v7237 = vadd.f32 %v7143, %v7236
      %7238 = vmatmul.bf16.gmra.mxu0 %v7174
      %v7239 = vpop.f32.mrf.mxu0
      %v7240 = vadd.f32 %v7143, %v7239
      %v7241 = vpop.f32.mrf.mxu0
      %v7242 = vadd.f32 %v7143, %v7241
      %7243 = vmatmul.bf16.gmra.mxu0 %v7176
      %v7244 = vpop.f32.mrf.mxu0
      %v7245 = vadd.f32 %v7143, %v7244
      %v7246 = vpop.f32.mrf.mxu0
      %v7247 = vadd.f32 %v7143, %v7246
      %7248 = vmatmul.bf16.gmra.mxu0 %v7178
      %v7249 = vpop.f32.mrf.mxu0
      %v7250 = vadd.f32 %v7143, %v7249
      %v7251 = vpop.f32.mrf.mxu0
      %v7252 = vadd.f32 %v7143, %v7251
      %7253 = vmatmul.bf16.gmra.mxu0 %v7180
      %v7254 = vpop.f32.mrf.mxu0
      %v7255 = vadd.f32 %v7143, %v7254
      %v7256 = vpop.f32.mrf.mxu0
      %v7257 = vadd.f32 %v7143, %v7256
      %7258 = vmatmul.bf16.gmra.mxu0 %v7182
      %v7259 = vpop.f32.mrf.mxu0
      %v7260 = vadd.f32 %v7143, %v7259
      %v7261 = vpop.f32.mrf.mxu0
      %v7262 = vadd.f32 %v7143, %v7261
      %7263 = vmatmul.bf16.gmra.mxu0 %v7184
      %v7264 = vpop.f32.mrf.mxu0
      %v7265 = vadd.f32 %v7143, %v7264
      %v7266 = vpop.f32.mrf.mxu0
      %v7267 = vadd.f32 %v7143, %v7266
      %7268 = vmatmul.bf16.gmra.mxu0 %v7186
      %v7269 = vpop.f32.mrf.mxu0
      %v7270 = vadd.f32 %v7143, %v7269
      %v7271 = vpop.f32.mrf.mxu0
      %v7272 = vadd.f32 %v7143, %v7271
      %7273 = vmatmul.bf16.gmra.mxu0 %v7188
      %v7274 = vpop.f32.mrf.mxu0
      %v7275 = vadd.f32 %v7143, %v7274
      %v7276 = vpop.f32.mrf.mxu0
      %v7277 = vadd.f32 %v7143, %v7276
      %7278 = vmatmul.bf16.gmra.mxu0 %v7190
      %v7279 = vpop.f32.mrf.mxu0
      %v7280 = vadd.f32 %v7143, %v7279
      %v7281 = vpop.f32.mrf.mxu0
      %v7282 = vadd.f32 %v7143, %v7281
      %7283 = vdwg.mxu0
      %v7284 = vld [vmem:[%s219] sm:$0xf]
      %v7285 = vld [vmem:[%s219 + $0x4] sm:$0xf]
      %v7286 = vld [vmem:[%s219 + $0x8] sm:$0xf]
      %v7287 = vld [vmem:[%s219 + $0xc] sm:$0xf]
      %v7288 = vld [vmem:[%s219 + $0x10] sm:$0xf]
      %v7289 = vld [vmem:[%s219 + $0x14] sm:$0xf]
      %v7290 = vld [vmem:[%s219 + $0x18] sm:$0xf]
      %v7291 = vld [vmem:[%s219 + $0x1c] sm:$0xf]
      %v7292 = vld [vmem:[%s219 + $0x20] sm:$0xf]
      %v7293 = vld [vmem:[%s219 + $0x24] sm:$0xf]
      %v7294 = vld [vmem:[%s219 + $0x28] sm:$0xf]
      %v7295 = vld [vmem:[%s219 + $0x2c] sm:$0xf]
      %v7296 = vld [vmem:[%s219 + $0x30] sm:$0xf]
      %v7297 = vld [vmem:[%s219 + $0x34] sm:$0xf]
      %v7298 = vld [vmem:[%s219 + $0x38] sm:$0xf]
      %v7299 = vld [vmem:[%s219 + $0x3c] sm:$0xf]
      %v7300 = vld [vmem:[%s219 + $0x40] sm:$0xf]
      %v7301 = vld [vmem:[%s219 + $0x44] sm:$0xf]
      %v7302 = vld [vmem:[%s219 + $0x48] sm:$0xf]
      %v7303 = vld [vmem:[%s219 + $0x4c] sm:$0xf]
      %v7304 = vld [vmem:[%s219 + $0x50] sm:$0xf]
      %v7305 = vld [vmem:[%s219 + $0x54] sm:$0xf]
      %v7306 = vld [vmem:[%s219 + $0x58] sm:$0xf]
      %v7307 = vld [vmem:[%s219 + $0x5c] sm:$0xf]
      %v7308 = vld [vmem:[%s219 + $0x60] sm:$0xf]
      %v7309 = vld [vmem:[%s219 + $0x64] sm:$0xf]
      %v7310 = vld [vmem:[%s219 + $0x68] sm:$0xf]
      %v7311 = vld [vmem:[%s219 + $0x6c] sm:$0xf]
      %v7312 = vld [vmem:[%s219 + $0x70] sm:$0xf]
      %v7313 = vld [vmem:[%s219 + $0x74] sm:$0xf]
      %v7314 = vld [vmem:[%s219 + $0x78] sm:$0xf]
      %v7315 = vld [vmem:[%s219 + $0x7c] sm:$0xf]
      %v7316 = vunpack.c.l.bf16 %v7284
      %v7317 = vunpack.c.l.bf16 %v7285
      %v7318 = vunpack.c.l.bf16 %v7286
      %v7319 = vunpack.c.l.bf16 %v7287
      %v7320 = vunpack.c.l.bf16 %v7288
      %v7321 = vunpack.c.l.bf16 %v7289
      %v7322 = vunpack.c.l.bf16 %v7290
      %v7323 = vunpack.c.l.bf16 %v7291
      %v7324 = vunpack.c.l.bf16 %v7292
      %v7325 = vunpack.c.l.bf16 %v7293
      %v7326 = vunpack.c.l.bf16 %v7294
      %v7327 = vunpack.c.l.bf16 %v7295
      %v7328 = vunpack.c.l.bf16 %v7296
      %v7329 = vunpack.c.l.bf16 %v7297
      %v7330 = vunpack.c.l.bf16 %v7298
      %v7331 = vunpack.c.l.bf16 %v7299
      %v7332 = vunpack.c.l.bf16 %v7300
      %v7333 = vunpack.c.l.bf16 %v7301
      %v7334 = vunpack.c.l.bf16 %v7302
      %v7335 = vunpack.c.l.bf16 %v7303
      %v7336 = vunpack.c.l.bf16 %v7304
      %v7337 = vunpack.c.l.bf16 %v7305
      %v7338 = vunpack.c.l.bf16 %v7306
      %v7339 = vunpack.c.l.bf16 %v7307
      %v7340 = vunpack.c.l.bf16 %v7308
      %v7341 = vunpack.c.l.bf16 %v7309
      %v7342 = vunpack.c.l.bf16 %v7310
      %v7343 = vunpack.c.l.bf16 %v7311
      %v7344 = vunpack.c.l.bf16 %v7312
      %v7345 = vunpack.c.l.bf16 %v7313
      %v7346 = vunpack.c.l.bf16 %v7314
      %v7347 = vunpack.c.l.bf16 %v7315
      %v7348 = vadd.f32 %v7205, %v7316
      %v7349 = vadd.f32 %v7207, %v7317
      %v7350 = vadd.f32 %v7210, %v7318
      %v7351 = vadd.f32 %v7212, %v7319
      %v7352 = vadd.f32 %v7215, %v7320
      %v7353 = vadd.f32 %v7217, %v7321
      %v7354 = vadd.f32 %v7220, %v7322
      %v7355 = vadd.f32 %v7222, %v7323
      %v7356 = vadd.f32 %v7225, %v7324
      %v7357 = vadd.f32 %v7227, %v7325
      %v7358 = vadd.f32 %v7230, %v7326
      %v7359 = vadd.f32 %v7232, %v7327
      %v7360 = vadd.f32 %v7235, %v7328
      %v7361 = vadd.f32 %v7237, %v7329
      %v7362 = vadd.f32 %v7240, %v7330
      %v7363 = vadd.f32 %v7242, %v7331
      %v7364 = vadd.f32 %v7245, %v7332
      %v7365 = vadd.f32 %v7247, %v7333
      %v7366 = vadd.f32 %v7250, %v7334
      %v7367 = vadd.f32 %v7252, %v7335
      %v7368 = vadd.f32 %v7255, %v7336
      %v7369 = vadd.f32 %v7257, %v7337
      %v7370 = vadd.f32 %v7260, %v7338
      %v7371 = vadd.f32 %v7262, %v7339
      %v7372 = vadd.f32 %v7265, %v7340
      %v7373 = vadd.f32 %v7267, %v7341
      %v7374 = vadd.f32 %v7270, %v7342
      %v7375 = vadd.f32 %v7272, %v7343
      %v7376 = vadd.f32 %v7275, %v7344
      %v7377 = vadd.f32 %v7277, %v7345
      %v7378 = vadd.f32 %v7280, %v7346
      %v7379 = vadd.f32 %v7282, %v7347
      %v7380 = vmax.f32 %v7348, 0.0
      %v7381 = vmax.f32 %v7349, 0.0
      %v7382 = vmax.f32 %v7350, 0.0
      %v7383 = vmax.f32 %v7351, 0.0
      %v7384 = vmax.f32 %v7352, 0.0
      %v7385 = vmax.f32 %v7353, 0.0
      %v7386 = vmax.f32 %v7354, 0.0
      %v7387 = vmax.f32 %v7355, 0.0
      %v7388 = vmax.f32 %v7356, 0.0
      %v7389 = vmax.f32 %v7357, 0.0
      %v7390 = vmax.f32 %v7358, 0.0
      %v7391 = vmax.f32 %v7359, 0.0
      %v7392 = vmax.f32 %v7360, 0.0
      %v7393 = vmax.f32 %v7361, 0.0
      %v7394 = vmax.f32 %v7362, 0.0
      %v7395 = vmax.f32 %v7363, 0.0
      %v7396 = vmax.f32 %v7364, 0.0
      %v7397 = vmax.f32 %v7365, 0.0
      %v7398 = vmax.f32 %v7366, 0.0
      %v7399 = vmax.f32 %v7367, 0.0
      %v7400 = vmax.f32 %v7368, 0.0
      %v7401 = vmax.f32 %v7369, 0.0
      %v7402 = vmax.f32 %v7370, 0.0
      %v7403 = vmax.f32 %v7371, 0.0
      %v7404 = vmax.f32 %v7372, 0.0
      %v7405 = vmax.f32 %v7373, 0.0
      %v7406 = vmax.f32 %v7374, 0.0
      %v7407 = vmax.f32 %v7375, 0.0
      %v7408 = vmax.f32 %v7376, 0.0
      %v7409 = vmax.f32 %v7377, 0.0
      %v7410 = vmax.f32 %v7378, 0.0
      %v7411 = vmax.f32 %v7379, 0.0
      %7412 = vst.msk [vmem:[%s224] sm:$0xff] %vm3322, %v7380
      %7413 = vst.msk [vmem:[%s224 + $0x8] sm:$0xff] %vm3322, %v7381
      %7414 = vst.msk [vmem:[%s224 + $0x10] sm:$0xff] %vm3322, %v7382
      %7415 = vst.msk [vmem:[%s224 + $0x18] sm:$0xff] %vm3322, %v7383
      %7416 = vst.msk [vmem:[%s224 + $0x20] sm:$0xff] %vm3322, %v7384
      %7417 = vst.msk [vmem:[%s224 + $0x28] sm:$0xff] %vm3322, %v7385
      %7418 = vst.msk [vmem:[%s224 + $0x30] sm:$0xff] %vm3322, %v7386
      %7419 = vst.msk [vmem:[%s224 + $0x38] sm:$0xff] %vm3322, %v7387
      %7420 = vst.msk [vmem:[%s224 + $0x40] sm:$0xff] %vm3322, %v7388
      %7421 = vst.msk [vmem:[%s224 + $0x48] sm:$0xff] %vm3322, %v7389
      %7422 = vst.msk [vmem:[%s224 + $0x50] sm:$0xff] %vm3322, %v7390
      %7423 = vst.msk [vmem:[%s224 + $0x58] sm:$0xff] %vm3322, %v7391
      %7424 = vst.msk [vmem:[%s224 + $0x60] sm:$0xff] %vm3322, %v7392
      %7425 = vst.msk [vmem:[%s224 + $0x68] sm:$0xff] %vm3322, %v7393
      %7426 = vst.msk [vmem:[%s224 + $0x70] sm:$0xff] %vm3322, %v7394
      %7427 = vst.msk [vmem:[%s224 + $0x78] sm:$0xff] %vm3322, %v7395
      %7428 = vst.msk [vmem:[%s224 + $0x80] sm:$0xff] %vm3322, %v7396
      %7429 = vst.msk [vmem:[%s224 + $0x88] sm:$0xff] %vm3322, %v7397
      %7430 = vst.msk [vmem:[%s224 + $0x90] sm:$0xff] %vm3322, %v7398
      %7431 = vst.msk [vmem:[%s224 + $0x98] sm:$0xff] %vm3322, %v7399
      %7432 = vst.msk [vmem:[%s224 + $0xa0] sm:$0xff] %vm3322, %v7400
      %7433 = vst.msk [vmem:[%s224 + $0xa8] sm:$0xff] %vm3322, %v7401
      %7434 = vst.msk [vmem:[%s224 + $0xb0] sm:$0xff] %vm3322, %v7402
      %7435 = vst.msk [vmem:[%s224 + $0xb8] sm:$0xff] %vm3322, %v7403
      %7436 = vst.msk [vmem:[%s224 + $0xc0] sm:$0xff] %vm3322, %v7404
      %7437 = vst.msk [vmem:[%s224 + $0xc8] sm:$0xff] %vm3322, %v7405
      %7438 = vst.msk [vmem:[%s224 + $0xd0] sm:$0xff] %vm3322, %v7406
      %7439 = vst.msk [vmem:[%s224 + $0xd8] sm:$0xff] %vm3322, %v7407
      %7440 = vst.msk [vmem:[%s224 + $0xe0] sm:$0xff] %vm3322, %v7408
      %7441 = vst.msk [vmem:[%s224 + $0xe8] sm:$0xff] %vm3322, %v7409
      %7442 = vst.msk [vmem:[%s224 + $0xf0] sm:$0xff] %vm3322, %v7410
      %7443 = vst.msk [vmem:[%s224 + $0xf8] sm:$0xff] %vm3322, %v7411
      %p7444 = scmp.lt.s32.totalorder %s16, 1
      %s7445 = scalar_select %p7444, %s16, 1
      %s7446 = smul.addr %s7445, 32
      %s7447 = smul.addr %s7446, 8
      %s7448 = scalar_lea.vmem %s5, %s7447
      // Predicated region
      $region41: #{basic_block_forward.1} parent=39 // pred_check
        %p7449 = pneg %p144
      $region42: #{basic_block_forward.1} parent=39 // pred_check_branch
        %7451 = sbr.rel (%p7449) target = $region44
      $region43: #{basic_block_forward.1} parent=39 // pred_region
        _
      $region44: #{basic_block_forward.1} parent=39 // pred_fallthru
        _
    $region40: #{basic_block_forward.1} parent=5 // pred_fallthru
      _
    %p7452 = scmp.le.s32.totalorder 2, %s11
    // Predicated region
    $region45: #{basic_block_forward.1} parent=5 // pred_check
      %p7453 = pneg %p7452
    $region46: #{basic_block_forward.1} parent=5 // pred_check_branch
      %7455 = sbr.rel (%p7453) target = $region48
    $region47: #{basic_block_forward.1} parent=5 // pred_region
      %s7456 = ssub.s32 %s11, 2
      // Predicated region
      $region49: #{basic_block_forward.1} parent=47 // pred_check
        %p7457 = pneg %p150
      $region50: #{basic_block_forward.1} parent=47 // pred_check_branch
        %7459 = sbr.rel (%p7457) target = $region52
      $region51: #{basic_block_forward.1} parent=47 // pred_region
        %p7460 = scmp.lt.s32.totalorder %s17, 1
        %s7461 = scalar_select %p7460, %s17, 1
        %s7462 = smul.addr %s7461, 32
        %s7463 = smul.addr %s7462, 8
        %s7464 = scalar_lea.vmem %s5, %s7463
      $region52: #{basic_block_forward.1} parent=47 // pred_fallthru
        _
    $region48: #{basic_block_forward.1} parent=5 // pred_fallthru
      _
  $region6: #{basic_block_forward.1} parent=0 // loop_footer
    %s15 = sadd.s32 1, %s11
  $region7: #{basic_block_forward.1} parent=0 // loop_footer_branch
    %10 = sbr.rel target = $region3
  $region8: #{basic_block_forward.1} parent=0 // loop_exit
    _

</llo_original>
